<compile_context>
chip_gen: v6e
topology: v6e:2x2x1
jax: 0.10.0
libtpu: 0.0.40
codegen_flags: <defaults>
</compile_context>

<pallas_src>
import jax
import jax.numpy as jnp
from jax.experimental import pallas as pl
from jax.experimental.pallas import tpu as pltpu


def _fill_halo_edges(pad_ref, H, W):
    """Circular wrap of the halo edges; interior [1:H+1, 1:W+1] already written.

    Rows first, then columns from the already row-wrapped buffer so the four
    corners come out right (keep this ordering when refactoring).
    """
    pad_ref[0:1, 1:W + 1, :] = pad_ref[H:H + 1, 1:W + 1, :]          # top    <- last row
    pad_ref[H + 1:H + 2, 1:W + 1, :] = pad_ref[1:2, 1:W + 1, :]      # bottom <- first row
    pad_ref[:, 0:1, :] = pad_ref[:, W:W + 1, :]                      # left   <- last col
    pad_ref[:, W + 1:W + 2, :] = pad_ref[:, 1:2, :]                  # right  <- first col


def _conv3x3_from_halo(pad_ref, w_ref, b_ref, H, W, C):
    """3x3 circular conv as 3 accumulated MXU matmuls with K = 3*Cin.

    pad_ref: (H+2, Wp, C) f32 halo buffer (interior at [1:H+1, 1:W+1])
    w_ref:   (3, 3*C, C) bf16 weights; w_ref[u][v*C + i, o] = W_oihw[o, i, u, v]
    b_ref:   (1, C) f32 bias
    returns: (H*W, C) f32 value (bias added, no activation)
    """
    acc = None
    for u in range(3):
        # Three column taps of row-offset u; concat along channels -> K=3C slab.
        taps = [pad_ref[u:u + H, v:v + W, :] for v in range(3)]      # (H, W, C) each
        slab = jnp.concatenate(taps, axis=-1)                        # (H, W, 3C) f32
        slab = slab.reshape(H * W, 3 * C).astype(jnp.bfloat16)       # bf16 into MXU
        part = jnp.dot(slab, w_ref[u], preferred_element_type=jnp.float32)
        acc = part if acc is None else acc + part
    return acc + b_ref[...]                                          # (H*W, C) f32


def resblock_kernel(x_ref, w1_ref, b1_ref, w2_ref, b2_ref, o_ref,
                    pad1_ref, pad2_ref):
    _, H, W, C = x_ref.shape

    # ---- conv1: circular halo of x (data movement done once, not 9 rolls) ----
    pad1_ref[1:H + 1, 1:W + 1, :] = x_ref[0]                         # interior
    _fill_halo_edges(pad1_ref, H, W)

    h = _conv3x3_from_halo(pad1_ref, w1_ref, b1_ref, H, W, C)        # (H*W, C) f32
    h = jnp.maximum(h, 0.0)                                          # ReLU (f32)

    # ---- conv2: ReLU'd conv1 output goes straight into the second halo ----
    pad2_ref[1:H + 1, 1:W + 1, :] = h.reshape(H, W, C)
    _fill_halo_edges(pad2_ref, H, W)

    y = _conv3x3_from_halo(pad2_ref, w2_ref, b2_ref, H, W, C)        # (H*W, C) f32
    y = y.reshape(H, W, C) + x_ref[0]                                # residual (re-read x, f32)
    o_ref[0] = jnp.maximum(y, 0.0).astype(o_ref.dtype)               # final ReLU


def resblock_forward(x_nchw, w1_oihw, b1, w2_oihw, b2):
    """Pallas ResBlock forward. x_nchw: (N, C, H, W) float32."""
    x = jnp.transpose(x_nchw, (0, 2, 3, 1))                          # -> NHWC
    N, H, W, C = x.shape
    Wp = ((W + 2 + 7) // 8) * 8                                      # sublane-padded halo width

    # OIHW -> (u, v, i, o) -> (3, 3*Cin, Cout), bf16 for the MXU.
    def _flatten_w(w):
        return jnp.transpose(w, (2, 3, 1, 0)).reshape(3, 3 * C, C).astype(jnp.bfloat16)

    w1f = _flatten_w(w1_oihw)
    w2f = _flatten_w(w2_oihw)
    b1r = b1.reshape(1, C).astype(jnp.float32)
    b2r = b2.reshape(1, C).astype(jnp.float32)

    out = pl.pallas_call(
        resblock_kernel,
        out_shape=jax.ShapeDtypeStruct((N, H, W, C), x.dtype),
        grid=(N,),
        in_specs=[
            pl.BlockSpec((1, H, W, C), lambda n: (n, 0, 0, 0)),
            pl.BlockSpec((3, 3 * C, C), lambda n: (0, 0, 0)),        # resident weights
            pl.BlockSpec((1, C), lambda n: (0, 0)),
            pl.BlockSpec((3, 3 * C, C), lambda n: (0, 0, 0)),
            pl.BlockSpec((1, C), lambda n: (0, 0)),
        ],
        out_specs=pl.BlockSpec((1, H, W, C), lambda n: (n, 0, 0, 0)),
        scratch_shapes=[
            pltpu.VMEM((H + 2, Wp, C), jnp.float32),                 # halo for conv1 input (x)
            pltpu.VMEM((H + 2, Wp, C), jnp.float32),                 # halo for conv2 input (relu(conv1))
        ],
        compiler_params=pltpu.CompilerParams(
            dimension_semantics=("parallel",),                       # N across TCs
            vmem_limit_bytes=56 * 1024 * 1024,                       # explicit budget (v7x-safe)
        ),
    )(x, w1f, b1r, w2f, b2r)

    return jnp.transpose(out, (0, 3, 1, 2))                          # back to NCHW


def resblock_reference(x, w1, b1, w2, b2):
    """Pure-JAX NCHW reference matching PyTorch circular-padded conv."""
    def conv(x, w, b):
        xp = jnp.pad(x, ((0, 0), (0, 0), (1, 1), (1, 1)), mode="wrap")
        y = jax.lax.conv_general_dilated(
            xp, w, window_strides=(1, 1), padding="VALID",
            dimension_numbers=("NCHW", "OIHW", "NCHW"))
        return y + b[None, :, None, None]

    h = jnp.maximum(conv(x, w1, b1), 0.0)
    y = conv(h, w2, b2) + x
    return jnp.maximum(y, 0.0)


if __name__ == "__main__":
    N, C, H, W = 2, 4, 16, 16
    key = jax.random.PRNGKey(0)
    kx, k1, k2, k3, k4 = jax.random.split(key, 5)

    x = jax.random.normal(kx, (N, C, H, W), jnp.float32)
    # Deterministic synthetic parameters (shapes match nn.Conv2d(C, C, 3)).
    w1 = 0.1 * jax.random.normal(k1, (C, C, 3, 3), jnp.float32)
    b1 = 0.1 * jax.random.normal(k2, (C,), jnp.float32)
    w2 = 0.1 * jax.random.normal(k3, (C, C, 3, 3), jnp.float32)
    b2 = 0.1 * jax.random.normal(k4, (C,), jnp.float32)

    out = jax.block_until_ready(resblock_forward(x, w1, b1, w2, b2))
    ref = jax.block_until_ready(resblock_reference(x, w1, b1, w2, b2))

    assert out.shape == (N, C, H, W)
    # bf16 MXU operands with f32 accumulation -> looser tolerance than pure f32.
    assert jnp.allclose(out, ref, atol=3e-2, rtol=3e-2), "mismatch vs reference"

    print("KERNEL_OK")
</pallas_src>

<mosaic_0001>
module attributes {stable_mosaic.version = 11 : i64} {
  func.func @resblock_kernel(%arg0: i32, %arg1: memref<1x16x16x4xf32, #tpu.memory_space<vmem>>, %arg2: memref<3x12x4xbf16, #tpu.memory_space<vmem>>, %arg3: memref<1x4xf32, #tpu.memory_space<vmem>>, %arg4: memref<3x12x4xbf16, #tpu.memory_space<vmem>>, %arg5: memref<1x4xf32, #tpu.memory_space<vmem>>, %arg6: memref<1x16x16x4xf32, #tpu.memory_space<vmem>>, %arg7: memref<18x24x4xf32, #tpu.memory_space<vmem>>, %arg8: memref<18x24x4xf32, #tpu.memory_space<vmem>>) attributes {dimension_semantics = [#tpu.dimension_semantics<parallel>], iteration_bounds = array<i64: 2>, scalar_prefetch = 0 : i64, scratch_operands = 2 : i64, tpu.core_type = #tpu.core_type<tc>, window_params = [{transform_indices = @transform_0, window_bounds = array<i64: 1, 16, 16, 4>}, {pipeline_mode = #tpu.pipeline_mode<synchronous>, transform_indices = @transform_1, window_bounds = array<i64: 3, 12, 4>}, {pipeline_mode = #tpu.pipeline_mode<synchronous>, transform_indices = @transform_2, window_bounds = array<i64: 1, 4>}, {pipeline_mode = #tpu.pipeline_mode<synchronous>, transform_indices = @transform_3, window_bounds = array<i64: 3, 12, 4>}, {pipeline_mode = #tpu.pipeline_mode<synchronous>, transform_indices = @transform_4, window_bounds = array<i64: 1, 4>}, {transform_indices = @transform_5, window_bounds = array<i64: 1, 16, 16, 4>}]} {
    %c0 = arith.constant 0 : index
    %c0_0 = arith.constant 0 : index
    %c0_1 = arith.constant 0 : index
    %c0_2 = arith.constant 0 : index
    %0 = vector.load %arg1[%c0, %c0_0, %c0_1, %c0_2] : memref<1x16x16x4xf32, #tpu.memory_space<vmem>>, vector<1x16x16x4xf32>
    %1 = vector.shape_cast %0 : vector<1x16x16x4xf32> to vector<16x16x4xf32>
    %c1 = arith.constant 1 : index
    %c1_3 = arith.constant 1 : index
    %c0_4 = arith.constant 0 : index
    %2 = vector.load %arg7[%c1, %c1_3, %c0_4] : memref<18x24x4xf32, #tpu.memory_space<vmem>>, vector<16x16x4xf32>
    tpu.vector_store %arg7[%c1, %c1_3, %c0_4], %1 {strides = array<i32>} : memref<18x24x4xf32, #tpu.memory_space<vmem>>, vector<16x16x4xf32>,
    %c16 = arith.constant 16 : index
    %c1_5 = arith.constant 1 : index
    %c0_6 = arith.constant 0 : index
    %3 = vector.load %arg7[%c16, %c1_5, %c0_6] : memref<18x24x4xf32, #tpu.memory_space<vmem>>, vector<1x16x4xf32>
    %c0_7 = arith.constant 0 : index
    %c1_8 = arith.constant 1 : index
    %c0_9 = arith.constant 0 : index
    %4 = vector.load %arg7[%c0_7, %c1_8, %c0_9] : memref<18x24x4xf32, #tpu.memory_space<vmem>>, vector<1x16x4xf32>
    tpu.vector_store %arg7[%c0_7, %c1_8, %c0_9], %3 {strides = array<i32>} : memref<18x24x4xf32, #tpu.memory_space<vmem>>, vector<1x16x4xf32>,
    %c1_10 = arith.constant 1 : index
    %c1_11 = arith.constant 1 : index
    %c0_12 = arith.constant 0 : index
    %5 = vector.load %arg7[%c1_10, %c1_11, %c0_12] : memref<18x24x4xf32, #tpu.memory_space<vmem>>, vector<1x16x4xf32>
    %c17 = arith.constant 17 : index
    %c1_13 = arith.constant 1 : index
    %c0_14 = arith.constant 0 : index
    %6 = vector.load %arg7[%c17, %c1_13, %c0_14] : memref<18x24x4xf32, #tpu.memory_space<vmem>>, vector<1x16x4xf32>
    tpu.vector_store %arg7[%c17, %c1_13, %c0_14], %5 {strides = array<i32>} : memref<18x24x4xf32, #tpu.memory_space<vmem>>, vector<1x16x4xf32>,
    %c0_15 = arith.constant 0 : index
    %c16_16 = arith.constant 16 : index
    %c0_17 = arith.constant 0 : index
    %7 = vector.load %arg7[%c0_15, %c16_16, %c0_17] : memref<18x24x4xf32, #tpu.memory_space<vmem>>, vector<18x1x4xf32>
    %c0_18 = arith.constant 0 : index
    %c0_19 = arith.constant 0 : index
    %c0_20 = arith.constant 0 : index
    %8 = vector.load %arg7[%c0_18, %c0_19, %c0_20] : memref<18x24x4xf32, #tpu.memory_space<vmem>>, vector<18x1x4xf32>
    tpu.vector_store %arg7[%c0_18, %c0_19, %c0_20], %7 {strides = array<i32>} : memref<18x24x4xf32, #tpu.memory_space<vmem>>, vector<18x1x4xf32>,
    %c0_21 = arith.constant 0 : index
    %c1_22 = arith.constant 1 : index
    %c0_23 = arith.constant 0 : index
    %9 = vector.load %arg7[%c0_21, %c1_22, %c0_23] : memref<18x24x4xf32, #tpu.memory_space<vmem>>, vector<18x1x4xf32>
    %c0_24 = arith.constant 0 : index
    %c17_25 = arith.constant 17 : index
    %c0_26 = arith.constant 0 : index
    %10 = vector.load %arg7[%c0_24, %c17_25, %c0_26] : memref<18x24x4xf32, #tpu.memory_space<vmem>>, vector<18x1x4xf32>
    tpu.vector_store %arg7[%c0_24, %c17_25, %c0_26], %9 {strides = array<i32>} : memref<18x24x4xf32, #tpu.memory_space<vmem>>, vector<18x1x4xf32>,
    %c0_27 = arith.constant 0 : index
    %c0_28 = arith.constant 0 : index
    %c0_29 = arith.constant 0 : index
    %11 = vector.load %arg7[%c0_27, %c0_28, %c0_29] : memref<18x24x4xf32, #tpu.memory_space<vmem>>, vector<16x16x4xf32>
    %c0_30 = arith.constant 0 : index
    %c1_31 = arith.constant 1 : index
    %c0_32 = arith.constant 0 : index
    %12 = vector.load %arg7[%c0_30, %c1_31, %c0_32] : memref<18x24x4xf32, #tpu.memory_space<vmem>>, vector<16x16x4xf32>
    %c0_33 = arith.constant 0 : index
    %c2 = arith.constant 2 : index
    %c0_34 = arith.constant 0 : index
    %13 = vector.load %arg7[%c0_33, %c2, %c0_34] : memref<18x24x4xf32, #tpu.memory_space<vmem>>, vector<16x16x4xf32>
    %14 = tpu.concatenate %11, %12, %13 in 2 : vector<16x16x4xf32>, vector<16x16x4xf32>, vector<16x16x4xf32> -> vector<16x16x12xf32>
    %15 = vector.shape_cast %14 : vector<16x16x12xf32> to vector<256x12xf32>
    %16 = arith.truncf %15 : vector<256x12xf32> to vector<256x12xbf16>
    %c0_35 = arith.constant 0 : index
    %c0_36 = arith.constant 0 : index
    %c0_37 = arith.constant 0 : index
    %17 = vector.load %arg2[%c0_35, %c0_36, %c0_37] : memref<3x12x4xbf16, #tpu.memory_space<vmem>>, vector<1x12x4xbf16>
    %18 = vector.shape_cast %17 : vector<1x12x4xbf16> to vector<12x4xbf16>
    %cst = arith.constant dense<0.000000e+00> : vector<256x4xf32>
    %19 = tpu.matmul %16, %18, %cst {dimension_numbers = #tpu.dot_dimension_numbers<[1], [0], [0], [1], [0, 0, 1, 1], [], []>} : vector<256x12xbf16>, vector<12x4xbf16>, vector<256x4xf32> -> vector<256x4xf32>
    %c1_38 = arith.constant 1 : index
    %c0_39 = arith.constant 0 : index
    %c0_40 = arith.constant 0 : index
    %20 = vector.load %arg7[%c1_38, %c0_39, %c0_40] : memref<18x24x4xf32, #tpu.memory_space<vmem>>, vector<16x16x4xf32>
    %c1_41 = arith.constant 1 : index
    %c1_42 = arith.constant 1 : index
    %c0_43 = arith.constant 0 : index
    %21 = vector.load %arg7[%c1_41, %c1_42, %c0_43] : memref<18x24x4xf32, #tpu.memory_space<vmem>>, vector<16x16x4xf32>
    %c1_44 = arith.constant 1 : index
    %c2_45 = arith.constant 2 : index
    %c0_46 = arith.constant 0 : index
    %22 = vector.load %arg7[%c1_44, %c2_45, %c0_46] : memref<18x24x4xf32, #tpu.memory_space<vmem>>, vector<16x16x4xf32>
    %23 = tpu.concatenate %20, %21, %22 in 2 : vector<16x16x4xf32>, vector<16x16x4xf32>, vector<16x16x4xf32> -> vector<16x16x12xf32>
    %24 = vector.shape_cast %23 : vector<16x16x12xf32> to vector<256x12xf32>
    %25 = arith.truncf %24 : vector<256x12xf32> to vector<256x12xbf16>
    %c1_47 = arith.constant 1 : index
    %c0_48 = arith.constant 0 : index
    %c0_49 = arith.constant 0 : index
    %26 = vector.load %arg2[%c1_47, %c0_48, %c0_49] : memref<3x12x4xbf16, #tpu.memory_space<vmem>>, vector<1x12x4xbf16>
    %27 = vector.shape_cast %26 : vector<1x12x4xbf16> to vector<12x4xbf16>
    %cst_50 = arith.constant dense<0.000000e+00> : vector<256x4xf32>
    %28 = tpu.matmul %25, %27, %cst_50 {dimension_numbers = #tpu.dot_dimension_numbers<[1], [0], [0], [1], [0, 0, 1, 1], [], []>} : vector<256x12xbf16>, vector<12x4xbf16>, vector<256x4xf32> -> vector<256x4xf32>
    %29 = arith.addf %19, %28 : vector<256x4xf32>
    %c2_51 = arith.constant 2 : index
    %c0_52 = arith.constant 0 : index
    %c0_53 = arith.constant 0 : index
    %30 = vector.load %arg7[%c2_51, %c0_52, %c0_53] : memref<18x24x4xf32, #tpu.memory_space<vmem>>, vector<16x16x4xf32>
    %c2_54 = arith.constant 2 : index
    %c1_55 = arith.constant 1 : index
    %c0_56 = arith.constant 0 : index
    %31 = vector.load %arg7[%c2_54, %c1_55, %c0_56] : memref<18x24x4xf32, #tpu.memory_space<vmem>>, vector<16x16x4xf32>
    %c2_57 = arith.constant 2 : index
    %c2_58 = arith.constant 2 : index
    %c0_59 = arith.constant 0 : index
    %32 = vector.load %arg7[%c2_57, %c2_58, %c0_59] : memref<18x24x4xf32, #tpu.memory_space<vmem>>, vector<16x16x4xf32>
    %33 = tpu.concatenate %30, %31, %32 in 2 : vector<16x16x4xf32>, vector<16x16x4xf32>, vector<16x16x4xf32> -> vector<16x16x12xf32>
    %34 = vector.shape_cast %33 : vector<16x16x12xf32> to vector<256x12xf32>
    %35 = arith.truncf %34 : vector<256x12xf32> to vector<256x12xbf16>
    %c2_60 = arith.constant 2 : index
    %c0_61 = arith.constant 0 : index
    %c0_62 = arith.constant 0 : index
    %36 = vector.load %arg2[%c2_60, %c0_61, %c0_62] : memref<3x12x4xbf16, #tpu.memory_space<vmem>>, vector<1x12x4xbf16>
    %37 = vector.shape_cast %36 : vector<1x12x4xbf16> to vector<12x4xbf16>
    %cst_63 = arith.constant dense<0.000000e+00> : vector<256x4xf32>
    %38 = tpu.matmul %35, %37, %cst_63 {dimension_numbers = #tpu.dot_dimension_numbers<[1], [0], [0], [1], [0, 0, 1, 1], [], []>} : vector<256x12xbf16>, vector<12x4xbf16>, vector<256x4xf32> -> vector<256x4xf32>
    %39 = arith.addf %29, %38 : vector<256x4xf32>
    %c0_64 = arith.constant 0 : index
    %c0_65 = arith.constant 0 : index
    %40 = vector.load %arg3[%c0_64, %c0_65] : memref<1x4xf32, #tpu.memory_space<vmem>>, vector<1x4xf32>
    %41 = vector.broadcast %40 : vector<1x4xf32> to vector<256x4xf32>
    %42 = arith.addf %39, %41 : vector<256x4xf32>
    %cst_66 = arith.constant 0.000000e+00 : f32
    %43 = vector.broadcast %cst_66 : f32 to vector<256x4xf32>
    %44 = arith.maximumf %42, %43 : vector<256x4xf32>
    %45 = vector.shape_cast %44 : vector<256x4xf32> to vector<16x16x4xf32>
    %c1_67 = arith.constant 1 : index
    %c1_68 = arith.constant 1 : index
    %c0_69 = arith.constant 0 : index
    %46 = vector.load %arg8[%c1_67, %c1_68, %c0_69] : memref<18x24x4xf32, #tpu.memory_space<vmem>>, vector<16x16x4xf32>
    tpu.vector_store %arg8[%c1_67, %c1_68, %c0_69], %45 {strides = array<i32>} : memref<18x24x4xf32, #tpu.memory_space<vmem>>, vector<16x16x4xf32>,
    %c16_70 = arith.constant 16 : index
    %c1_71 = arith.constant 1 : index
    %c0_72 = arith.constant 0 : index
    %47 = vector.load %arg8[%c16_70, %c1_71, %c0_72] : memref<18x24x4xf32, #tpu.memory_space<vmem>>, vector<1x16x4xf32>
    %c0_73 = arith.constant 0 : index
    %c1_74 = arith.constant 1 : index
    %c0_75 = arith.constant 0 : index
    %48 = vector.load %arg8[%c0_73, %c1_74, %c0_75] : memref<18x24x4xf32, #tpu.memory_space<vmem>>, vector<1x16x4xf32>
    tpu.vector_store %arg8[%c0_73, %c1_74, %c0_75], %47 {strides = array<i32>} : memref<18x24x4xf32, #tpu.memory_space<vmem>>, vector<1x16x4xf32>,
    %c1_76 = arith.constant 1 : index
    %c1_77 = arith.constant 1 : index
    %c0_78 = arith.constant 0 : index
    %49 = vector.load %arg8[%c1_76, %c1_77, %c0_78] : memref<18x24x4xf32, #tpu.memory_space<vmem>>, vector<1x16x4xf32>
    %c17_79 = arith.constant 17 : index
    %c1_80 = arith.constant 1 : index
    %c0_81 = arith.constant 0 : index
    %50 = vector.load %arg8[%c17_79, %c1_80, %c0_81] : memref<18x24x4xf32, #tpu.memory_space<vmem>>, vector<1x16x4xf32>
    tpu.vector_store %arg8[%c17_79, %c1_80, %c0_81], %49 {strides = array<i32>} : memref<18x24x4xf32, #tpu.memory_space<vmem>>, vector<1x16x4xf32>,
    %c0_82 = arith.constant 0 : index
    %c16_83 = arith.constant 16 : index
    %c0_84 = arith.constant 0 : index
    %51 = vector.load %arg8[%c0_82, %c16_83, %c0_84] : memref<18x24x4xf32, #tpu.memory_space<vmem>>, vector<18x1x4xf32>
    %c0_85 = arith.constant 0 : index
    %c0_86 = arith.constant 0 : index
    %c0_87 = arith.constant 0 : index
    %52 = vector.load %arg8[%c0_85, %c0_86, %c0_87] : memref<18x24x4xf32, #tpu.memory_space<vmem>>, vector<18x1x4xf32>
    tpu.vector_store %arg8[%c0_85, %c0_86, %c0_87], %51 {strides = array<i32>} : memref<18x24x4xf32, #tpu.memory_space<vmem>>, vector<18x1x4xf32>,
    %c0_88 = arith.constant 0 : index
    %c1_89 = arith.constant 1 : index
    %c0_90 = arith.constant 0 : index
    %53 = vector.load %arg8[%c0_88, %c1_89, %c0_90] : memref<18x24x4xf32, #tpu.memory_space<vmem>>, vector<18x1x4xf32>
    %c0_91 = arith.constant 0 : index
    %c17_92 = arith.constant 17 : index
    %c0_93 = arith.constant 0 : index
    %54 = vector.load %arg8[%c0_91, %c17_92, %c0_93] : memref<18x24x4xf32, #tpu.memory_space<vmem>>, vector<18x1x4xf32>
    tpu.vector_store %arg8[%c0_91, %c17_92, %c0_93], %53 {strides = array<i32>} : memref<18x24x4xf32, #tpu.memory_space<vmem>>, vector<18x1x4xf32>,
    %c0_94 = arith.constant 0 : index
    %c0_95 = arith.constant 0 : index
    %c0_96 = arith.constant 0 : index
    %55 = vector.load %arg8[%c0_94, %c0_95, %c0_96] : memref<18x24x4xf32, #tpu.memory_space<vmem>>, vector<16x16x4xf32>
    %c0_97 = arith.constant 0 : index
    %c1_98 = arith.constant 1 : index
    %c0_99 = arith.constant 0 : index
    %56 = vector.load %arg8[%c0_97, %c1_98, %c0_99] : memref<18x24x4xf32, #tpu.memory_space<vmem>>, vector<16x16x4xf32>
    %c0_100 = arith.constant 0 : index
    %c2_101 = arith.constant 2 : index
    %c0_102 = arith.constant 0 : index
    %57 = vector.load %arg8[%c0_100, %c2_101, %c0_102] : memref<18x24x4xf32, #tpu.memory_space<vmem>>, vector<16x16x4xf32>
    %58 = tpu.concatenate %55, %56, %57 in 2 : vector<16x16x4xf32>, vector<16x16x4xf32>, vector<16x16x4xf32> -> vector<16x16x12xf32>
    %59 = vector.shape_cast %58 : vector<16x16x12xf32> to vector<256x12xf32>
    %60 = arith.truncf %59 : vector<256x12xf32> to vector<256x12xbf16>
    %c0_103 = arith.constant 0 : index
    %c0_104 = arith.constant 0 : index
    %c0_105 = arith.constant 0 : index
    %61 = vector.load %arg4[%c0_103, %c0_104, %c0_105] : memref<3x12x4xbf16, #tpu.memory_space<vmem>>, vector<1x12x4xbf16>
    %62 = vector.shape_cast %61 : vector<1x12x4xbf16> to vector<12x4xbf16>
    %cst_106 = arith.constant dense<0.000000e+00> : vector<256x4xf32>
    %63 = tpu.matmul %60, %62, %cst_106 {dimension_numbers = #tpu.dot_dimension_numbers<[1], [0], [0], [1], [0, 0, 1, 1], [], []>} : vector<256x12xbf16>, vector<12x4xbf16>, vector<256x4xf32> -> vector<256x4xf32>
    %c1_107 = arith.constant 1 : index
    %c0_108 = arith.constant 0 : index
    %c0_109 = arith.constant 0 : index
    %64 = vector.load %arg8[%c1_107, %c0_108, %c0_109] : memref<18x24x4xf32, #tpu.memory_space<vmem>>, vector<16x16x4xf32>
    %c1_110 = arith.constant 1 : index
    %c1_111 = arith.constant 1 : index
    %c0_112 = arith.constant 0 : index
    %65 = vector.load %arg8[%c1_110, %c1_111, %c0_112] : memref<18x24x4xf32, #tpu.memory_space<vmem>>, vector<16x16x4xf32>
    %c1_113 = arith.constant 1 : index
    %c2_114 = arith.constant 2 : index
    %c0_115 = arith.constant 0 : index
    %66 = vector.load %arg8[%c1_113, %c2_114, %c0_115] : memref<18x24x4xf32, #tpu.memory_space<vmem>>, vector<16x16x4xf32>
    %67 = tpu.concatenate %64, %65, %66 in 2 : vector<16x16x4xf32>, vector<16x16x4xf32>, vector<16x16x4xf32> -> vector<16x16x12xf32>
    %68 = vector.shape_cast %67 : vector<16x16x12xf32> to vector<256x12xf32>
    %69 = arith.truncf %68 : vector<256x12xf32> to vector<256x12xbf16>
    %c1_116 = arith.constant 1 : index
    %c0_117 = arith.constant 0 : index
    %c0_118 = arith.constant 0 : index
    %70 = vector.load %arg4[%c1_116, %c0_117, %c0_118] : memref<3x12x4xbf16, #tpu.memory_space<vmem>>, vector<1x12x4xbf16>
    %71 = vector.shape_cast %70 : vector<1x12x4xbf16> to vector<12x4xbf16>
    %cst_119 = arith.constant dense<0.000000e+00> : vector<256x4xf32>
    %72 = tpu.matmul %69, %71, %cst_119 {dimension_numbers = #tpu.dot_dimension_numbers<[1], [0], [0], [1], [0, 0, 1, 1], [], []>} : vector<256x12xbf16>, vector<12x4xbf16>, vector<256x4xf32> -> vector<256x4xf32>
    %73 = arith.addf %63, %72 : vector<256x4xf32>
    %c2_120 = arith.constant 2 : index
    %c0_121 = arith.constant 0 : index
    %c0_122 = arith.constant 0 : index
    %74 = vector.load %arg8[%c2_120, %c0_121, %c0_122] : memref<18x24x4xf32, #tpu.memory_space<vmem>>, vector<16x16x4xf32>
    %c2_123 = arith.constant 2 : index
    %c1_124 = arith.constant 1 : index
    %c0_125 = arith.constant 0 : index
    %75 = vector.load %arg8[%c2_123, %c1_124, %c0_125] : memref<18x24x4xf32, #tpu.memory_space<vmem>>, vector<16x16x4xf32>
    %c2_126 = arith.constant 2 : index
    %c2_127 = arith.constant 2 : index
    %c0_128 = arith.constant 0 : index
    %76 = vector.load %arg8[%c2_126, %c2_127, %c0_128] : memref<18x24x4xf32, #tpu.memory_space<vmem>>, vector<16x16x4xf32>
    %77 = tpu.concatenate %74, %75, %76 in 2 : vector<16x16x4xf32>, vector<16x16x4xf32>, vector<16x16x4xf32> -> vector<16x16x12xf32>
    %78 = vector.shape_cast %77 : vector<16x16x12xf32> to vector<256x12xf32>
    %79 = arith.truncf %78 : vector<256x12xf32> to vector<256x12xbf16>
    %c2_129 = arith.constant 2 : index
    %c0_130 = arith.constant 0 : index
    %c0_131 = arith.constant 0 : index
    %80 = vector.load %arg4[%c2_129, %c0_130, %c0_131] : memref<3x12x4xbf16, #tpu.memory_space<vmem>>, vector<1x12x4xbf16>
    %81 = vector.shape_cast %80 : vector<1x12x4xbf16> to vector<12x4xbf16>
    %cst_132 = arith.constant dense<0.000000e+00> : vector<256x4xf32>
    %82 = tpu.matmul %79, %81, %cst_132 {dimension_numbers = #tpu.dot_dimension_numbers<[1], [0], [0], [1], [0, 0, 1, 1], [], []>} : vector<256x12xbf16>, vector<12x4xbf16>, vector<256x4xf32> -> vector<256x4xf32>
    %83 = arith.addf %73, %82 : vector<256x4xf32>
    %c0_133 = arith.constant 0 : index
    %c0_134 = arith.constant 0 : index
    %84 = vector.load %arg5[%c0_133, %c0_134] : memref<1x4xf32, #tpu.memory_space<vmem>>, vector<1x4xf32>
    %85 = vector.broadcast %84 : vector<1x4xf32> to vector<256x4xf32>
    %86 = arith.addf %83, %85 : vector<256x4xf32>
    %87 = vector.shape_cast %86 : vector<256x4xf32> to vector<16x16x4xf32>
    %c0_135 = arith.constant 0 : index
    %c0_136 = arith.constant 0 : index
    %c0_137 = arith.constant 0 : index
    %c0_138 = arith.constant 0 : index
    %88 = vector.load %arg1[%c0_135, %c0_136, %c0_137, %c0_138] : memref<1x16x16x4xf32, #tpu.memory_space<vmem>>, vector<1x16x16x4xf32>
    %89 = vector.shape_cast %88 : vector<1x16x16x4xf32> to vector<16x16x4xf32>
    %90 = arith.addf %87, %89 : vector<16x16x4xf32>
    %cst_139 = arith.constant 0.000000e+00 : f32
    %91 = vector.broadcast %cst_139 : f32 to vector<16x16x4xf32>
    %92 = arith.maximumf %90, %91 : vector<16x16x4xf32>
    %c0_140 = arith.constant 0 : index
    %c0_141 = arith.constant 0 : index
    %c0_142 = arith.constant 0 : index
    %c0_143 = arith.constant 0 : index
    %93 = vector.load %arg6[%c0_140, %c0_141, %c0_142, %c0_143] : memref<1x16x16x4xf32, #tpu.memory_space<vmem>>, vector<1x16x16x4xf32>
    %94 = vector.shape_cast %93 : vector<1x16x16x4xf32> to vector<16x16x4xf32>
    %95 = vector.shape_cast %92 : vector<16x16x4xf32> to vector<1x16x16x4xf32>
    tpu.vector_store %arg6[%c0_140, %c0_141, %c0_142, %c0_143], %95 {strides = array<i32>} : memref<1x16x16x4xf32, #tpu.memory_space<vmem>>, vector<1x16x16x4xf32>,
    return
  }
  func.func @transform_0(%arg0: i32) -> (i32, i32, i32, i32) {
    %c0_i32 = arith.constant 0 : i32
    %c0_i32_0 = arith.constant 0 : i32
    %c0_i32_1 = arith.constant 0 : i32
    %c0_i32_2 = arith.constant 0 : i32
    return %arg0, %c0_i32, %c0_i32_0, %c0_i32_1 : i32, i32, i32, i32
  }
  func.func @transform_1(%arg0: i32) -> (i32, i32, i32) {
    %c0_i32 = arith.constant 0 : i32
    %c0_i32_0 = arith.constant 0 : i32
    %c0_i32_1 = arith.constant 0 : i32
    %c0_i32_2 = arith.constant 0 : i32
    return %c0_i32, %c0_i32_0, %c0_i32_1 : i32, i32, i32
  }
  func.func @transform_2(%arg0: i32) -> (i32, i32) {
    %c0_i32 = arith.constant 0 : i32
    %c0_i32_0 = arith.constant 0 : i32
    %c0_i32_1 = arith.constant 0 : i32
    return %c0_i32, %c0_i32_0 : i32, i32
  }
  func.func @transform_3(%arg0: i32) -> (i32, i32, i32) {
    %c0_i32 = arith.constant 0 : i32
    %c0_i32_0 = arith.constant 0 : i32
    %c0_i32_1 = arith.constant 0 : i32
    %c0_i32_2 = arith.constant 0 : i32
    return %c0_i32, %c0_i32_0, %c0_i32_1 : i32, i32, i32
  }
  func.func @transform_4(%arg0: i32) -> (i32, i32) {
    %c0_i32 = arith.constant 0 : i32
    %c0_i32_0 = arith.constant 0 : i32
    %c0_i32_1 = arith.constant 0 : i32
    return %c0_i32, %c0_i32_0 : i32, i32
  }
  func.func @transform_5(%arg0: i32) -> (i32, i32, i32, i32) {
    %c0_i32 = arith.constant 0 : i32
    %c0_i32_0 = arith.constant 0 : i32
    %c0_i32_1 = arith.constant 0 : i32
    %c0_i32_2 = arith.constant 0 : i32
    return %arg0, %c0_i32, %c0_i32_0, %c0_i32_1 : i32, i32, i32, i32
  }
}

</mosaic_0001>

<llo_original>
// kernel: tpu_custom_call.1
$region0: #{tpu_custom_call.1}
  #allocation0 [shape = 'u32[]', space=smem, size = 0x4, offset = 0x4, fixed_abs, tag = 'smem constant byte address 0x4 - core index']
  #allocation1 [shape = 'u32[144,128]{1,0:T(1,128)}', space=vmem, size = 0x12000, scoped, tag = 'internal scratch']
  #allocation2 [shape = 'f32[18,24,4]{2,1,0:T(8,128)}', space=vmem, size = 0x36000, scoped, tag = 'scratch operand']
  #allocation3 [shape = 'f32[18,24,4]{2,1,0:T(8,128)}', space=vmem, size = 0x36000, scoped, tag = 'scratch operand']
  %s0 = inlined_call_operand.vmem [shape: f32[2,16,16,4], index: 0, kind: input, shape index: {}]
  %s1 = inlined_call_operand.vmem [shape: bf16[3,12,4], index: 1, kind: input, shape index: {}]
  %s2 = inlined_call_operand.vmem [shape: f32[1,4], index: 2, kind: input, shape index: {}]
  %s3 = inlined_call_operand.vmem [shape: bf16[3,12,4], index: 3, kind: input, shape index: {}]
  %s4 = inlined_call_operand.vmem [shape: f32[1,4], index: 4, kind: input, shape index: {}]
  %s5 = inlined_call_operand.vmem [shape: f32[2,16,16,4], index: 5, kind: output, shape index: {}]
  %s6 = sld [smem:[#allocation0]]
  $region53: #{tpu_custom_call.1} parent=0
    _
  %s8 = ssub.s32 1, %s6
  %s9 = scalar_select 0, %s8, %s6
  loop: start=0, step=1, limit=4
  $region2: #{tpu_custom_call.1} parent=0 // loop_pre_header
    _
  $region3: #{tpu_custom_call.1} parent=0 // loop_header
    %s11 = sphi 0, %s15
    %p12 = scmp.ge.s32.totalorder %s11, 4
    %s21 = sphi 0, %s23
    %s24 = sphi 0, %s21
    %s25 = sphi 0, %s24
    %s41 = sphi 0, %s25
    %s45 = sphi 0, %s45
    %s47 = sphi 0, %s45
    %s48 = sphi 0, %s47
    %s62 = sphi 0, %s48
    %s66 = sphi 0, %s66
    %s68 = sphi 0, %s66
    %s69 = sphi 0, %s68
    %s83 = sphi 0, %s69
    %s87 = sphi 0, %s87
    %s89 = sphi 0, %s87
    %s90 = sphi 0, %s89
    %s104 = sphi 0, %s90
    %s108 = sphi 0, %s108
    %s110 = sphi 0, %s108
    %s111 = sphi 0, %s110
    %s125 = sphi 0, %s111
    %s131 = sphi 0, %s133
    %s134 = sphi 0, %s131
    %s135 = sphi 0, %s134
    %s151 = sphi 0, %s135
  $region4: #{tpu_custom_call.1} parent=0 // loop_header_branch
    %14 = sbr.rel (%p12) target = $region8
  $region5: #{tpu_custom_call.1} parent=0 // loop_body
    %s16 = ssub.s32 %s11, 1
    %s17 = ssub.s32 %s11, 2
    %s18 = sadd.s32 %s11, 1
    %s19 = ssub.s32 %s11, %s18
    %p20 = scmp.eq.s32.totalorder %s19, 0
    %s22 = sadd.s32 %s21, 1
    %s23 = scalar_select %p20, %s21, %s22
    %p26 = pneg %p20
    %p27 = scmp.eq.s32.totalorder %s11, 1
    %p28 = por %p26, %p27
    %p29 = scmp.ne.s32.totalorder %s21, %s24
    %p30 = scmp.eq.s32.totalorder %s11, 0
    %p31 = por %p29, %p30
    %p32 = scmp.ne.s32.totalorder %s21, %s24
    %p33 = scmp.eq.s32.totalorder %s16, 1
    %p34 = por %p32, %p33
    %p35 = scmp.ne.s32.totalorder %s24, %s25
    %p36 = scmp.eq.s32.totalorder %s16, 0
    %p37 = por %p35, %p36
    %p38 = scmp.ne.s32.totalorder %s24, %s25
    %p39 = scmp.eq.s32.totalorder %s17, 1
    %p40 = por %p38, %p39
    %p42 = scmp.ne.s32.totalorder %s25, %s41
    %p43 = scmp.eq.s32.totalorder %s17, 0
    %p44 = por %p42, %p43
    %s46 = sadd.s32 %s45, 1
    %p49 = scmp.eq.s32.totalorder %s11, 1
    %p50 = scmp.ne.s32.totalorder %s45, %s47
    %p51 = scmp.eq.s32.totalorder %s11, 0
    %p52 = por %p50, %p51
    %p53 = scmp.ne.s32.totalorder %s45, %s47
    %p54 = scmp.eq.s32.totalorder %s16, 1
    %p55 = por %p53, %p54
    %p56 = scmp.ne.s32.totalorder %s47, %s48
    %p57 = scmp.eq.s32.totalorder %s16, 0
    %p58 = por %p56, %p57
    %p59 = scmp.ne.s32.totalorder %s47, %s48
    %p60 = scmp.eq.s32.totalorder %s17, 1
    %p61 = por %p59, %p60
    %p63 = scmp.ne.s32.totalorder %s48, %s62
    %p64 = scmp.eq.s32.totalorder %s17, 0
    %p65 = por %p63, %p64
    %s67 = sadd.s32 %s66, 1
    %p70 = scmp.eq.s32.totalorder %s11, 1
    %p71 = scmp.ne.s32.totalorder %s66, %s68
    %p72 = scmp.eq.s32.totalorder %s11, 0
    %p73 = por %p71, %p72
    %p74 = scmp.ne.s32.totalorder %s66, %s68
    %p75 = scmp.eq.s32.totalorder %s16, 1
    %p76 = por %p74, %p75
    %p77 = scmp.ne.s32.totalorder %s68, %s69
    %p78 = scmp.eq.s32.totalorder %s16, 0
    %p79 = por %p77, %p78
    %p80 = scmp.ne.s32.totalorder %s68, %s69
    %p81 = scmp.eq.s32.totalorder %s17, 1
    %p82 = por %p80, %p81
    %p84 = scmp.ne.s32.totalorder %s69, %s83
    %p85 = scmp.eq.s32.totalorder %s17, 0
    %p86 = por %p84, %p85
    %s88 = sadd.s32 %s87, 1
    %p91 = scmp.eq.s32.totalorder %s11, 1
    %p92 = scmp.ne.s32.totalorder %s87, %s89
    %p93 = scmp.eq.s32.totalorder %s11, 0
    %p94 = por %p92, %p93
    %p95 = scmp.ne.s32.totalorder %s87, %s89
    %p96 = scmp.eq.s32.totalorder %s16, 1
    %p97 = por %p95, %p96
    %p98 = scmp.ne.s32.totalorder %s89, %s90
    %p99 = scmp.eq.s32.totalorder %s16, 0
    %p100 = por %p98, %p99
    %p101 = scmp.ne.s32.totalorder %s89, %s90
    %p102 = scmp.eq.s32.totalorder %s17, 1
    %p103 = por %p101, %p102
    %p105 = scmp.ne.s32.totalorder %s90, %s104
    %p106 = scmp.eq.s32.totalorder %s17, 0
    %p107 = por %p105, %p106
    %s109 = sadd.s32 %s108, 1
    %p112 = scmp.eq.s32.totalorder %s11, 1
    %p113 = scmp.ne.s32.totalorder %s108, %s110
    %p114 = scmp.eq.s32.totalorder %s11, 0
    %p115 = por %p113, %p114
    %p116 = scmp.ne.s32.totalorder %s108, %s110
    %p117 = scmp.eq.s32.totalorder %s16, 1
    %p118 = por %p116, %p117
    %p119 = scmp.ne.s32.totalorder %s110, %s111
    %p120 = scmp.eq.s32.totalorder %s16, 0
    %p121 = por %p119, %p120
    %p122 = scmp.ne.s32.totalorder %s110, %s111
    %p123 = scmp.eq.s32.totalorder %s17, 1
    %p124 = por %p122, %p123
    %p126 = scmp.ne.s32.totalorder %s111, %s125
    %p127 = scmp.eq.s32.totalorder %s17, 0
    %p128 = por %p126, %p127
    %s129 = ssub.s32 %s11, %s18
    %p130 = scmp.eq.s32.totalorder %s129, 0
    %s132 = sadd.s32 %s131, 1
    %s133 = scalar_select %p130, %s131, %s132
    %p136 = pneg %p130
    %p137 = scmp.eq.s32.totalorder %s11, 1
    %p138 = por %p136, %p137
    %p139 = scmp.ne.s32.totalorder %s131, %s134
    %p140 = scmp.eq.s32.totalorder %s11, 0
    %p141 = por %p139, %p140
    %p142 = scmp.ne.s32.totalorder %s131, %s134
    %p143 = scmp.eq.s32.totalorder %s16, 1
    %p144 = por %p142, %p143
    %p145 = scmp.ne.s32.totalorder %s134, %s135
    %p146 = scmp.eq.s32.totalorder %s16, 0
    %p147 = por %p145, %p146
    %p148 = scmp.ne.s32.totalorder %s134, %s135
    %p149 = scmp.eq.s32.totalorder %s17, 1
    %p150 = por %p148, %p149
    %p152 = scmp.ne.s32.totalorder %s135, %s151
    %p153 = scmp.eq.s32.totalorder %s17, 0
    %p154 = por %p152, %p153
    %p155 = scmp.le.s32.totalorder 1, %s11
    %p156 = scmp.lt.s32.totalorder %s11, 3
    %p157 = pnand %p155, %p156
    %p158 = pneg %p157
    // Predicated region
    $region9: #{tpu_custom_call.1} parent=5 // pred_check
      _
    $region10: #{tpu_custom_call.1} parent=5 // pred_check_branch
      %160 = sbr.rel (%p157) target = $region12
    $region11: #{tpu_custom_call.1} parent=5 // pred_region
      %s161 = ssub.s32 %s11, 1
      // Predicated region
      $region13: #{tpu_custom_call.1} parent=11 // pred_check
        %p162 = pneg %p58
      $region14: #{tpu_custom_call.1} parent=11 // pred_check_branch
        %164 = sbr.rel (%p162) target = $region16
      $region15: #{tpu_custom_call.1} parent=11 // pred_region
        _
      $region16: #{tpu_custom_call.1} parent=11 // pred_fallthru
        _
      // Predicated region
      $region17: #{tpu_custom_call.1} parent=11 // pred_check
        %p165 = pneg %p79
      $region18: #{tpu_custom_call.1} parent=11 // pred_check_branch
        %167 = sbr.rel (%p165) target = $region20
      $region19: #{tpu_custom_call.1} parent=11 // pred_region
        _
      $region20: #{tpu_custom_call.1} parent=11 // pred_fallthru
        _
      // Predicated region
      $region21: #{tpu_custom_call.1} parent=11 // pred_check
        %p168 = pneg %p100
      $region22: #{tpu_custom_call.1} parent=11 // pred_check_branch
        %170 = sbr.rel (%p168) target = $region24
      $region23: #{tpu_custom_call.1} parent=11 // pred_region
        _
      $region24: #{tpu_custom_call.1} parent=11 // pred_fallthru
        _
      // Predicated region
      $region25: #{tpu_custom_call.1} parent=11 // pred_check
        %p171 = pneg %p121
      $region26: #{tpu_custom_call.1} parent=11 // pred_check_branch
        %173 = sbr.rel (%p171) target = $region28
      $region27: #{tpu_custom_call.1} parent=11 // pred_region
        _
      $region28: #{tpu_custom_call.1} parent=11 // pred_fallthru
        _
    $region12: #{tpu_custom_call.1} parent=5 // pred_fallthru
      _
    %p174 = scmp.lt.s32.totalorder %s11, 2
    // Predicated region
    $region29: #{tpu_custom_call.1} parent=5 // pred_check
      %p175 = pneg %p174
    $region30: #{tpu_custom_call.1} parent=5 // pred_check_branch
      %177 = sbr.rel (%p175) target = $region32
    $region31: #{tpu_custom_call.1} parent=5 // pred_region
      // Predicated region
      $region33: #{tpu_custom_call.1} parent=31 // pred_check
        %p178 = pneg %p31
      $region34: #{tpu_custom_call.1} parent=31 // pred_check_branch
        %180 = sbr.rel (%p178) target = $region36
      $region35: #{tpu_custom_call.1} parent=31 // pred_region
        %p181 = scmp.lt.s32.totalorder %s11, 1
        %s182 = scalar_select %p181, %s11, 1
        %s183 = smul.addr %s182, 32
        %s184 = smul.addr %s183, 8
        %s185 = scalar_lea.vmem %s0, %s184
      $region36: #{tpu_custom_call.1} parent=31 // pred_fallthru
        _
    $region32: #{tpu_custom_call.1} parent=5 // pred_fallthru
      _
    %p186 = scmp.le.s32.totalorder 1, %s11
    %p187 = scmp.lt.s32.totalorder %s11, 3
    %p188 = pnand %p186, %p187
    %p189 = pneg %p188
    // Predicated region
    $region37: #{tpu_custom_call.1} parent=5 // pred_check
      _
    $region38: #{tpu_custom_call.1} parent=5 // pred_check_branch
      %191 = sbr.rel (%p188) target = $region40
    $region39: #{tpu_custom_call.1} parent=5 // pred_region
      %s192 = ssub.s32 %s11, 1
      %p193 = scmp.lt.s32.totalorder %s16, 1
      %s194 = scalar_select %p193, %s16, 1
      %s195 = smul.addr %s194, 32
      %s196 = smul.addr %s195, 8
      %s197 = scalar_lea.vmem %s0, %s196
      %p198 = pneg %p37
      %p199 = pneg %p34
      %p200 = pneg %p58
      %p201 = pneg %p55
      %p202 = pneg %p79
      %p203 = pneg %p76
      %p204 = pneg %p100
      %p205 = pneg %p97
      %p206 = pneg %p121
      %p207 = pneg %p118
      %p208 = pneg %p147
      %p209 = pneg %p144
      %p210 = scmp.lt.s32.totalorder %s16, 1
      %s211 = scalar_select %p210, %s16, 1
      %s212 = smul.addr %s211, 32
      %s213 = smul.addr %s212, 8
      %s214 = scalar_lea.vmem %s5, %s213
      %p215 = scmp.lt.s32.totalorder %s16, 1
      %s216 = scalar_select %p215, %s16, 1
      %s217 = smul.addr %s216, 32
      %s218 = smul.addr %s217, 8
      %s219 = scalar_lea.vmem %s0, %s218
      %p220 = scmp.lt.s32.totalorder %s16, 1
      %s221 = scalar_select %p220, %s16, 1
      %s222 = smul.addr %s221, 32
      %s223 = smul.addr %s222, 8
      %s224 = scalar_lea.vmem %s5, %s223
      %v226 = vld [vmem:[%s219] sm:$0xff]
      %v227 = vld [vmem:[%s219 + $0x8] sm:$0xff]
      %v228 = vld [vmem:[%s219 + $0x10] sm:$0xff]
      %v229 = vld [vmem:[%s219 + $0x18] sm:$0xff]
      %v230 = vld [vmem:[%s219 + $0x20] sm:$0xff]
      %v231 = vld [vmem:[%s219 + $0x28] sm:$0xff]
      %v232 = vld [vmem:[%s219 + $0x30] sm:$0xff]
      %v233 = vld [vmem:[%s219 + $0x38] sm:$0xff]
      %v234 = vld [vmem:[%s219 + $0x40] sm:$0xff]
      %v235 = vld [vmem:[%s219 + $0x48] sm:$0xff]
      %v236 = vld [vmem:[%s219 + $0x50] sm:$0xff]
      %v237 = vld [vmem:[%s219 + $0x58] sm:$0xff]
      %v238 = vld [vmem:[%s219 + $0x60] sm:$0xff]
      %v239 = vld [vmem:[%s219 + $0x68] sm:$0xff]
      %v240 = vld [vmem:[%s219 + $0x70] sm:$0xff]
      %v241 = vld [vmem:[%s219 + $0x78] sm:$0xff]
      %v242 = vld [vmem:[%s219 + $0x80] sm:$0xff]
      %v243 = vld [vmem:[%s219 + $0x88] sm:$0xff]
      %v244 = vld [vmem:[%s219 + $0x90] sm:$0xff]
      %v245 = vld [vmem:[%s219 + $0x98] sm:$0xff]
      %v246 = vld [vmem:[%s219 + $0xa0] sm:$0xff]
      %v247 = vld [vmem:[%s219 + $0xa8] sm:$0xff]
      %v248 = vld [vmem:[%s219 + $0xb0] sm:$0xff]
      %v249 = vld [vmem:[%s219 + $0xb8] sm:$0xff]
      %v250 = vld [vmem:[%s219 + $0xc0] sm:$0xff]
      %v251 = vld [vmem:[%s219 + $0xc8] sm:$0xff]
      %v252 = vld [vmem:[%s219 + $0xd0] sm:$0xff]
      %v253 = vld [vmem:[%s219 + $0xd8] sm:$0xff]
      %v254 = vld [vmem:[%s219 + $0xe0] sm:$0xff]
      %v255 = vld [vmem:[%s219 + $0xe8] sm:$0xff]
      %v256 = vld [vmem:[%s219 + $0xf0] sm:$0xff]
      %v257 = vld [vmem:[%s219 + $0xf8] sm:$0xff]
      %s258 = scalar_lea.vmem [#allocation2], 24
      %vm259 = vcmask 31744
      %260 = vst.msk [vmem:[%s258 + $0x1] sm:$0xff] %vm259, %v226
      %261 = vst.msk [vmem:[%s258 + $0x9] sm:$0xff] %vm259, %v227
      %262 = vst.msk [vmem:[%s258 + $0x19] sm:$0xff] %vm259, %v228
      %263 = vst.msk [vmem:[%s258 + $0x21] sm:$0xff] %vm259, %v229
      %264 = vst.msk [vmem:[%s258 + $0x31] sm:$0xff] %vm259, %v230
      %265 = vst.msk [vmem:[%s258 + $0x39] sm:$0xff] %vm259, %v231
      %266 = vst.msk [vmem:[%s258 + $0x49] sm:$0xff] %vm259, %v232
      %267 = vst.msk [vmem:[%s258 + $0x51] sm:$0xff] %vm259, %v233
      %268 = vst.msk [vmem:[%s258 + $0x61] sm:$0xff] %vm259, %v234
      %269 = vst.msk [vmem:[%s258 + $0x69] sm:$0xff] %vm259, %v235
      %270 = vst.msk [vmem:[%s258 + $0x79] sm:$0xff] %vm259, %v236
      %271 = vst.msk [vmem:[%s258 + $0x81] sm:$0xff] %vm259, %v237
      %272 = vst.msk [vmem:[%s258 + $0x91] sm:$0xff] %vm259, %v238
      %273 = vst.msk [vmem:[%s258 + $0x99] sm:$0xff] %vm259, %v239
      %274 = vst.msk [vmem:[%s258 + $0xa9] sm:$0xff] %vm259, %v240
      %275 = vst.msk [vmem:[%s258 + $0xb1] sm:$0xff] %vm259, %v241
      %276 = vst.msk [vmem:[%s258 + $0xc1] sm:$0xff] %vm259, %v242
      %277 = vst.msk [vmem:[%s258 + $0xc9] sm:$0xff] %vm259, %v243
      %278 = vst.msk [vmem:[%s258 + $0xd9] sm:$0xff] %vm259, %v244
      %279 = vst.msk [vmem:[%s258 + $0xe1] sm:$0xff] %vm259, %v245
      %280 = vst.msk [vmem:[%s258 + $0xf1] sm:$0xff] %vm259, %v246
      %281 = vst.msk [vmem:[%s258 + $0xf9] sm:$0xff] %vm259, %v247
      %282 = vst.msk [vmem:[%s258 + $0x109] sm:$0xff] %vm259, %v248
      %283 = vst.msk [vmem:[%s258 + $0x111] sm:$0xff] %vm259, %v249
      %284 = vst.msk [vmem:[%s258 + $0x121] sm:$0xff] %vm259, %v250
      %285 = vst.msk [vmem:[%s258 + $0x129] sm:$0xff] %vm259, %v251
      %286 = vst.msk [vmem:[%s258 + $0x139] sm:$0xff] %vm259, %v252
      %287 = vst.msk [vmem:[%s258 + $0x141] sm:$0xff] %vm259, %v253
      %288 = vst.msk [vmem:[%s258 + $0x151] sm:$0xff] %vm259, %v254
      %289 = vst.msk [vmem:[%s258 + $0x159] sm:$0xff] %vm259, %v255
      %290 = vst.msk [vmem:[%s258 + $0x169] sm:$0xff] %vm259, %v256
      %291 = vst.msk [vmem:[%s258 + $0x171] sm:$0xff] %vm259, %v257
      %s292 = scalar_lea.vmem [#allocation2], 384
      %v293 = vld [vmem:[%s292 + $0x1] sm:$0xff]
      %v294 = vld [vmem:[%s292 + $0x9] sm:$0xff]
      %295 = vst.msk [vmem:[#allocation2 + $0x1] sm:$0xff] %vm259, %v293
      %296 = vst.msk [vmem:[#allocation2 + $0x9] sm:$0xff] %vm259, %v294
      %v297 = vld [vmem:[%s258 + $0x1] sm:$0xff]
      %v298 = vld [vmem:[%s258 + $0x9] sm:$0xff]
      %s299 = scalar_lea.vmem [#allocation2], 408
      %300 = vst.msk [vmem:[%s299 + $0x1] sm:$0xff] %vm259, %v297
      %301 = vst.msk [vmem:[%s299 + $0x9] sm:$0xff] %vm259, %v298
      %v302 = vld [vmem:[#allocation2 + $0x10] sm:$0x1]
      %v303 = vld [vmem:[#allocation2 + $0x28] sm:$0x1]
      %v304 = vld [vmem:[#allocation2 + $0x40] sm:$0x1]
      %v305 = vld [vmem:[#allocation2 + $0x58] sm:$0x1]
      %v306 = vld [vmem:[#allocation2 + $0x70] sm:$0x1]
      %v307 = vld [vmem:[#allocation2 + $0x88] sm:$0x1]
      %v308 = vld [vmem:[#allocation2 + $0xa0] sm:$0x1]
      %v309 = vld [vmem:[#allocation2 + $0xb8] sm:$0x1]
      %v310 = vld [vmem:[#allocation2 + $0xd0] sm:$0x1]
      %v311 = vld [vmem:[#allocation2 + $0xe8] sm:$0x1]
      %v312 = vld [vmem:[#allocation2 + $0x100] sm:$0x1]
      %v313 = vld [vmem:[#allocation2 + $0x118] sm:$0x1]
      %v314 = vld [vmem:[#allocation2 + $0x130] sm:$0x1]
      %v315 = vld [vmem:[#allocation2 + $0x148] sm:$0x1]
      %v316 = vld [vmem:[#allocation2 + $0x160] sm:$0x1]
      %v317 = vld [vmem:[#allocation2 + $0x178] sm:$0x1]
      %v318 = vld [vmem:[#allocation2 + $0x190] sm:$0x1]
      %v319 = vld [vmem:[#allocation2 + $0x1a8] sm:$0x1]
      %vm320 = vcmask 24576
      %321 = vst.msk [vmem:[#allocation2] sm:$0x1] %vm320, %v302
      %322 = vst.msk [vmem:[#allocation2 + $0x18] sm:$0x1] %vm320, %v303
      %323 = vst.msk [vmem:[#allocation2 + $0x30] sm:$0x1] %vm320, %v304
      %324 = vst.msk [vmem:[#allocation2 + $0x48] sm:$0x1] %vm320, %v305
      %325 = vst.msk [vmem:[#allocation2 + $0x60] sm:$0x1] %vm320, %v306
      %326 = vst.msk [vmem:[#allocation2 + $0x78] sm:$0x1] %vm320, %v307
      %327 = vst.msk [vmem:[#allocation2 + $0x90] sm:$0x1] %vm320, %v308
      %328 = vst.msk [vmem:[#allocation2 + $0xa8] sm:$0x1] %vm320, %v309
      %329 = vst.msk [vmem:[#allocation2 + $0xc0] sm:$0x1] %vm320, %v310
      %330 = vst.msk [vmem:[#allocation2 + $0xd8] sm:$0x1] %vm320, %v311
      %331 = vst.msk [vmem:[#allocation2 + $0xf0] sm:$0x1] %vm320, %v312
      %332 = vst.msk [vmem:[#allocation2 + $0x108] sm:$0x1] %vm320, %v313
      %333 = vst.msk [vmem:[#allocation2 + $0x120] sm:$0x1] %vm320, %v314
      %334 = vst.msk [vmem:[#allocation2 + $0x138] sm:$0x1] %vm320, %v315
      %335 = vst.msk [vmem:[#allocation2 + $0x150] sm:$0x1] %vm320, %v316
      %336 = vst.msk [vmem:[#allocation2 + $0x168] sm:$0x1] %vm320, %v317
      %337 = vst.msk [vmem:[#allocation2 + $0x180] sm:$0x1] %vm320, %v318
      %338 = vst.msk [vmem:[#allocation2 + $0x198] sm:$0x1] %vm320, %v319
      %v339 = vld [vmem:[#allocation2 + $0x1] sm:$0x1]
      %v340 = vld [vmem:[#allocation2 + $0x19] sm:$0x1]
      %v341 = vld [vmem:[#allocation2 + $0x31] sm:$0x1]
      %v342 = vld [vmem:[#allocation2 + $0x49] sm:$0x1]
      %v343 = vld [vmem:[#allocation2 + $0x61] sm:$0x1]
      %v344 = vld [vmem:[#allocation2 + $0x79] sm:$0x1]
      %v345 = vld [vmem:[#allocation2 + $0x91] sm:$0x1]
      %v346 = vld [vmem:[#allocation2 + $0xa9] sm:$0x1]
      %v347 = vld [vmem:[#allocation2 + $0xc1] sm:$0x1]
      %v348 = vld [vmem:[#allocation2 + $0xd9] sm:$0x1]
      %v349 = vld [vmem:[#allocation2 + $0xf1] sm:$0x1]
      %v350 = vld [vmem:[#allocation2 + $0x109] sm:$0x1]
      %v351 = vld [vmem:[#allocation2 + $0x121] sm:$0x1]
      %v352 = vld [vmem:[#allocation2 + $0x139] sm:$0x1]
      %v353 = vld [vmem:[#allocation2 + $0x151] sm:$0x1]
      %v354 = vld [vmem:[#allocation2 + $0x169] sm:$0x1]
      %v355 = vld [vmem:[#allocation2 + $0x181] sm:$0x1]
      %v356 = vld [vmem:[#allocation2 + $0x199] sm:$0x1]
      %357 = vst.msk [vmem:[#allocation2 + $0x11] sm:$0x1] %vm320, %v339
      %358 = vst.msk [vmem:[#allocation2 + $0x29] sm:$0x1] %vm320, %v340
      %359 = vst.msk [vmem:[#allocation2 + $0x41] sm:$0x1] %vm320, %v341
      %360 = vst.msk [vmem:[#allocation2 + $0x59] sm:$0x1] %vm320, %v342
      %361 = vst.msk [vmem:[#allocation2 + $0x71] sm:$0x1] %vm320, %v343
      %362 = vst.msk [vmem:[#allocation2 + $0x89] sm:$0x1] %vm320, %v344
      %363 = vst.msk [vmem:[#allocation2 + $0xa1] sm:$0x1] %vm320, %v345
      %364 = vst.msk [vmem:[#allocation2 + $0xb9] sm:$0x1] %vm320, %v346
      %365 = vst.msk [vmem:[#allocation2 + $0xd1] sm:$0x1] %vm320, %v347
      %366 = vst.msk [vmem:[#allocation2 + $0xe9] sm:$0x1] %vm320, %v348
      %367 = vst.msk [vmem:[#allocation2 + $0x101] sm:$0x1] %vm320, %v349
      %368 = vst.msk [vmem:[#allocation2 + $0x119] sm:$0x1] %vm320, %v350
      %369 = vst.msk [vmem:[#allocation2 + $0x131] sm:$0x1] %vm320, %v351
      %370 = vst.msk [vmem:[#allocation2 + $0x149] sm:$0x1] %vm320, %v352
      %371 = vst.msk [vmem:[#allocation2 + $0x161] sm:$0x1] %vm320, %v353
      %372 = vst.msk [vmem:[#allocation2 + $0x179] sm:$0x1] %vm320, %v354
      %373 = vst.msk [vmem:[#allocation2 + $0x191] sm:$0x1] %vm320, %v355
      %374 = vst.msk [vmem:[#allocation2 + $0x1a9] sm:$0x1] %vm320, %v356
      %v375 = vld [vmem:[#allocation2] sm:$0xff]
      %v376 = vld [vmem:[#allocation2 + $0x8] sm:$0xff]
      %v377 = vld [vmem:[#allocation2 + $0x18] sm:$0xff]
      %v378 = vld [vmem:[#allocation2 + $0x20] sm:$0xff]
      %v379 = vld [vmem:[#allocation2 + $0x30] sm:$0xff]
      %v380 = vld [vmem:[#allocation2 + $0x38] sm:$0xff]
      %v381 = vld [vmem:[#allocation2 + $0x48] sm:$0xff]
      %v382 = vld [vmem:[#allocation2 + $0x50] sm:$0xff]
      %v383 = vld [vmem:[#allocation2 + $0x60] sm:$0xff]
      %v384 = vld [vmem:[#allocation2 + $0x68] sm:$0xff]
      %v385 = vld [vmem:[#allocation2 + $0x78] sm:$0xff]
      %v386 = vld [vmem:[#allocation2 + $0x80] sm:$0xff]
      %v387 = vld [vmem:[#allocation2 + $0x90] sm:$0xff]
      %v388 = vld [vmem:[#allocation2 + $0x98] sm:$0xff]
      %v389 = vld [vmem:[#allocation2 + $0xa8] sm:$0xff]
      %v390 = vld [vmem:[#allocation2 + $0xb0] sm:$0xff]
      %v391 = vld [vmem:[#allocation2 + $0xc0] sm:$0xff]
      %v392 = vld [vmem:[#allocation2 + $0xc8] sm:$0xff]
      %v393 = vld [vmem:[#allocation2 + $0xd8] sm:$0xff]
      %v394 = vld [vmem:[#allocation2 + $0xe0] sm:$0xff]
      %v395 = vld [vmem:[#allocation2 + $0xf0] sm:$0xff]
      %v396 = vld [vmem:[#allocation2 + $0xf8] sm:$0xff]
      %v397 = vld [vmem:[#allocation2 + $0x108] sm:$0xff]
      %v398 = vld [vmem:[#allocation2 + $0x110] sm:$0xff]
      %v399 = vld [vmem:[#allocation2 + $0x120] sm:$0xff]
      %v400 = vld [vmem:[#allocation2 + $0x128] sm:$0xff]
      %v401 = vld [vmem:[#allocation2 + $0x138] sm:$0xff]
      %v402 = vld [vmem:[#allocation2 + $0x140] sm:$0xff]
      %v403 = vld [vmem:[#allocation2 + $0x150] sm:$0xff]
      %v404 = vld [vmem:[#allocation2 + $0x158] sm:$0xff]
      %v405 = vld [vmem:[#allocation2 + $0x168] sm:$0xff]
      %v406 = vld [vmem:[#allocation2 + $0x170] sm:$0xff]
      %v407 = vld [vmem:[#allocation2 + $0x1] sm:$0xff]
      %v408 = vld [vmem:[#allocation2 + $0x9] sm:$0xff]
      %v409 = vld [vmem:[#allocation2 + $0x19] sm:$0xff]
      %v410 = vld [vmem:[#allocation2 + $0x21] sm:$0xff]
      %v411 = vld [vmem:[#allocation2 + $0x31] sm:$0xff]
      %v412 = vld [vmem:[#allocation2 + $0x39] sm:$0xff]
      %v413 = vld [vmem:[#allocation2 + $0x49] sm:$0xff]
      %v414 = vld [vmem:[#allocation2 + $0x51] sm:$0xff]
      %v415 = vld [vmem:[#allocation2 + $0x61] sm:$0xff]
      %v416 = vld [vmem:[#allocation2 + $0x69] sm:$0xff]
      %v417 = vld [vmem:[#allocation2 + $0x79] sm:$0xff]
      %v418 = vld [vmem:[#allocation2 + $0x81] sm:$0xff]
      %v419 = vld [vmem:[#allocation2 + $0x91] sm:$0xff]
      %v420 = vld [vmem:[#allocation2 + $0x99] sm:$0xff]
      %v421 = vld [vmem:[#allocation2 + $0xa9] sm:$0xff]
      %v422 = vld [vmem:[#allocation2 + $0xb1] sm:$0xff]
      %v423 = vld [vmem:[#allocation2 + $0xc1] sm:$0xff]
      %v424 = vld [vmem:[#allocation2 + $0xc9] sm:$0xff]
      %v425 = vld [vmem:[#allocation2 + $0xd9] sm:$0xff]
      %v426 = vld [vmem:[#allocation2 + $0xe1] sm:$0xff]
      %v427 = vld [vmem:[#allocation2 + $0xf1] sm:$0xff]
      %v428 = vld [vmem:[#allocation2 + $0xf9] sm:$0xff]
      %v429 = vld [vmem:[#allocation2 + $0x109] sm:$0xff]
      %v430 = vld [vmem:[#allocation2 + $0x111] sm:$0xff]
      %v431 = vld [vmem:[#allocation2 + $0x121] sm:$0xff]
      %v432 = vld [vmem:[#allocation2 + $0x129] sm:$0xff]
      %v433 = vld [vmem:[#allocation2 + $0x139] sm:$0xff]
      %v434 = vld [vmem:[#allocation2 + $0x141] sm:$0xff]
      %v435 = vld [vmem:[#allocation2 + $0x151] sm:$0xff]
      %v436 = vld [vmem:[#allocation2 + $0x159] sm:$0xff]
      %v437 = vld [vmem:[#allocation2 + $0x169] sm:$0xff]
      %v438 = vld [vmem:[#allocation2 + $0x171] sm:$0xff]
      %v439 = vld [vmem:[#allocation2 + $0x2] sm:$0xff]
      %v440 = vld [vmem:[#allocation2 + $0xa] sm:$0xff]
      %v441 = vld [vmem:[#allocation2 + $0x1a] sm:$0xff]
      %v442 = vld [vmem:[#allocation2 + $0x22] sm:$0xff]
      %v443 = vld [vmem:[#allocation2 + $0x32] sm:$0xff]
      %v444 = vld [vmem:[#allocation2 + $0x3a] sm:$0xff]
      %v445 = vld [vmem:[#allocation2 + $0x4a] sm:$0xff]
      %v446 = vld [vmem:[#allocation2 + $0x52] sm:$0xff]
      %v447 = vld [vmem:[#allocation2 + $0x62] sm:$0xff]
      %v448 = vld [vmem:[#allocation2 + $0x6a] sm:$0xff]
      %v449 = vld [vmem:[#allocation2 + $0x7a] sm:$0xff]
      %v450 = vld [vmem:[#allocation2 + $0x82] sm:$0xff]
      %v451 = vld [vmem:[#allocation2 + $0x92] sm:$0xff]
      %v452 = vld [vmem:[#allocation2 + $0x9a] sm:$0xff]
      %v453 = vld [vmem:[#allocation2 + $0xaa] sm:$0xff]
      %v454 = vld [vmem:[#allocation2 + $0xb2] sm:$0xff]
      %v455 = vld [vmem:[#allocation2 + $0xc2] sm:$0xff]
      %v456 = vld [vmem:[#allocation2 + $0xca] sm:$0xff]
      %v457 = vld [vmem:[#allocation2 + $0xda] sm:$0xff]
      %v458 = vld [vmem:[#allocation2 + $0xe2] sm:$0xff]
      %v459 = vld [vmem:[#allocation2 + $0xf2] sm:$0xff]
      %v460 = vld [vmem:[#allocation2 + $0xfa] sm:$0xff]
      %v461 = vld [vmem:[#allocation2 + $0x10a] sm:$0xff]
      %v462 = vld [vmem:[#allocation2 + $0x112] sm:$0xff]
      %v463 = vld [vmem:[#allocation2 + $0x122] sm:$0xff]
      %v464 = vld [vmem:[#allocation2 + $0x12a] sm:$0xff]
      %v465 = vld [vmem:[#allocation2 + $0x13a] sm:$0xff]
      %v466 = vld [vmem:[#allocation2 + $0x142] sm:$0xff]
      %v467 = vld [vmem:[#allocation2 + $0x152] sm:$0xff]
      %v468 = vld [vmem:[#allocation2 + $0x15a] sm:$0xff]
      %v469 = vld [vmem:[#allocation2 + $0x16a] sm:$0xff]
      %v470 = vld [vmem:[#allocation2 + $0x172] sm:$0xff]
      %503 = vrot.lane.b32.xlu0 %v407, 4
      %v504 = vpop.permute.xlu0 %503
      %505 = vrot.lane.b32.xlu0 %v408, 4
      %v506 = vpop.permute.xlu0 %505
      %507 = vrot.lane.b32.xlu0 %v409, 4
      %v508 = vpop.permute.xlu0 %507
      %509 = vrot.lane.b32.xlu0 %v410, 4
      %v510 = vpop.permute.xlu0 %509
      %511 = vrot.lane.b32.xlu0 %v411, 4
      %v512 = vpop.permute.xlu0 %511
      %513 = vrot.lane.b32.xlu0 %v412, 4
      %v514 = vpop.permute.xlu0 %513
      %515 = vrot.lane.b32.xlu0 %v413, 4
      %v516 = vpop.permute.xlu0 %515
      %517 = vrot.lane.b32.xlu0 %v414, 4
      %v518 = vpop.permute.xlu0 %517
      %519 = vrot.lane.b32.xlu0 %v415, 4
      %v520 = vpop.permute.xlu0 %519
      %521 = vrot.lane.b32.xlu0 %v416, 4
      %v522 = vpop.permute.xlu0 %521
      %523 = vrot.lane.b32.xlu0 %v417, 4
      %v524 = vpop.permute.xlu0 %523
      %525 = vrot.lane.b32.xlu0 %v418, 4
      %v526 = vpop.permute.xlu0 %525
      %527 = vrot.lane.b32.xlu0 %v419, 4
      %v528 = vpop.permute.xlu0 %527
      %529 = vrot.lane.b32.xlu0 %v420, 4
      %v530 = vpop.permute.xlu0 %529
      %531 = vrot.lane.b32.xlu0 %v421, 4
      %v532 = vpop.permute.xlu0 %531
      %533 = vrot.lane.b32.xlu0 %v422, 4
      %v534 = vpop.permute.xlu0 %533
      %535 = vrot.lane.b32.xlu0 %v423, 4
      %v536 = vpop.permute.xlu0 %535
      %537 = vrot.lane.b32.xlu0 %v424, 4
      %v538 = vpop.permute.xlu0 %537
      %539 = vrot.lane.b32.xlu0 %v425, 4
      %v540 = vpop.permute.xlu0 %539
      %541 = vrot.lane.b32.xlu0 %v426, 4
      %v542 = vpop.permute.xlu0 %541
      %543 = vrot.lane.b32.xlu0 %v427, 4
      %v544 = vpop.permute.xlu0 %543
      %545 = vrot.lane.b32.xlu0 %v428, 4
      %v546 = vpop.permute.xlu0 %545
      %547 = vrot.lane.b32.xlu0 %v429, 4
      %v548 = vpop.permute.xlu0 %547
      %549 = vrot.lane.b32.xlu0 %v430, 4
      %v550 = vpop.permute.xlu0 %549
      %551 = vrot.lane.b32.xlu0 %v431, 4
      %v552 = vpop.permute.xlu0 %551
      %553 = vrot.lane.b32.xlu0 %v432, 4
      %v554 = vpop.permute.xlu0 %553
      %555 = vrot.lane.b32.xlu0 %v433, 4
      %v556 = vpop.permute.xlu0 %555
      %557 = vrot.lane.b32.xlu0 %v434, 4
      %v558 = vpop.permute.xlu0 %557
      %559 = vrot.lane.b32.xlu0 %v435, 4
      %v560 = vpop.permute.xlu0 %559
      %561 = vrot.lane.b32.xlu0 %v436, 4
      %v562 = vpop.permute.xlu0 %561
      %563 = vrot.lane.b32.xlu0 %v437, 4
      %v564 = vpop.permute.xlu0 %563
      %565 = vrot.lane.b32.xlu0 %v438, 4
      %v566 = vpop.permute.xlu0 %565
      %631 = vrot.lane.b32.xlu0 %v439, 8
      %v632 = vpop.permute.xlu0 %631
      %633 = vrot.lane.b32.xlu0 %v440, 8
      %v634 = vpop.permute.xlu0 %633
      %635 = vrot.lane.b32.xlu0 %v441, 8
      %v636 = vpop.permute.xlu0 %635
      %637 = vrot.lane.b32.xlu0 %v442, 8
      %v638 = vpop.permute.xlu0 %637
      %639 = vrot.lane.b32.xlu0 %v443, 8
      %v640 = vpop.permute.xlu0 %639
      %641 = vrot.lane.b32.xlu0 %v444, 8
      %v642 = vpop.permute.xlu0 %641
      %643 = vrot.lane.b32.xlu0 %v445, 8
      %v644 = vpop.permute.xlu0 %643
      %645 = vrot.lane.b32.xlu0 %v446, 8
      %v646 = vpop.permute.xlu0 %645
      %647 = vrot.lane.b32.xlu0 %v447, 8
      %v648 = vpop.permute.xlu0 %647
      %649 = vrot.lane.b32.xlu0 %v448, 8
      %v650 = vpop.permute.xlu0 %649
      %651 = vrot.lane.b32.xlu0 %v449, 8
      %v652 = vpop.permute.xlu0 %651
      %653 = vrot.lane.b32.xlu0 %v450, 8
      %v654 = vpop.permute.xlu0 %653
      %655 = vrot.lane.b32.xlu0 %v451, 8
      %v656 = vpop.permute.xlu0 %655
      %657 = vrot.lane.b32.xlu0 %v452, 8
      %v658 = vpop.permute.xlu0 %657
      %659 = vrot.lane.b32.xlu0 %v453, 8
      %v660 = vpop.permute.xlu0 %659
      %661 = vrot.lane.b32.xlu0 %v454, 8
      %v662 = vpop.permute.xlu0 %661
      %663 = vrot.lane.b32.xlu0 %v455, 8
      %v664 = vpop.permute.xlu0 %663
      %665 = vrot.lane.b32.xlu0 %v456, 8
      %v666 = vpop.permute.xlu0 %665
      %667 = vrot.lane.b32.xlu0 %v457, 8
      %v668 = vpop.permute.xlu0 %667
      %669 = vrot.lane.b32.xlu0 %v458, 8
      %v670 = vpop.permute.xlu0 %669
      %671 = vrot.lane.b32.xlu0 %v459, 8
      %v672 = vpop.permute.xlu0 %671
      %673 = vrot.lane.b32.xlu0 %v460, 8
      %v674 = vpop.permute.xlu0 %673
      %675 = vrot.lane.b32.xlu0 %v461, 8
      %v676 = vpop.permute.xlu0 %675
      %677 = vrot.lane.b32.xlu0 %v462, 8
      %v678 = vpop.permute.xlu0 %677
      %679 = vrot.lane.b32.xlu0 %v463, 8
      %v680 = vpop.permute.xlu0 %679
      %681 = vrot.lane.b32.xlu0 %v464, 8
      %v682 = vpop.permute.xlu0 %681
      %683 = vrot.lane.b32.xlu0 %v465, 8
      %v684 = vpop.permute.xlu0 %683
      %685 = vrot.lane.b32.xlu0 %v466, 8
      %v686 = vpop.permute.xlu0 %685
      %687 = vrot.lane.b32.xlu0 %v467, 8
      %v688 = vpop.permute.xlu0 %687
      %689 = vrot.lane.b32.xlu0 %v468, 8
      %v690 = vpop.permute.xlu0 %689
      %691 = vrot.lane.b32.xlu0 %v469, 8
      %v692 = vpop.permute.xlu0 %691
      %693 = vrot.lane.b32.xlu0 %v470, 8
      %v694 = vpop.permute.xlu0 %693
      %v727 = vsel %vm259, %v375, %v504
      %v728 = vsel %vm259, %v376, %v506
      %v729 = vsel %vm259, %v377, %v508
      %v730 = vsel %vm259, %v378, %v510
      %v731 = vsel %vm259, %v379, %v512
      %v732 = vsel %vm259, %v380, %v514
      %v733 = vsel %vm259, %v381, %v516
      %v734 = vsel %vm259, %v382, %v518
      %v735 = vsel %vm259, %v383, %v520
      %v736 = vsel %vm259, %v384, %v522
      %v737 = vsel %vm259, %v385, %v524
      %v738 = vsel %vm259, %v386, %v526
      %v739 = vsel %vm259, %v387, %v528
      %v740 = vsel %vm259, %v388, %v530
      %v741 = vsel %vm259, %v389, %v532
      %v742 = vsel %vm259, %v390, %v534
      %v743 = vsel %vm259, %v391, %v536
      %v744 = vsel %vm259, %v392, %v538
      %v745 = vsel %vm259, %v393, %v540
      %v746 = vsel %vm259, %v394, %v542
      %v747 = vsel %vm259, %v395, %v544
      %v748 = vsel %vm259, %v396, %v546
      %v749 = vsel %vm259, %v397, %v548
      %v750 = vsel %vm259, %v398, %v550
      %v751 = vsel %vm259, %v399, %v552
      %v752 = vsel %vm259, %v400, %v554
      %v753 = vsel %vm259, %v401, %v556
      %v754 = vsel %vm259, %v402, %v558
      %v755 = vsel %vm259, %v403, %v560
      %v756 = vsel %vm259, %v404, %v562
      %v757 = vsel %vm259, %v405, %v564
      %v758 = vsel %vm259, %v406, %v566
      %vm759 = vcmask 64512
      %v760 = vsel %vm759, %v727, %v632
      %v761 = vsel %vm759, %v728, %v634
      %v762 = vsel %vm759, %v729, %v636
      %v763 = vsel %vm759, %v730, %v638
      %v764 = vsel %vm759, %v731, %v640
      %v765 = vsel %vm759, %v732, %v642
      %v766 = vsel %vm759, %v733, %v644
      %v767 = vsel %vm759, %v734, %v646
      %v768 = vsel %vm759, %v735, %v648
      %v769 = vsel %vm759, %v736, %v650
      %v770 = vsel %vm759, %v737, %v652
      %v771 = vsel %vm759, %v738, %v654
      %v772 = vsel %vm759, %v739, %v656
      %v773 = vsel %vm759, %v740, %v658
      %v774 = vsel %vm759, %v741, %v660
      %v775 = vsel %vm759, %v742, %v662
      %v776 = vsel %vm759, %v743, %v664
      %v777 = vsel %vm759, %v744, %v666
      %v778 = vsel %vm759, %v745, %v668
      %v779 = vsel %vm759, %v746, %v670
      %v780 = vsel %vm759, %v747, %v672
      %v781 = vsel %vm759, %v748, %v674
      %v782 = vsel %vm759, %v749, %v676
      %v783 = vsel %vm759, %v750, %v678
      %v784 = vsel %vm759, %v751, %v680
      %v785 = vsel %vm759, %v752, %v682
      %v786 = vsel %vm759, %v753, %v684
      %v787 = vsel %vm759, %v754, %v686
      %v788 = vsel %vm759, %v755, %v688
      %v789 = vsel %vm759, %v756, %v690
      %v790 = vsel %vm759, %v757, %v692
      %v791 = vsel %vm759, %v758, %v694
      %v792 = vpack.c.bf16 %v761, %v760
      %v793 = vpack.c.bf16 %v763, %v762
      %v794 = vpack.c.bf16 %v765, %v764
      %v795 = vpack.c.bf16 %v767, %v766
      %v796 = vpack.c.bf16 %v769, %v768
      %v797 = vpack.c.bf16 %v771, %v770
      %v798 = vpack.c.bf16 %v773, %v772
      %v799 = vpack.c.bf16 %v775, %v774
      %v800 = vpack.c.bf16 %v777, %v776
      %v801 = vpack.c.bf16 %v779, %v778
      %v802 = vpack.c.bf16 %v781, %v780
      %v803 = vpack.c.bf16 %v783, %v782
      %v804 = vpack.c.bf16 %v785, %v784
      %v805 = vpack.c.bf16 %v787, %v786
      %v806 = vpack.c.bf16 %v789, %v788
      %v807 = vpack.c.bf16 %v791, %v790
      %v808 = vld [vmem:[%s1] sm:$0xf]
      %v809 = vld [vmem:[%s1 + $0x4] sm:$0x3]
      %v810 = vld [vmem:[%s258] sm:$0xff]
      %v811 = vld [vmem:[%s258 + $0x8] sm:$0xff]
      %v812 = vld [vmem:[%s258 + $0x18] sm:$0xff]
      %v813 = vld [vmem:[%s258 + $0x20] sm:$0xff]
      %v814 = vld [vmem:[%s258 + $0x30] sm:$0xff]
      %v815 = vld [vmem:[%s258 + $0x38] sm:$0xff]
      %v816 = vld [vmem:[%s258 + $0x48] sm:$0xff]
      %v817 = vld [vmem:[%s258 + $0x50] sm:$0xff]
      %v818 = vld [vmem:[%s258 + $0x60] sm:$0xff]
      %v819 = vld [vmem:[%s258 + $0x68] sm:$0xff]
      %v820 = vld [vmem:[%s258 + $0x78] sm:$0xff]
      %v821 = vld [vmem:[%s258 + $0x80] sm:$0xff]
      %v822 = vld [vmem:[%s258 + $0x90] sm:$0xff]
      %v823 = vld [vmem:[%s258 + $0x98] sm:$0xff]
      %v824 = vld [vmem:[%s258 + $0xa8] sm:$0xff]
      %v825 = vld [vmem:[%s258 + $0xb0] sm:$0xff]
      %v826 = vld [vmem:[%s258 + $0xc0] sm:$0xff]
      %v827 = vld [vmem:[%s258 + $0xc8] sm:$0xff]
      %v828 = vld [vmem:[%s258 + $0xd8] sm:$0xff]
      %v829 = vld [vmem:[%s258 + $0xe0] sm:$0xff]
      %v830 = vld [vmem:[%s258 + $0xf0] sm:$0xff]
      %v831 = vld [vmem:[%s258 + $0xf8] sm:$0xff]
      %v832 = vld [vmem:[%s258 + $0x108] sm:$0xff]
      %v833 = vld [vmem:[%s258 + $0x110] sm:$0xff]
      %v834 = vld [vmem:[%s258 + $0x120] sm:$0xff]
      %v835 = vld [vmem:[%s258 + $0x128] sm:$0xff]
      %v836 = vld [vmem:[%s258 + $0x138] sm:$0xff]
      %v837 = vld [vmem:[%s258 + $0x140] sm:$0xff]
      %v838 = vld [vmem:[%s258 + $0x150] sm:$0xff]
      %v839 = vld [vmem:[%s258 + $0x158] sm:$0xff]
      %v840 = vld [vmem:[%s258 + $0x168] sm:$0xff]
      %v841 = vld [vmem:[%s258 + $0x170] sm:$0xff]
      %v842 = vld [vmem:[%s258 + $0x1] sm:$0xff]
      %v843 = vld [vmem:[%s258 + $0x9] sm:$0xff]
      %v844 = vld [vmem:[%s258 + $0x19] sm:$0xff]
      %v845 = vld [vmem:[%s258 + $0x21] sm:$0xff]
      %v846 = vld [vmem:[%s258 + $0x31] sm:$0xff]
      %v847 = vld [vmem:[%s258 + $0x39] sm:$0xff]
      %v848 = vld [vmem:[%s258 + $0x49] sm:$0xff]
      %v849 = vld [vmem:[%s258 + $0x51] sm:$0xff]
      %v850 = vld [vmem:[%s258 + $0x61] sm:$0xff]
      %v851 = vld [vmem:[%s258 + $0x69] sm:$0xff]
      %v852 = vld [vmem:[%s258 + $0x79] sm:$0xff]
      %v853 = vld [vmem:[%s258 + $0x81] sm:$0xff]
      %v854 = vld [vmem:[%s258 + $0x91] sm:$0xff]
      %v855 = vld [vmem:[%s258 + $0x99] sm:$0xff]
      %v856 = vld [vmem:[%s258 + $0xa9] sm:$0xff]
      %v857 = vld [vmem:[%s258 + $0xb1] sm:$0xff]
      %v858 = vld [vmem:[%s258 + $0xc1] sm:$0xff]
      %v859 = vld [vmem:[%s258 + $0xc9] sm:$0xff]
      %v860 = vld [vmem:[%s258 + $0xd9] sm:$0xff]
      %v861 = vld [vmem:[%s258 + $0xe1] sm:$0xff]
      %v862 = vld [vmem:[%s258 + $0xf1] sm:$0xff]
      %v863 = vld [vmem:[%s258 + $0xf9] sm:$0xff]
      %v864 = vld [vmem:[%s258 + $0x109] sm:$0xff]
      %v865 = vld [vmem:[%s258 + $0x111] sm:$0xff]
      %v866 = vld [vmem:[%s258 + $0x121] sm:$0xff]
      %v867 = vld [vmem:[%s258 + $0x129] sm:$0xff]
      %v868 = vld [vmem:[%s258 + $0x139] sm:$0xff]
      %v869 = vld [vmem:[%s258 + $0x141] sm:$0xff]
      %v870 = vld [vmem:[%s258 + $0x151] sm:$0xff]
      %v871 = vld [vmem:[%s258 + $0x159] sm:$0xff]
      %v872 = vld [vmem:[%s258 + $0x169] sm:$0xff]
      %v873 = vld [vmem:[%s258 + $0x171] sm:$0xff]
      %v874 = vld [vmem:[%s258 + $0x2] sm:$0xff]
      %v875 = vld [vmem:[%s258 + $0xa] sm:$0xff]
      %v876 = vld [vmem:[%s258 + $0x1a] sm:$0xff]
      %v877 = vld [vmem:[%s258 + $0x22] sm:$0xff]
      %v878 = vld [vmem:[%s258 + $0x32] sm:$0xff]
      %v879 = vld [vmem:[%s258 + $0x3a] sm:$0xff]
      %v880 = vld [vmem:[%s258 + $0x4a] sm:$0xff]
      %v881 = vld [vmem:[%s258 + $0x52] sm:$0xff]
      %v882 = vld [vmem:[%s258 + $0x62] sm:$0xff]
      %v883 = vld [vmem:[%s258 + $0x6a] sm:$0xff]
      %v884 = vld [vmem:[%s258 + $0x7a] sm:$0xff]
      %v885 = vld [vmem:[%s258 + $0x82] sm:$0xff]
      %v886 = vld [vmem:[%s258 + $0x92] sm:$0xff]
      %v887 = vld [vmem:[%s258 + $0x9a] sm:$0xff]
      %v888 = vld [vmem:[%s258 + $0xaa] sm:$0xff]
      %v889 = vld [vmem:[%s258 + $0xb2] sm:$0xff]
      %v890 = vld [vmem:[%s258 + $0xc2] sm:$0xff]
      %v891 = vld [vmem:[%s258 + $0xca] sm:$0xff]
      %v892 = vld [vmem:[%s258 + $0xda] sm:$0xff]
      %v893 = vld [vmem:[%s258 + $0xe2] sm:$0xff]
      %v894 = vld [vmem:[%s258 + $0xf2] sm:$0xff]
      %v895 = vld [vmem:[%s258 + $0xfa] sm:$0xff]
      %v896 = vld [vmem:[%s258 + $0x10a] sm:$0xff]
      %v897 = vld [vmem:[%s258 + $0x112] sm:$0xff]
      %v898 = vld [vmem:[%s258 + $0x122] sm:$0xff]
      %v899 = vld [vmem:[%s258 + $0x12a] sm:$0xff]
      %v900 = vld [vmem:[%s258 + $0x13a] sm:$0xff]
      %v901 = vld [vmem:[%s258 + $0x142] sm:$0xff]
      %v902 = vld [vmem:[%s258 + $0x152] sm:$0xff]
      %v903 = vld [vmem:[%s258 + $0x15a] sm:$0xff]
      %v904 = vld [vmem:[%s258 + $0x16a] sm:$0xff]
      %v905 = vld [vmem:[%s258 + $0x172] sm:$0xff]
      %938 = vrot.lane.b32.xlu0 %v842, 4
      %v939 = vpop.permute.xlu0 %938
      %940 = vrot.lane.b32.xlu0 %v843, 4
      %v941 = vpop.permute.xlu0 %940
      %942 = vrot.lane.b32.xlu0 %v844, 4
      %v943 = vpop.permute.xlu0 %942
      %944 = vrot.lane.b32.xlu0 %v845, 4
      %v945 = vpop.permute.xlu0 %944
      %946 = vrot.lane.b32.xlu0 %v846, 4
      %v947 = vpop.permute.xlu0 %946
      %948 = vrot.lane.b32.xlu0 %v847, 4
      %v949 = vpop.permute.xlu0 %948
      %950 = vrot.lane.b32.xlu0 %v848, 4
      %v951 = vpop.permute.xlu0 %950
      %952 = vrot.lane.b32.xlu0 %v849, 4
      %v953 = vpop.permute.xlu0 %952
      %954 = vrot.lane.b32.xlu0 %v850, 4
      %v955 = vpop.permute.xlu0 %954
      %956 = vrot.lane.b32.xlu0 %v851, 4
      %v957 = vpop.permute.xlu0 %956
      %958 = vrot.lane.b32.xlu0 %v852, 4
      %v959 = vpop.permute.xlu0 %958
      %960 = vrot.lane.b32.xlu0 %v853, 4
      %v961 = vpop.permute.xlu0 %960
      %962 = vrot.lane.b32.xlu0 %v854, 4
      %v963 = vpop.permute.xlu0 %962
      %964 = vrot.lane.b32.xlu0 %v855, 4
      %v965 = vpop.permute.xlu0 %964
      %966 = vrot.lane.b32.xlu0 %v856, 4
      %v967 = vpop.permute.xlu0 %966
      %968 = vrot.lane.b32.xlu0 %v857, 4
      %v969 = vpop.permute.xlu0 %968
      %970 = vrot.lane.b32.xlu0 %v858, 4
      %v971 = vpop.permute.xlu0 %970
      %972 = vrot.lane.b32.xlu0 %v859, 4
      %v973 = vpop.permute.xlu0 %972
      %974 = vrot.lane.b32.xlu0 %v860, 4
      %v975 = vpop.permute.xlu0 %974
      %976 = vrot.lane.b32.xlu0 %v861, 4
      %v977 = vpop.permute.xlu0 %976
      %978 = vrot.lane.b32.xlu0 %v862, 4
      %v979 = vpop.permute.xlu0 %978
      %980 = vrot.lane.b32.xlu0 %v863, 4
      %v981 = vpop.permute.xlu0 %980
      %982 = vrot.lane.b32.xlu0 %v864, 4
      %v983 = vpop.permute.xlu0 %982
      %984 = vrot.lane.b32.xlu0 %v865, 4
      %v985 = vpop.permute.xlu0 %984
      %986 = vrot.lane.b32.xlu0 %v866, 4
      %v987 = vpop.permute.xlu0 %986
      %988 = vrot.lane.b32.xlu0 %v867, 4
      %v989 = vpop.permute.xlu0 %988
      %990 = vrot.lane.b32.xlu0 %v868, 4
      %v991 = vpop.permute.xlu0 %990
      %992 = vrot.lane.b32.xlu0 %v869, 4
      %v993 = vpop.permute.xlu0 %992
      %994 = vrot.lane.b32.xlu0 %v870, 4
      %v995 = vpop.permute.xlu0 %994
      %996 = vrot.lane.b32.xlu0 %v871, 4
      %v997 = vpop.permute.xlu0 %996
      %998 = vrot.lane.b32.xlu0 %v872, 4
      %v999 = vpop.permute.xlu0 %998
      %1000 = vrot.lane.b32.xlu0 %v873, 4
      %v1001 = vpop.permute.xlu0 %1000
      %1066 = vrot.lane.b32.xlu0 %v874, 8
      %v1067 = vpop.permute.xlu0 %1066
      %1068 = vrot.lane.b32.xlu0 %v875, 8
      %v1069 = vpop.permute.xlu0 %1068
      %1070 = vrot.lane.b32.xlu0 %v876, 8
      %v1071 = vpop.permute.xlu0 %1070
      %1072 = vrot.lane.b32.xlu0 %v877, 8
      %v1073 = vpop.permute.xlu0 %1072
      %1074 = vrot.lane.b32.xlu0 %v878, 8
      %v1075 = vpop.permute.xlu0 %1074
      %1076 = vrot.lane.b32.xlu0 %v879, 8
      %v1077 = vpop.permute.xlu0 %1076
      %1078 = vrot.lane.b32.xlu0 %v880, 8
      %v1079 = vpop.permute.xlu0 %1078
      %1080 = vrot.lane.b32.xlu0 %v881, 8
      %v1081 = vpop.permute.xlu0 %1080
      %1082 = vrot.lane.b32.xlu0 %v882, 8
      %v1083 = vpop.permute.xlu0 %1082
      %1084 = vrot.lane.b32.xlu0 %v883, 8
      %v1085 = vpop.permute.xlu0 %1084
      %1086 = vrot.lane.b32.xlu0 %v884, 8
      %v1087 = vpop.permute.xlu0 %1086
      %1088 = vrot.lane.b32.xlu0 %v885, 8
      %v1089 = vpop.permute.xlu0 %1088
      %1090 = vrot.lane.b32.xlu0 %v886, 8
      %v1091 = vpop.permute.xlu0 %1090
      %1092 = vrot.lane.b32.xlu0 %v887, 8
      %v1093 = vpop.permute.xlu0 %1092
      %1094 = vrot.lane.b32.xlu0 %v888, 8
      %v1095 = vpop.permute.xlu0 %1094
      %1096 = vrot.lane.b32.xlu0 %v889, 8
      %v1097 = vpop.permute.xlu0 %1096
      %1098 = vrot.lane.b32.xlu0 %v890, 8
      %v1099 = vpop.permute.xlu0 %1098
      %1100 = vrot.lane.b32.xlu0 %v891, 8
      %v1101 = vpop.permute.xlu0 %1100
      %1102 = vrot.lane.b32.xlu0 %v892, 8
      %v1103 = vpop.permute.xlu0 %1102
      %1104 = vrot.lane.b32.xlu0 %v893, 8
      %v1105 = vpop.permute.xlu0 %1104
      %1106 = vrot.lane.b32.xlu0 %v894, 8
      %v1107 = vpop.permute.xlu0 %1106
      %1108 = vrot.lane.b32.xlu0 %v895, 8
      %v1109 = vpop.permute.xlu0 %1108
      %1110 = vrot.lane.b32.xlu0 %v896, 8
      %v1111 = vpop.permute.xlu0 %1110
      %1112 = vrot.lane.b32.xlu0 %v897, 8
      %v1113 = vpop.permute.xlu0 %1112
      %1114 = vrot.lane.b32.xlu0 %v898, 8
      %v1115 = vpop.permute.xlu0 %1114
      %1116 = vrot.lane.b32.xlu0 %v899, 8
      %v1117 = vpop.permute.xlu0 %1116
      %1118 = vrot.lane.b32.xlu0 %v900, 8
      %v1119 = vpop.permute.xlu0 %1118
      %1120 = vrot.lane.b32.xlu0 %v901, 8
      %v1121 = vpop.permute.xlu0 %1120
      %1122 = vrot.lane.b32.xlu0 %v902, 8
      %v1123 = vpop.permute.xlu0 %1122
      %1124 = vrot.lane.b32.xlu0 %v903, 8
      %v1125 = vpop.permute.xlu0 %1124
      %1126 = vrot.lane.b32.xlu0 %v904, 8
      %v1127 = vpop.permute.xlu0 %1126
      %1128 = vrot.lane.b32.xlu0 %v905, 8
      %v1129 = vpop.permute.xlu0 %1128
      %v1162 = vsel %vm259, %v810, %v939
      %v1163 = vsel %vm259, %v811, %v941
      %v1164 = vsel %vm259, %v812, %v943
      %v1165 = vsel %vm259, %v813, %v945
      %v1166 = vsel %vm259, %v814, %v947
      %v1167 = vsel %vm259, %v815, %v949
      %v1168 = vsel %vm259, %v816, %v951
      %v1169 = vsel %vm259, %v817, %v953
      %v1170 = vsel %vm259, %v818, %v955
      %v1171 = vsel %vm259, %v819, %v957
      %v1172 = vsel %vm259, %v820, %v959
      %v1173 = vsel %vm259, %v821, %v961
      %v1174 = vsel %vm259, %v822, %v963
      %v1175 = vsel %vm259, %v823, %v965
      %v1176 = vsel %vm259, %v824, %v967
      %v1177 = vsel %vm259, %v825, %v969
      %v1178 = vsel %vm259, %v826, %v971
      %v1179 = vsel %vm259, %v827, %v973
      %v1180 = vsel %vm259, %v828, %v975
      %v1181 = vsel %vm259, %v829, %v977
      %v1182 = vsel %vm259, %v830, %v979
      %v1183 = vsel %vm259, %v831, %v981
      %v1184 = vsel %vm259, %v832, %v983
      %v1185 = vsel %vm259, %v833, %v985
      %v1186 = vsel %vm259, %v834, %v987
      %v1187 = vsel %vm259, %v835, %v989
      %v1188 = vsel %vm259, %v836, %v991
      %v1189 = vsel %vm259, %v837, %v993
      %v1190 = vsel %vm259, %v838, %v995
      %v1191 = vsel %vm259, %v839, %v997
      %v1192 = vsel %vm259, %v840, %v999
      %v1193 = vsel %vm259, %v841, %v1001
      %v1194 = vsel %vm759, %v1162, %v1067
      %v1195 = vsel %vm759, %v1163, %v1069
      %v1196 = vsel %vm759, %v1164, %v1071
      %v1197 = vsel %vm759, %v1165, %v1073
      %v1198 = vsel %vm759, %v1166, %v1075
      %v1199 = vsel %vm759, %v1167, %v1077
      %v1200 = vsel %vm759, %v1168, %v1079
      %v1201 = vsel %vm759, %v1169, %v1081
      %v1202 = vsel %vm759, %v1170, %v1083
      %v1203 = vsel %vm759, %v1171, %v1085
      %v1204 = vsel %vm759, %v1172, %v1087
      %v1205 = vsel %vm759, %v1173, %v1089
      %v1206 = vsel %vm759, %v1174, %v1091
      %v1207 = vsel %vm759, %v1175, %v1093
      %v1208 = vsel %vm759, %v1176, %v1095
      %v1209 = vsel %vm759, %v1177, %v1097
      %v1210 = vsel %vm759, %v1178, %v1099
      %v1211 = vsel %vm759, %v1179, %v1101
      %v1212 = vsel %vm759, %v1180, %v1103
      %v1213 = vsel %vm759, %v1181, %v1105
      %v1214 = vsel %vm759, %v1182, %v1107
      %v1215 = vsel %vm759, %v1183, %v1109
      %v1216 = vsel %vm759, %v1184, %v1111
      %v1217 = vsel %vm759, %v1185, %v1113
      %v1218 = vsel %vm759, %v1186, %v1115
      %v1219 = vsel %vm759, %v1187, %v1117
      %v1220 = vsel %vm759, %v1188, %v1119
      %v1221 = vsel %vm759, %v1189, %v1121
      %v1222 = vsel %vm759, %v1190, %v1123
      %v1223 = vsel %vm759, %v1191, %v1125
      %v1224 = vsel %vm759, %v1192, %v1127
      %v1225 = vsel %vm759, %v1193, %v1129
      %v1226 = vpack.c.bf16 %v1195, %v1194
      %v1227 = vpack.c.bf16 %v1197, %v1196
      %v1228 = vpack.c.bf16 %v1199, %v1198
      %v1229 = vpack.c.bf16 %v1201, %v1200
      %v1230 = vpack.c.bf16 %v1203, %v1202
      %v1231 = vpack.c.bf16 %v1205, %v1204
      %v1232 = vpack.c.bf16 %v1207, %v1206
      %v1233 = vpack.c.bf16 %v1209, %v1208
      %v1234 = vpack.c.bf16 %v1211, %v1210
      %v1235 = vpack.c.bf16 %v1213, %v1212
      %v1236 = vpack.c.bf16 %v1215, %v1214
      %v1237 = vpack.c.bf16 %v1217, %v1216
      %v1238 = vpack.c.bf16 %v1219, %v1218
      %v1239 = vpack.c.bf16 %v1221, %v1220
      %v1240 = vpack.c.bf16 %v1223, %v1222
      %v1241 = vpack.c.bf16 %v1225, %v1224
      %s1242 = scalar_lea.vmem %s1, 8
      %v1243 = vld [vmem:[%s1242] sm:$0xf]
      %v1244 = vld [vmem:[%s1242 + $0x4] sm:$0x3]
      %v1247 = vunpack.c.l.b16 %v1243
      %v1248 = vunpack.c.l.b16 %v1244
      %v1249 = vpack.c.b16 %v1248, %v1247
      %vm1250 = vcmask 97280
      %v1252 = vsel %vm1250, %v1226, 0
      %v1255 = vsel %vm1250, %v1227, 0
      %v1258 = vsel %vm1250, %v1228, 0
      %v1261 = vsel %vm1250, %v1229, 0
      %v1264 = vsel %vm1250, %v1230, 0
      %v1267 = vsel %vm1250, %v1231, 0
      %v1270 = vsel %vm1250, %v1232, 0
      %v1273 = vsel %vm1250, %v1233, 0
      %v1276 = vsel %vm1250, %v1234, 0
      %v1279 = vsel %vm1250, %v1235, 0
      %v1282 = vsel %vm1250, %v1236, 0
      %v1285 = vsel %vm1250, %v1237, 0
      %v1288 = vsel %vm1250, %v1238, 0
      %v1291 = vsel %vm1250, %v1239, 0
      %v1294 = vsel %vm1250, %v1240, 0
      %v1297 = vsel %vm1250, %v1241, 0
      %vm1299 = vcmask 1045504
      %v1301 = vsel %vm1299, %v1249, 0
      %1303 = vmatprep.subr.bf16.mxu0 0
      %1304 = vmatpush1.bf16.msra.mxu0 0
      %1305 = vmatprep.subr.bf16.mxu0 0
      %1306 = vmatpush1.bf16.msra.mxu0 0
      %1307 = vmatprep.subr.bf16.mxu0 0
      %1308 = vmatpush1.bf16.msra.mxu0 0
      %1309 = vmatprep.subr.bf16.mxu0 0
      %1310 = vmatpush1.bf16.msra.mxu0 0
      %1311 = vmatprep.subr.bf16.mxu0 0
      %1312 = vmatpush1.bf16.msra.mxu0 0
      %1313 = vmatprep.subr.bf16.mxu0 0
      %1314 = vmatpush1.bf16.msra.mxu0 0
      %1315 = vmatprep.subr.bf16.mxu0 0
      %1316 = vmatpush1.bf16.msra.mxu0 0
      %1317 = vmatprep.subr.bf16.mxu0 0
      %1318 = vmatpush1.bf16.msra.mxu0 %v1301
      %1319 = vmatprep.subr.bf16.mxu0 0
      %1320 = vmatpush2.bf16.msra.mxu0 0
      %1321 = vmatprep.subr.bf16.mxu0 0
      %1322 = vmatpush2.bf16.msra.mxu0 0
      %1323 = vmatprep.subr.bf16.mxu0 0
      %1324 = vmatpush2.bf16.msra.mxu0 0
      %1325 = vmatprep.subr.bf16.mxu0 0
      %1326 = vmatpush2.bf16.msra.mxu0 0
      %1327 = vmatprep.subr.bf16.mxu0 0
      %1328 = vmatpush2.bf16.msra.mxu0 0
      %1329 = vmatprep.subr.bf16.mxu0 0
      %1330 = vmatpush2.bf16.msra.mxu0 0
      %1331 = vmatprep.subr.bf16.mxu0 0
      %1332 = vmatpush2.bf16.msra.mxu0 0
      %1333 = vmatprep.subr.bf16.mxu0 0
      %1334 = vmatpush2.bf16.msra.mxu0 0
      %1335 = vmatprep.mubr.bf16.mxu0 0
      %1336 = vmatmul.mubr.bf16.gmra.mxu0 %v1252
      %v1337 = vpop.f32.mrf.mxu0
      %v1338 = vadd.f32 0.0, %v1337
      %v1339 = vpop.f32.mrf.mxu0
      %v1340 = vpop.f32.mrf.mxu0
      %v1341 = vadd.f32 0.0, %v1340
      %v1342 = vpop.f32.mrf.mxu0
      %1343 = vmatprep.mubr.bf16.mxu0 0
      %1344 = vmatmul.mubr.bf16.gmra.mxu0 %v1255
      %v1345 = vpop.f32.mrf.mxu0
      %v1346 = vadd.f32 0.0, %v1345
      %v1347 = vpop.f32.mrf.mxu0
      %v1348 = vpop.f32.mrf.mxu0
      %v1349 = vadd.f32 0.0, %v1348
      %v1350 = vpop.f32.mrf.mxu0
      %1351 = vmatprep.mubr.bf16.mxu0 0
      %1352 = vmatmul.mubr.bf16.gmra.mxu0 %v1258
      %v1353 = vpop.f32.mrf.mxu0
      %v1354 = vadd.f32 0.0, %v1353
      %v1355 = vpop.f32.mrf.mxu0
      %v1356 = vpop.f32.mrf.mxu0
      %v1357 = vadd.f32 0.0, %v1356
      %v1358 = vpop.f32.mrf.mxu0
      %1359 = vmatprep.mubr.bf16.mxu0 0
      %1360 = vmatmul.mubr.bf16.gmra.mxu0 %v1261
      %v1361 = vpop.f32.mrf.mxu0
      %v1362 = vadd.f32 0.0, %v1361
      %v1363 = vpop.f32.mrf.mxu0
      %v1364 = vpop.f32.mrf.mxu0
      %v1365 = vadd.f32 0.0, %v1364
      %v1366 = vpop.f32.mrf.mxu0
      %1367 = vmatprep.mubr.bf16.mxu0 0
      %1368 = vmatmul.mubr.bf16.gmra.mxu0 %v1264
      %v1369 = vpop.f32.mrf.mxu0
      %v1370 = vadd.f32 0.0, %v1369
      %v1371 = vpop.f32.mrf.mxu0
      %v1372 = vpop.f32.mrf.mxu0
      %v1373 = vadd.f32 0.0, %v1372
      %v1374 = vpop.f32.mrf.mxu0
      %1375 = vmatprep.mubr.bf16.mxu0 0
      %1376 = vmatmul.mubr.bf16.gmra.mxu0 %v1267
      %v1377 = vpop.f32.mrf.mxu0
      %v1378 = vadd.f32 0.0, %v1377
      %v1379 = vpop.f32.mrf.mxu0
      %v1380 = vpop.f32.mrf.mxu0
      %v1381 = vadd.f32 0.0, %v1380
      %v1382 = vpop.f32.mrf.mxu0
      %1383 = vmatprep.mubr.bf16.mxu0 0
      %1384 = vmatmul.mubr.bf16.gmra.mxu0 %v1270
      %v1385 = vpop.f32.mrf.mxu0
      %v1386 = vadd.f32 0.0, %v1385
      %v1387 = vpop.f32.mrf.mxu0
      %v1388 = vpop.f32.mrf.mxu0
      %v1389 = vadd.f32 0.0, %v1388
      %v1390 = vpop.f32.mrf.mxu0
      %1391 = vmatprep.mubr.bf16.mxu0 0
      %1392 = vmatmul.mubr.bf16.gmra.mxu0 %v1273
      %v1393 = vpop.f32.mrf.mxu0
      %v1394 = vadd.f32 0.0, %v1393
      %v1395 = vpop.f32.mrf.mxu0
      %v1396 = vpop.f32.mrf.mxu0
      %v1397 = vadd.f32 0.0, %v1396
      %v1398 = vpop.f32.mrf.mxu0
      %1399 = vmatprep.mubr.bf16.mxu0 0
      %1400 = vmatmul.mubr.bf16.gmra.mxu0 %v1276
      %v1401 = vpop.f32.mrf.mxu0
      %v1402 = vadd.f32 0.0, %v1401
      %v1403 = vpop.f32.mrf.mxu0
      %v1404 = vpop.f32.mrf.mxu0
      %v1405 = vadd.f32 0.0, %v1404
      %v1406 = vpop.f32.mrf.mxu0
      %1407 = vmatprep.mubr.bf16.mxu0 0
      %1408 = vmatmul.mubr.bf16.gmra.mxu0 %v1279
      %v1409 = vpop.f32.mrf.mxu0
      %v1410 = vadd.f32 0.0, %v1409
      %v1411 = vpop.f32.mrf.mxu0
      %v1412 = vpop.f32.mrf.mxu0
      %v1413 = vadd.f32 0.0, %v1412
      %v1414 = vpop.f32.mrf.mxu0
      %1415 = vmatprep.mubr.bf16.mxu0 0
      %1416 = vmatmul.mubr.bf16.gmra.mxu0 %v1282
      %v1417 = vpop.f32.mrf.mxu0
      %v1418 = vadd.f32 0.0, %v1417
      %v1419 = vpop.f32.mrf.mxu0
      %v1420 = vpop.f32.mrf.mxu0
      %v1421 = vadd.f32 0.0, %v1420
      %v1422 = vpop.f32.mrf.mxu0
      %1423 = vmatprep.mubr.bf16.mxu0 0
      %1424 = vmatmul.mubr.bf16.gmra.mxu0 %v1285
      %v1425 = vpop.f32.mrf.mxu0
      %v1426 = vadd.f32 0.0, %v1425
      %v1427 = vpop.f32.mrf.mxu0
      %v1428 = vpop.f32.mrf.mxu0
      %v1429 = vadd.f32 0.0, %v1428
      %v1430 = vpop.f32.mrf.mxu0
      %1431 = vmatprep.mubr.bf16.mxu0 0
      %1432 = vmatmul.mubr.bf16.gmra.mxu0 %v1288
      %v1433 = vpop.f32.mrf.mxu0
      %v1434 = vadd.f32 0.0, %v1433
      %v1435 = vpop.f32.mrf.mxu0
      %v1436 = vpop.f32.mrf.mxu0
      %v1437 = vadd.f32 0.0, %v1436
      %v1438 = vpop.f32.mrf.mxu0
      %1439 = vmatprep.mubr.bf16.mxu0 0
      %1440 = vmatmul.mubr.bf16.gmra.mxu0 %v1291
      %v1441 = vpop.f32.mrf.mxu0
      %v1442 = vadd.f32 0.0, %v1441
      %v1443 = vpop.f32.mrf.mxu0
      %v1444 = vpop.f32.mrf.mxu0
      %v1445 = vadd.f32 0.0, %v1444
      %v1446 = vpop.f32.mrf.mxu0
      %1447 = vmatprep.mubr.bf16.mxu0 0
      %1448 = vmatmul.mubr.bf16.gmra.mxu0 %v1294
      %v1449 = vpop.f32.mrf.mxu0
      %v1450 = vadd.f32 0.0, %v1449
      %v1451 = vpop.f32.mrf.mxu0
      %v1452 = vpop.f32.mrf.mxu0
      %v1453 = vadd.f32 0.0, %v1452
      %v1454 = vpop.f32.mrf.mxu0
      %1455 = vmatprep.mubr.bf16.mxu0 0
      %1456 = vmatmul.mubr.bf16.gmra.mxu0 %v1297
      %v1457 = vpop.f32.mrf.mxu0
      %v1458 = vadd.f32 0.0, %v1457
      %v1459 = vpop.f32.mrf.mxu0
      %v1460 = vpop.f32.mrf.mxu0
      %v1461 = vadd.f32 0.0, %v1460
      %v1462 = vpop.f32.mrf.mxu0
      %1463 = vdwg.mxu0
      %v1466 = vunpack.c.l.b16 %v808
      %v1467 = vunpack.c.l.b16 %v809
      %v1468 = vpack.c.b16 %v1467, %v1466
      %v1470 = vsel %vm1250, %v792, 0
      %v1473 = vsel %vm1250, %v793, 0
      %v1476 = vsel %vm1250, %v794, 0
      %v1479 = vsel %vm1250, %v795, 0
      %v1482 = vsel %vm1250, %v796, 0
      %v1485 = vsel %vm1250, %v797, 0
      %v1488 = vsel %vm1250, %v798, 0
      %v1491 = vsel %vm1250, %v799, 0
      %v1494 = vsel %vm1250, %v800, 0
      %v1497 = vsel %vm1250, %v801, 0
      %v1500 = vsel %vm1250, %v802, 0
      %v1503 = vsel %vm1250, %v803, 0
      %v1506 = vsel %vm1250, %v804, 0
      %v1509 = vsel %vm1250, %v805, 0
      %v1512 = vsel %vm1250, %v806, 0
      %v1515 = vsel %vm1250, %v807, 0
      %v1518 = vsel %vm1299, %v1468, 0
      %1520 = vmatprep.subr.bf16.mxu0 0
      %1521 = vmatpush1.bf16.msra.mxu0 0
      %1522 = vmatprep.subr.bf16.mxu0 0
      %1523 = vmatpush1.bf16.msra.mxu0 0
      %1524 = vmatprep.subr.bf16.mxu0 0
      %1525 = vmatpush1.bf16.msra.mxu0 0
      %1526 = vmatprep.subr.bf16.mxu0 0
      %1527 = vmatpush1.bf16.msra.mxu0 0
      %1528 = vmatprep.subr.bf16.mxu0 0
      %1529 = vmatpush1.bf16.msra.mxu0 0
      %1530 = vmatprep.subr.bf16.mxu0 0
      %1531 = vmatpush1.bf16.msra.mxu0 0
      %1532 = vmatprep.subr.bf16.mxu0 0
      %1533 = vmatpush1.bf16.msra.mxu0 0
      %1534 = vmatprep.subr.bf16.mxu0 0
      %1535 = vmatpush1.bf16.msra.mxu0 %v1518
      %1536 = vmatprep.subr.bf16.mxu0 0
      %1537 = vmatpush2.bf16.msra.mxu0 0
      %1538 = vmatprep.subr.bf16.mxu0 0
      %1539 = vmatpush2.bf16.msra.mxu0 0
      %1540 = vmatprep.subr.bf16.mxu0 0
      %1541 = vmatpush2.bf16.msra.mxu0 0
      %1542 = vmatprep.subr.bf16.mxu0 0
      %1543 = vmatpush2.bf16.msra.mxu0 0
      %1544 = vmatprep.subr.bf16.mxu0 0
      %1545 = vmatpush2.bf16.msra.mxu0 0
      %1546 = vmatprep.subr.bf16.mxu0 0
      %1547 = vmatpush2.bf16.msra.mxu0 0
      %1548 = vmatprep.subr.bf16.mxu0 0
      %1549 = vmatpush2.bf16.msra.mxu0 0
      %1550 = vmatprep.subr.bf16.mxu0 0
      %1551 = vmatpush2.bf16.msra.mxu0 0
      %1552 = vmatprep.mubr.bf16.mxu0 0
      %1553 = vmatmul.mubr.bf16.gmra.mxu0 %v1470
      %v1554 = vpop.f32.mrf.mxu0
      %v1555 = vadd.f32 %v1338, %v1554
      %v1556 = vpop.f32.mrf.mxu0
      %v1557 = vpop.f32.mrf.mxu0
      %v1558 = vadd.f32 %v1341, %v1557
      %v1559 = vpop.f32.mrf.mxu0
      %1560 = vmatprep.mubr.bf16.mxu0 0
      %1561 = vmatmul.mubr.bf16.gmra.mxu0 %v1473
      %v1562 = vpop.f32.mrf.mxu0
      %v1563 = vadd.f32 %v1346, %v1562
      %v1564 = vpop.f32.mrf.mxu0
      %v1565 = vpop.f32.mrf.mxu0
      %v1566 = vadd.f32 %v1349, %v1565
      %v1567 = vpop.f32.mrf.mxu0
      %1568 = vmatprep.mubr.bf16.mxu0 0
      %1569 = vmatmul.mubr.bf16.gmra.mxu0 %v1476
      %v1570 = vpop.f32.mrf.mxu0
      %v1571 = vadd.f32 %v1354, %v1570
      %v1572 = vpop.f32.mrf.mxu0
      %v1573 = vpop.f32.mrf.mxu0
      %v1574 = vadd.f32 %v1357, %v1573
      %v1575 = vpop.f32.mrf.mxu0
      %1576 = vmatprep.mubr.bf16.mxu0 0
      %1577 = vmatmul.mubr.bf16.gmra.mxu0 %v1479
      %v1578 = vpop.f32.mrf.mxu0
      %v1579 = vadd.f32 %v1362, %v1578
      %v1580 = vpop.f32.mrf.mxu0
      %v1581 = vpop.f32.mrf.mxu0
      %v1582 = vadd.f32 %v1365, %v1581
      %v1583 = vpop.f32.mrf.mxu0
      %1584 = vmatprep.mubr.bf16.mxu0 0
      %1585 = vmatmul.mubr.bf16.gmra.mxu0 %v1482
      %v1586 = vpop.f32.mrf.mxu0
      %v1587 = vadd.f32 %v1370, %v1586
      %v1588 = vpop.f32.mrf.mxu0
      %v1589 = vpop.f32.mrf.mxu0
      %v1590 = vadd.f32 %v1373, %v1589
      %v1591 = vpop.f32.mrf.mxu0
      %1592 = vmatprep.mubr.bf16.mxu0 0
      %1593 = vmatmul.mubr.bf16.gmra.mxu0 %v1485
      %v1594 = vpop.f32.mrf.mxu0
      %v1595 = vadd.f32 %v1378, %v1594
      %v1596 = vpop.f32.mrf.mxu0
      %v1597 = vpop.f32.mrf.mxu0
      %v1598 = vadd.f32 %v1381, %v1597
      %v1599 = vpop.f32.mrf.mxu0
      %1600 = vmatprep.mubr.bf16.mxu0 0
      %1601 = vmatmul.mubr.bf16.gmra.mxu0 %v1488
      %v1602 = vpop.f32.mrf.mxu0
      %v1603 = vadd.f32 %v1386, %v1602
      %v1604 = vpop.f32.mrf.mxu0
      %v1605 = vpop.f32.mrf.mxu0
      %v1606 = vadd.f32 %v1389, %v1605
      %v1607 = vpop.f32.mrf.mxu0
      %1608 = vmatprep.mubr.bf16.mxu0 0
      %1609 = vmatmul.mubr.bf16.gmra.mxu0 %v1491
      %v1610 = vpop.f32.mrf.mxu0
      %v1611 = vadd.f32 %v1394, %v1610
      %v1612 = vpop.f32.mrf.mxu0
      %v1613 = vpop.f32.mrf.mxu0
      %v1614 = vadd.f32 %v1397, %v1613
      %v1615 = vpop.f32.mrf.mxu0
      %1616 = vmatprep.mubr.bf16.mxu0 0
      %1617 = vmatmul.mubr.bf16.gmra.mxu0 %v1494
      %v1618 = vpop.f32.mrf.mxu0
      %v1619 = vadd.f32 %v1402, %v1618
      %v1620 = vpop.f32.mrf.mxu0
      %v1621 = vpop.f32.mrf.mxu0
      %v1622 = vadd.f32 %v1405, %v1621
      %v1623 = vpop.f32.mrf.mxu0
      %1624 = vmatprep.mubr.bf16.mxu0 0
      %1625 = vmatmul.mubr.bf16.gmra.mxu0 %v1497
      %v1626 = vpop.f32.mrf.mxu0
      %v1627 = vadd.f32 %v1410, %v1626
      %v1628 = vpop.f32.mrf.mxu0
      %v1629 = vpop.f32.mrf.mxu0
      %v1630 = vadd.f32 %v1413, %v1629
      %v1631 = vpop.f32.mrf.mxu0
      %1632 = vmatprep.mubr.bf16.mxu0 0
      %1633 = vmatmul.mubr.bf16.gmra.mxu0 %v1500
      %v1634 = vpop.f32.mrf.mxu0
      %v1635 = vadd.f32 %v1418, %v1634
      %v1636 = vpop.f32.mrf.mxu0
      %v1637 = vpop.f32.mrf.mxu0
      %v1638 = vadd.f32 %v1421, %v1637
      %v1639 = vpop.f32.mrf.mxu0
      %1640 = vmatprep.mubr.bf16.mxu0 0
      %1641 = vmatmul.mubr.bf16.gmra.mxu0 %v1503
      %v1642 = vpop.f32.mrf.mxu0
      %v1643 = vadd.f32 %v1426, %v1642
      %v1644 = vpop.f32.mrf.mxu0
      %v1645 = vpop.f32.mrf.mxu0
      %v1646 = vadd.f32 %v1429, %v1645
      %v1647 = vpop.f32.mrf.mxu0
      %1648 = vmatprep.mubr.bf16.mxu0 0
      %1649 = vmatmul.mubr.bf16.gmra.mxu0 %v1506
      %v1650 = vpop.f32.mrf.mxu0
      %v1651 = vadd.f32 %v1434, %v1650
      %v1652 = vpop.f32.mrf.mxu0
      %v1653 = vpop.f32.mrf.mxu0
      %v1654 = vadd.f32 %v1437, %v1653
      %v1655 = vpop.f32.mrf.mxu0
      %1656 = vmatprep.mubr.bf16.mxu0 0
      %1657 = vmatmul.mubr.bf16.gmra.mxu0 %v1509
      %v1658 = vpop.f32.mrf.mxu0
      %v1659 = vadd.f32 %v1442, %v1658
      %v1660 = vpop.f32.mrf.mxu0
      %v1661 = vpop.f32.mrf.mxu0
      %v1662 = vadd.f32 %v1445, %v1661
      %v1663 = vpop.f32.mrf.mxu0
      %1664 = vmatprep.mubr.bf16.mxu0 0
      %1665 = vmatmul.mubr.bf16.gmra.mxu0 %v1512
      %v1666 = vpop.f32.mrf.mxu0
      %v1667 = vadd.f32 %v1450, %v1666
      %v1668 = vpop.f32.mrf.mxu0
      %v1669 = vpop.f32.mrf.mxu0
      %v1670 = vadd.f32 %v1453, %v1669
      %v1671 = vpop.f32.mrf.mxu0
      %1672 = vmatprep.mubr.bf16.mxu0 0
      %1673 = vmatmul.mubr.bf16.gmra.mxu0 %v1515
      %v1674 = vpop.f32.mrf.mxu0
      %v1675 = vadd.f32 %v1458, %v1674
      %v1676 = vpop.f32.mrf.mxu0
      %v1677 = vpop.f32.mrf.mxu0
      %v1678 = vadd.f32 %v1461, %v1677
      %v1679 = vpop.f32.mrf.mxu0
      %1680 = vdwg.mxu0
      %s1681 = scalar_lea.vmem [#allocation2], 48
      %v1682 = vld [vmem:[%s1681] sm:$0xff]
      %v1683 = vld [vmem:[%s1681 + $0x8] sm:$0xff]
      %v1684 = vld [vmem:[%s1681 + $0x18] sm:$0xff]
      %v1685 = vld [vmem:[%s1681 + $0x20] sm:$0xff]
      %v1686 = vld [vmem:[%s1681 + $0x30] sm:$0xff]
      %v1687 = vld [vmem:[%s1681 + $0x38] sm:$0xff]
      %v1688 = vld [vmem:[%s1681 + $0x48] sm:$0xff]
      %v1689 = vld [vmem:[%s1681 + $0x50] sm:$0xff]
      %v1690 = vld [vmem:[%s1681 + $0x60] sm:$0xff]
      %v1691 = vld [vmem:[%s1681 + $0x68] sm:$0xff]
      %v1692 = vld [vmem:[%s1681 + $0x78] sm:$0xff]
      %v1693 = vld [vmem:[%s1681 + $0x80] sm:$0xff]
      %v1694 = vld [vmem:[%s1681 + $0x90] sm:$0xff]
      %v1695 = vld [vmem:[%s1681 + $0x98] sm:$0xff]
      %v1696 = vld [vmem:[%s1681 + $0xa8] sm:$0xff]
      %v1697 = vld [vmem:[%s1681 + $0xb0] sm:$0xff]
      %v1698 = vld [vmem:[%s1681 + $0xc0] sm:$0xff]
      %v1699 = vld [vmem:[%s1681 + $0xc8] sm:$0xff]
      %v1700 = vld [vmem:[%s1681 + $0xd8] sm:$0xff]
      %v1701 = vld [vmem:[%s1681 + $0xe0] sm:$0xff]
      %v1702 = vld [vmem:[%s1681 + $0xf0] sm:$0xff]
      %v1703 = vld [vmem:[%s1681 + $0xf8] sm:$0xff]
      %v1704 = vld [vmem:[%s1681 + $0x108] sm:$0xff]
      %v1705 = vld [vmem:[%s1681 + $0x110] sm:$0xff]
      %v1706 = vld [vmem:[%s1681 + $0x120] sm:$0xff]
      %v1707 = vld [vmem:[%s1681 + $0x128] sm:$0xff]
      %v1708 = vld [vmem:[%s1681 + $0x138] sm:$0xff]
      %v1709 = vld [vmem:[%s1681 + $0x140] sm:$0xff]
      %v1710 = vld [vmem:[%s1681 + $0x150] sm:$0xff]
      %v1711 = vld [vmem:[%s1681 + $0x158] sm:$0xff]
      %v1712 = vld [vmem:[%s1681 + $0x168] sm:$0xff]
      %v1713 = vld [vmem:[%s1681 + $0x170] sm:$0xff]
      %v1714 = vld [vmem:[%s1681 + $0x1] sm:$0xff]
      %v1715 = vld [vmem:[%s1681 + $0x9] sm:$0xff]
      %v1716 = vld [vmem:[%s1681 + $0x19] sm:$0xff]
      %v1717 = vld [vmem:[%s1681 + $0x21] sm:$0xff]
      %v1718 = vld [vmem:[%s1681 + $0x31] sm:$0xff]
      %v1719 = vld [vmem:[%s1681 + $0x39] sm:$0xff]
      %v1720 = vld [vmem:[%s1681 + $0x49] sm:$0xff]
      %v1721 = vld [vmem:[%s1681 + $0x51] sm:$0xff]
      %v1722 = vld [vmem:[%s1681 + $0x61] sm:$0xff]
      %v1723 = vld [vmem:[%s1681 + $0x69] sm:$0xff]
      %v1724 = vld [vmem:[%s1681 + $0x79] sm:$0xff]
      %v1725 = vld [vmem:[%s1681 + $0x81] sm:$0xff]
      %v1726 = vld [vmem:[%s1681 + $0x91] sm:$0xff]
      %v1727 = vld [vmem:[%s1681 + $0x99] sm:$0xff]
      %v1728 = vld [vmem:[%s1681 + $0xa9] sm:$0xff]
      %v1729 = vld [vmem:[%s1681 + $0xb1] sm:$0xff]
      %v1730 = vld [vmem:[%s1681 + $0xc1] sm:$0xff]
      %v1731 = vld [vmem:[%s1681 + $0xc9] sm:$0xff]
      %v1732 = vld [vmem:[%s1681 + $0xd9] sm:$0xff]
      %v1733 = vld [vmem:[%s1681 + $0xe1] sm:$0xff]
      %v1734 = vld [vmem:[%s1681 + $0xf1] sm:$0xff]
      %v1735 = vld [vmem:[%s1681 + $0xf9] sm:$0xff]
      %v1736 = vld [vmem:[%s1681 + $0x109] sm:$0xff]
      %v1737 = vld [vmem:[%s1681 + $0x111] sm:$0xff]
      %v1738 = vld [vmem:[%s1681 + $0x121] sm:$0xff]
      %v1739 = vld [vmem:[%s1681 + $0x129] sm:$0xff]
      %v1740 = vld [vmem:[%s1681 + $0x139] sm:$0xff]
      %v1741 = vld [vmem:[%s1681 + $0x141] sm:$0xff]
      %v1742 = vld [vmem:[%s1681 + $0x151] sm:$0xff]
      %v1743 = vld [vmem:[%s1681 + $0x159] sm:$0xff]
      %v1744 = vld [vmem:[%s1681 + $0x169] sm:$0xff]
      %v1745 = vld [vmem:[%s1681 + $0x171] sm:$0xff]
      %v1746 = vld [vmem:[%s1681 + $0x2] sm:$0xff]
      %v1747 = vld [vmem:[%s1681 + $0xa] sm:$0xff]
      %v1748 = vld [vmem:[%s1681 + $0x1a] sm:$0xff]
      %v1749 = vld [vmem:[%s1681 + $0x22] sm:$0xff]
      %v1750 = vld [vmem:[%s1681 + $0x32] sm:$0xff]
      %v1751 = vld [vmem:[%s1681 + $0x3a] sm:$0xff]
      %v1752 = vld [vmem:[%s1681 + $0x4a] sm:$0xff]
      %v1753 = vld [vmem:[%s1681 + $0x52] sm:$0xff]
      %v1754 = vld [vmem:[%s1681 + $0x62] sm:$0xff]
      %v1755 = vld [vmem:[%s1681 + $0x6a] sm:$0xff]
      %v1756 = vld [vmem:[%s1681 + $0x7a] sm:$0xff]
      %v1757 = vld [vmem:[%s1681 + $0x82] sm:$0xff]
      %v1758 = vld [vmem:[%s1681 + $0x92] sm:$0xff]
      %v1759 = vld [vmem:[%s1681 + $0x9a] sm:$0xff]
      %v1760 = vld [vmem:[%s1681 + $0xaa] sm:$0xff]
      %v1761 = vld [vmem:[%s1681 + $0xb2] sm:$0xff]
      %v1762 = vld [vmem:[%s1681 + $0xc2] sm:$0xff]
      %v1763 = vld [vmem:[%s1681 + $0xca] sm:$0xff]
      %v1764 = vld [vmem:[%s1681 + $0xda] sm:$0xff]
      %v1765 = vld [vmem:[%s1681 + $0xe2] sm:$0xff]
      %v1766 = vld [vmem:[%s1681 + $0xf2] sm:$0xff]
      %v1767 = vld [vmem:[%s1681 + $0xfa] sm:$0xff]
      %v1768 = vld [vmem:[%s1681 + $0x10a] sm:$0xff]
      %v1769 = vld [vmem:[%s1681 + $0x112] sm:$0xff]
      %v1770 = vld [vmem:[%s1681 + $0x122] sm:$0xff]
      %v1771 = vld [vmem:[%s1681 + $0x12a] sm:$0xff]
      %v1772 = vld [vmem:[%s1681 + $0x13a] sm:$0xff]
      %v1773 = vld [vmem:[%s1681 + $0x142] sm:$0xff]
      %v1774 = vld [vmem:[%s1681 + $0x152] sm:$0xff]
      %v1775 = vld [vmem:[%s1681 + $0x15a] sm:$0xff]
      %v1776 = vld [vmem:[%s1681 + $0x16a] sm:$0xff]
      %v1777 = vld [vmem:[%s1681 + $0x172] sm:$0xff]
      %1810 = vrot.lane.b32.xlu0 %v1714, 4
      %v1811 = vpop.permute.xlu0 %1810
      %1812 = vrot.lane.b32.xlu0 %v1715, 4
      %v1813 = vpop.permute.xlu0 %1812
      %1814 = vrot.lane.b32.xlu0 %v1716, 4
      %v1815 = vpop.permute.xlu0 %1814
      %1816 = vrot.lane.b32.xlu0 %v1717, 4
      %v1817 = vpop.permute.xlu0 %1816
      %1818 = vrot.lane.b32.xlu0 %v1718, 4
      %v1819 = vpop.permute.xlu0 %1818
      %1820 = vrot.lane.b32.xlu0 %v1719, 4
      %v1821 = vpop.permute.xlu0 %1820
      %1822 = vrot.lane.b32.xlu0 %v1720, 4
      %v1823 = vpop.permute.xlu0 %1822
      %1824 = vrot.lane.b32.xlu0 %v1721, 4
      %v1825 = vpop.permute.xlu0 %1824
      %1826 = vrot.lane.b32.xlu0 %v1722, 4
      %v1827 = vpop.permute.xlu0 %1826
      %1828 = vrot.lane.b32.xlu0 %v1723, 4
      %v1829 = vpop.permute.xlu0 %1828
      %1830 = vrot.lane.b32.xlu0 %v1724, 4
      %v1831 = vpop.permute.xlu0 %1830
      %1832 = vrot.lane.b32.xlu0 %v1725, 4
      %v1833 = vpop.permute.xlu0 %1832
      %1834 = vrot.lane.b32.xlu0 %v1726, 4
      %v1835 = vpop.permute.xlu0 %1834
      %1836 = vrot.lane.b32.xlu0 %v1727, 4
      %v1837 = vpop.permute.xlu0 %1836
      %1838 = vrot.lane.b32.xlu0 %v1728, 4
      %v1839 = vpop.permute.xlu0 %1838
      %1840 = vrot.lane.b32.xlu0 %v1729, 4
      %v1841 = vpop.permute.xlu0 %1840
      %1842 = vrot.lane.b32.xlu0 %v1730, 4
      %v1843 = vpop.permute.xlu0 %1842
      %1844 = vrot.lane.b32.xlu0 %v1731, 4
      %v1845 = vpop.permute.xlu0 %1844
      %1846 = vrot.lane.b32.xlu0 %v1732, 4
      %v1847 = vpop.permute.xlu0 %1846
      %1848 = vrot.lane.b32.xlu0 %v1733, 4
      %v1849 = vpop.permute.xlu0 %1848
      %1850 = vrot.lane.b32.xlu0 %v1734, 4
      %v1851 = vpop.permute.xlu0 %1850
      %1852 = vrot.lane.b32.xlu0 %v1735, 4
      %v1853 = vpop.permute.xlu0 %1852
      %1854 = vrot.lane.b32.xlu0 %v1736, 4
      %v1855 = vpop.permute.xlu0 %1854
      %1856 = vrot.lane.b32.xlu0 %v1737, 4
      %v1857 = vpop.permute.xlu0 %1856
      %1858 = vrot.lane.b32.xlu0 %v1738, 4
      %v1859 = vpop.permute.xlu0 %1858
      %1860 = vrot.lane.b32.xlu0 %v1739, 4
      %v1861 = vpop.permute.xlu0 %1860
      %1862 = vrot.lane.b32.xlu0 %v1740, 4
      %v1863 = vpop.permute.xlu0 %1862
      %1864 = vrot.lane.b32.xlu0 %v1741, 4
      %v1865 = vpop.permute.xlu0 %1864
      %1866 = vrot.lane.b32.xlu0 %v1742, 4
      %v1867 = vpop.permute.xlu0 %1866
      %1868 = vrot.lane.b32.xlu0 %v1743, 4
      %v1869 = vpop.permute.xlu0 %1868
      %1870 = vrot.lane.b32.xlu0 %v1744, 4
      %v1871 = vpop.permute.xlu0 %1870
      %1872 = vrot.lane.b32.xlu0 %v1745, 4
      %v1873 = vpop.permute.xlu0 %1872
      %1938 = vrot.lane.b32.xlu0 %v1746, 8
      %v1939 = vpop.permute.xlu0 %1938
      %1940 = vrot.lane.b32.xlu0 %v1747, 8
      %v1941 = vpop.permute.xlu0 %1940
      %1942 = vrot.lane.b32.xlu0 %v1748, 8
      %v1943 = vpop.permute.xlu0 %1942
      %1944 = vrot.lane.b32.xlu0 %v1749, 8
      %v1945 = vpop.permute.xlu0 %1944
      %1946 = vrot.lane.b32.xlu0 %v1750, 8
      %v1947 = vpop.permute.xlu0 %1946
      %1948 = vrot.lane.b32.xlu0 %v1751, 8
      %v1949 = vpop.permute.xlu0 %1948
      %1950 = vrot.lane.b32.xlu0 %v1752, 8
      %v1951 = vpop.permute.xlu0 %1950
      %1952 = vrot.lane.b32.xlu0 %v1753, 8
      %v1953 = vpop.permute.xlu0 %1952
      %1954 = vrot.lane.b32.xlu0 %v1754, 8
      %v1955 = vpop.permute.xlu0 %1954
      %1956 = vrot.lane.b32.xlu0 %v1755, 8
      %v1957 = vpop.permute.xlu0 %1956
      %1958 = vrot.lane.b32.xlu0 %v1756, 8
      %v1959 = vpop.permute.xlu0 %1958
      %1960 = vrot.lane.b32.xlu0 %v1757, 8
      %v1961 = vpop.permute.xlu0 %1960
      %1962 = vrot.lane.b32.xlu0 %v1758, 8
      %v1963 = vpop.permute.xlu0 %1962
      %1964 = vrot.lane.b32.xlu0 %v1759, 8
      %v1965 = vpop.permute.xlu0 %1964
      %1966 = vrot.lane.b32.xlu0 %v1760, 8
      %v1967 = vpop.permute.xlu0 %1966
      %1968 = vrot.lane.b32.xlu0 %v1761, 8
      %v1969 = vpop.permute.xlu0 %1968
      %1970 = vrot.lane.b32.xlu0 %v1762, 8
      %v1971 = vpop.permute.xlu0 %1970
      %1972 = vrot.lane.b32.xlu0 %v1763, 8
      %v1973 = vpop.permute.xlu0 %1972
      %1974 = vrot.lane.b32.xlu0 %v1764, 8
      %v1975 = vpop.permute.xlu0 %1974
      %1976 = vrot.lane.b32.xlu0 %v1765, 8
      %v1977 = vpop.permute.xlu0 %1976
      %1978 = vrot.lane.b32.xlu0 %v1766, 8
      %v1979 = vpop.permute.xlu0 %1978
      %1980 = vrot.lane.b32.xlu0 %v1767, 8
      %v1981 = vpop.permute.xlu0 %1980
      %1982 = vrot.lane.b32.xlu0 %v1768, 8
      %v1983 = vpop.permute.xlu0 %1982
      %1984 = vrot.lane.b32.xlu0 %v1769, 8
      %v1985 = vpop.permute.xlu0 %1984
      %1986 = vrot.lane.b32.xlu0 %v1770, 8
      %v1987 = vpop.permute.xlu0 %1986
      %1988 = vrot.lane.b32.xlu0 %v1771, 8
      %v1989 = vpop.permute.xlu0 %1988
      %1990 = vrot.lane.b32.xlu0 %v1772, 8
      %v1991 = vpop.permute.xlu0 %1990
      %1992 = vrot.lane.b32.xlu0 %v1773, 8
      %v1993 = vpop.permute.xlu0 %1992
      %1994 = vrot.lane.b32.xlu0 %v1774, 8
      %v1995 = vpop.permute.xlu0 %1994
      %1996 = vrot.lane.b32.xlu0 %v1775, 8
      %v1997 = vpop.permute.xlu0 %1996
      %1998 = vrot.lane.b32.xlu0 %v1776, 8
      %v1999 = vpop.permute.xlu0 %1998
      %2000 = vrot.lane.b32.xlu0 %v1777, 8
      %v2001 = vpop.permute.xlu0 %2000
      %v2034 = vsel %vm259, %v1682, %v1811
      %v2035 = vsel %vm259, %v1683, %v1813
      %v2036 = vsel %vm259, %v1684, %v1815
      %v2037 = vsel %vm259, %v1685, %v1817
      %v2038 = vsel %vm259, %v1686, %v1819
      %v2039 = vsel %vm259, %v1687, %v1821
      %v2040 = vsel %vm259, %v1688, %v1823
      %v2041 = vsel %vm259, %v1689, %v1825
      %v2042 = vsel %vm259, %v1690, %v1827
      %v2043 = vsel %vm259, %v1691, %v1829
      %v2044 = vsel %vm259, %v1692, %v1831
      %v2045 = vsel %vm259, %v1693, %v1833
      %v2046 = vsel %vm259, %v1694, %v1835
      %v2047 = vsel %vm259, %v1695, %v1837
      %v2048 = vsel %vm259, %v1696, %v1839
      %v2049 = vsel %vm259, %v1697, %v1841
      %v2050 = vsel %vm259, %v1698, %v1843
      %v2051 = vsel %vm259, %v1699, %v1845
      %v2052 = vsel %vm259, %v1700, %v1847
      %v2053 = vsel %vm259, %v1701, %v1849
      %v2054 = vsel %vm259, %v1702, %v1851
      %v2055 = vsel %vm259, %v1703, %v1853
      %v2056 = vsel %vm259, %v1704, %v1855
      %v2057 = vsel %vm259, %v1705, %v1857
      %v2058 = vsel %vm259, %v1706, %v1859
      %v2059 = vsel %vm259, %v1707, %v1861
      %v2060 = vsel %vm259, %v1708, %v1863
      %v2061 = vsel %vm259, %v1709, %v1865
      %v2062 = vsel %vm259, %v1710, %v1867
      %v2063 = vsel %vm259, %v1711, %v1869
      %v2064 = vsel %vm259, %v1712, %v1871
      %v2065 = vsel %vm259, %v1713, %v1873
      %v2066 = vsel %vm759, %v2034, %v1939
      %v2067 = vsel %vm759, %v2035, %v1941
      %v2068 = vsel %vm759, %v2036, %v1943
      %v2069 = vsel %vm759, %v2037, %v1945
      %v2070 = vsel %vm759, %v2038, %v1947
      %v2071 = vsel %vm759, %v2039, %v1949
      %v2072 = vsel %vm759, %v2040, %v1951
      %v2073 = vsel %vm759, %v2041, %v1953
      %v2074 = vsel %vm759, %v2042, %v1955
      %v2075 = vsel %vm759, %v2043, %v1957
      %v2076 = vsel %vm759, %v2044, %v1959
      %v2077 = vsel %vm759, %v2045, %v1961
      %v2078 = vsel %vm759, %v2046, %v1963
      %v2079 = vsel %vm759, %v2047, %v1965
      %v2080 = vsel %vm759, %v2048, %v1967
      %v2081 = vsel %vm759, %v2049, %v1969
      %v2082 = vsel %vm759, %v2050, %v1971
      %v2083 = vsel %vm759, %v2051, %v1973
      %v2084 = vsel %vm759, %v2052, %v1975
      %v2085 = vsel %vm759, %v2053, %v1977
      %v2086 = vsel %vm759, %v2054, %v1979
      %v2087 = vsel %vm759, %v2055, %v1981
      %v2088 = vsel %vm759, %v2056, %v1983
      %v2089 = vsel %vm759, %v2057, %v1985
      %v2090 = vsel %vm759, %v2058, %v1987
      %v2091 = vsel %vm759, %v2059, %v1989
      %v2092 = vsel %vm759, %v2060, %v1991
      %v2093 = vsel %vm759, %v2061, %v1993
      %v2094 = vsel %vm759, %v2062, %v1995
      %v2095 = vsel %vm759, %v2063, %v1997
      %v2096 = vsel %vm759, %v2064, %v1999
      %v2097 = vsel %vm759, %v2065, %v2001
      %v2098 = vpack.c.bf16 %v2067, %v2066
      %v2099 = vpack.c.bf16 %v2069, %v2068
      %v2100 = vpack.c.bf16 %v2071, %v2070
      %v2101 = vpack.c.bf16 %v2073, %v2072
      %v2102 = vpack.c.bf16 %v2075, %v2074
      %v2103 = vpack.c.bf16 %v2077, %v2076
      %v2104 = vpack.c.bf16 %v2079, %v2078
      %v2105 = vpack.c.bf16 %v2081, %v2080
      %v2106 = vpack.c.bf16 %v2083, %v2082
      %v2107 = vpack.c.bf16 %v2085, %v2084
      %v2108 = vpack.c.bf16 %v2087, %v2086
      %v2109 = vpack.c.bf16 %v2089, %v2088
      %v2110 = vpack.c.bf16 %v2091, %v2090
      %v2111 = vpack.c.bf16 %v2093, %v2092
      %v2112 = vpack.c.bf16 %v2095, %v2094
      %v2113 = vpack.c.bf16 %v2097, %v2096
      %s2114 = scalar_lea.vmem %s1, 16
      %v2115 = vld [vmem:[%s2114] sm:$0xf]
      %v2116 = vld [vmem:[%s2114 + $0x4] sm:$0x3]
      %v2119 = vunpack.c.l.b16 %v2115
      %v2120 = vunpack.c.l.b16 %v2116
      %v2121 = vpack.c.b16 %v2120, %v2119
      %v2123 = vsel %vm1250, %v2098, 0
      %v2126 = vsel %vm1250, %v2099, 0
      %v2129 = vsel %vm1250, %v2100, 0
      %v2132 = vsel %vm1250, %v2101, 0
      %v2135 = vsel %vm1250, %v2102, 0
      %v2138 = vsel %vm1250, %v2103, 0
      %v2141 = vsel %vm1250, %v2104, 0
      %v2144 = vsel %vm1250, %v2105, 0
      %v2147 = vsel %vm1250, %v2106, 0
      %v2150 = vsel %vm1250, %v2107, 0
      %v2153 = vsel %vm1250, %v2108, 0
      %v2156 = vsel %vm1250, %v2109, 0
      %v2159 = vsel %vm1250, %v2110, 0
      %v2162 = vsel %vm1250, %v2111, 0
      %v2165 = vsel %vm1250, %v2112, 0
      %v2168 = vsel %vm1250, %v2113, 0
      %v2171 = vsel %vm1299, %v2121, 0
      %2173 = vmatprep.subr.bf16.mxu0 0
      %2174 = vmatpush1.bf16.msra.mxu0 0
      %2175 = vmatprep.subr.bf16.mxu0 0
      %2176 = vmatpush1.bf16.msra.mxu0 0
      %2177 = vmatprep.subr.bf16.mxu0 0
      %2178 = vmatpush1.bf16.msra.mxu0 0
      %2179 = vmatprep.subr.bf16.mxu0 0
      %2180 = vmatpush1.bf16.msra.mxu0 0
      %2181 = vmatprep.subr.bf16.mxu0 0
      %2182 = vmatpush1.bf16.msra.mxu0 0
      %2183 = vmatprep.subr.bf16.mxu0 0
      %2184 = vmatpush1.bf16.msra.mxu0 0
      %2185 = vmatprep.subr.bf16.mxu0 0
      %2186 = vmatpush1.bf16.msra.mxu0 0
      %2187 = vmatprep.subr.bf16.mxu0 0
      %2188 = vmatpush1.bf16.msra.mxu0 %v2171
      %2189 = vmatprep.subr.bf16.mxu0 0
      %2190 = vmatpush2.bf16.msra.mxu0 0
      %2191 = vmatprep.subr.bf16.mxu0 0
      %2192 = vmatpush2.bf16.msra.mxu0 0
      %2193 = vmatprep.subr.bf16.mxu0 0
      %2194 = vmatpush2.bf16.msra.mxu0 0
      %2195 = vmatprep.subr.bf16.mxu0 0
      %2196 = vmatpush2.bf16.msra.mxu0 0
      %2197 = vmatprep.subr.bf16.mxu0 0
      %2198 = vmatpush2.bf16.msra.mxu0 0
      %2199 = vmatprep.subr.bf16.mxu0 0
      %2200 = vmatpush2.bf16.msra.mxu0 0
      %2201 = vmatprep.subr.bf16.mxu0 0
      %2202 = vmatpush2.bf16.msra.mxu0 0
      %2203 = vmatprep.subr.bf16.mxu0 0
      %2204 = vmatpush2.bf16.msra.mxu0 0
      %2205 = vmatprep.mubr.bf16.mxu0 0
      %2206 = vmatmul.mubr.bf16.gmra.mxu0 %v2123
      %v2207 = vpop.f32.mrf.mxu0
      %v2208 = vadd.f32 0.0, %v2207
      %v2209 = vpop.f32.mrf.mxu0
      %v2210 = vpop.f32.mrf.mxu0
      %v2211 = vadd.f32 0.0, %v2210
      %v2212 = vpop.f32.mrf.mxu0
      %2213 = vmatprep.mubr.bf16.mxu0 0
      %2214 = vmatmul.mubr.bf16.gmra.mxu0 %v2126
      %v2215 = vpop.f32.mrf.mxu0
      %v2216 = vadd.f32 0.0, %v2215
      %v2217 = vpop.f32.mrf.mxu0
      %v2218 = vpop.f32.mrf.mxu0
      %v2219 = vadd.f32 0.0, %v2218
      %v2220 = vpop.f32.mrf.mxu0
      %2221 = vmatprep.mubr.bf16.mxu0 0
      %2222 = vmatmul.mubr.bf16.gmra.mxu0 %v2129
      %v2223 = vpop.f32.mrf.mxu0
      %v2224 = vadd.f32 0.0, %v2223
      %v2225 = vpop.f32.mrf.mxu0
      %v2226 = vpop.f32.mrf.mxu0
      %v2227 = vadd.f32 0.0, %v2226
      %v2228 = vpop.f32.mrf.mxu0
      %2229 = vmatprep.mubr.bf16.mxu0 0
      %2230 = vmatmul.mubr.bf16.gmra.mxu0 %v2132
      %v2231 = vpop.f32.mrf.mxu0
      %v2232 = vadd.f32 0.0, %v2231
      %v2233 = vpop.f32.mrf.mxu0
      %v2234 = vpop.f32.mrf.mxu0
      %v2235 = vadd.f32 0.0, %v2234
      %v2236 = vpop.f32.mrf.mxu0
      %2237 = vmatprep.mubr.bf16.mxu0 0
      %2238 = vmatmul.mubr.bf16.gmra.mxu0 %v2135
      %v2239 = vpop.f32.mrf.mxu0
      %v2240 = vadd.f32 0.0, %v2239
      %v2241 = vpop.f32.mrf.mxu0
      %v2242 = vpop.f32.mrf.mxu0
      %v2243 = vadd.f32 0.0, %v2242
      %v2244 = vpop.f32.mrf.mxu0
      %2245 = vmatprep.mubr.bf16.mxu0 0
      %2246 = vmatmul.mubr.bf16.gmra.mxu0 %v2138
      %v2247 = vpop.f32.mrf.mxu0
      %v2248 = vadd.f32 0.0, %v2247
      %v2249 = vpop.f32.mrf.mxu0
      %v2250 = vpop.f32.mrf.mxu0
      %v2251 = vadd.f32 0.0, %v2250
      %v2252 = vpop.f32.mrf.mxu0
      %2253 = vmatprep.mubr.bf16.mxu0 0
      %2254 = vmatmul.mubr.bf16.gmra.mxu0 %v2141
      %v2255 = vpop.f32.mrf.mxu0
      %v2256 = vadd.f32 0.0, %v2255
      %v2257 = vpop.f32.mrf.mxu0
      %v2258 = vpop.f32.mrf.mxu0
      %v2259 = vadd.f32 0.0, %v2258
      %v2260 = vpop.f32.mrf.mxu0
      %2261 = vmatprep.mubr.bf16.mxu0 0
      %2262 = vmatmul.mubr.bf16.gmra.mxu0 %v2144
      %v2263 = vpop.f32.mrf.mxu0
      %v2264 = vadd.f32 0.0, %v2263
      %v2265 = vpop.f32.mrf.mxu0
      %v2266 = vpop.f32.mrf.mxu0
      %v2267 = vadd.f32 0.0, %v2266
      %v2268 = vpop.f32.mrf.mxu0
      %2269 = vmatprep.mubr.bf16.mxu0 0
      %2270 = vmatmul.mubr.bf16.gmra.mxu0 %v2147
      %v2271 = vpop.f32.mrf.mxu0
      %v2272 = vadd.f32 0.0, %v2271
      %v2273 = vpop.f32.mrf.mxu0
      %v2274 = vpop.f32.mrf.mxu0
      %v2275 = vadd.f32 0.0, %v2274
      %v2276 = vpop.f32.mrf.mxu0
      %2277 = vmatprep.mubr.bf16.mxu0 0
      %2278 = vmatmul.mubr.bf16.gmra.mxu0 %v2150
      %v2279 = vpop.f32.mrf.mxu0
      %v2280 = vadd.f32 0.0, %v2279
      %v2281 = vpop.f32.mrf.mxu0
      %v2282 = vpop.f32.mrf.mxu0
      %v2283 = vadd.f32 0.0, %v2282
      %v2284 = vpop.f32.mrf.mxu0
      %2285 = vmatprep.mubr.bf16.mxu0 0
      %2286 = vmatmul.mubr.bf16.gmra.mxu0 %v2153
      %v2287 = vpop.f32.mrf.mxu0
      %v2288 = vadd.f32 0.0, %v2287
      %v2289 = vpop.f32.mrf.mxu0
      %v2290 = vpop.f32.mrf.mxu0
      %v2291 = vadd.f32 0.0, %v2290
      %v2292 = vpop.f32.mrf.mxu0
      %2293 = vmatprep.mubr.bf16.mxu0 0
      %2294 = vmatmul.mubr.bf16.gmra.mxu0 %v2156
      %v2295 = vpop.f32.mrf.mxu0
      %v2296 = vadd.f32 0.0, %v2295
      %v2297 = vpop.f32.mrf.mxu0
      %v2298 = vpop.f32.mrf.mxu0
      %v2299 = vadd.f32 0.0, %v2298
      %v2300 = vpop.f32.mrf.mxu0
      %2301 = vmatprep.mubr.bf16.mxu0 0
      %2302 = vmatmul.mubr.bf16.gmra.mxu0 %v2159
      %v2303 = vpop.f32.mrf.mxu0
      %v2304 = vadd.f32 0.0, %v2303
      %v2305 = vpop.f32.mrf.mxu0
      %v2306 = vpop.f32.mrf.mxu0
      %v2307 = vadd.f32 0.0, %v2306
      %v2308 = vpop.f32.mrf.mxu0
      %2309 = vmatprep.mubr.bf16.mxu0 0
      %2310 = vmatmul.mubr.bf16.gmra.mxu0 %v2162
      %v2311 = vpop.f32.mrf.mxu0
      %v2312 = vadd.f32 0.0, %v2311
      %v2313 = vpop.f32.mrf.mxu0
      %v2314 = vpop.f32.mrf.mxu0
      %v2315 = vadd.f32 0.0, %v2314
      %v2316 = vpop.f32.mrf.mxu0
      %2317 = vmatprep.mubr.bf16.mxu0 0
      %2318 = vmatmul.mubr.bf16.gmra.mxu0 %v2165
      %v2319 = vpop.f32.mrf.mxu0
      %v2320 = vadd.f32 0.0, %v2319
      %v2321 = vpop.f32.mrf.mxu0
      %v2322 = vpop.f32.mrf.mxu0
      %v2323 = vadd.f32 0.0, %v2322
      %v2324 = vpop.f32.mrf.mxu0
      %2325 = vmatprep.mubr.bf16.mxu0 0
      %2326 = vmatmul.mubr.bf16.gmra.mxu0 %v2168
      %v2327 = vpop.f32.mrf.mxu0
      %v2328 = vadd.f32 0.0, %v2327
      %v2329 = vpop.f32.mrf.mxu0
      %v2330 = vpop.f32.mrf.mxu0
      %v2331 = vadd.f32 0.0, %v2330
      %v2332 = vpop.f32.mrf.mxu0
      %2333 = vdwg.mxu0
      %v2334 = vadd.f32 %v1555, %v2208
      %v2335 = vadd.f32 %v1558, %v2211
      %v2336 = vadd.f32 %v1563, %v2216
      %v2337 = vadd.f32 %v1566, %v2219
      %v2338 = vadd.f32 %v1571, %v2224
      %v2339 = vadd.f32 %v1574, %v2227
      %v2340 = vadd.f32 %v1579, %v2232
      %v2341 = vadd.f32 %v1582, %v2235
      %v2342 = vadd.f32 %v1587, %v2240
      %v2343 = vadd.f32 %v1590, %v2243
      %v2344 = vadd.f32 %v1595, %v2248
      %v2345 = vadd.f32 %v1598, %v2251
      %v2346 = vadd.f32 %v1603, %v2256
      %v2347 = vadd.f32 %v1606, %v2259
      %v2348 = vadd.f32 %v1611, %v2264
      %v2349 = vadd.f32 %v1614, %v2267
      %v2350 = vadd.f32 %v1619, %v2272
      %v2351 = vadd.f32 %v1622, %v2275
      %v2352 = vadd.f32 %v1627, %v2280
      %v2353 = vadd.f32 %v1630, %v2283
      %v2354 = vadd.f32 %v1635, %v2288
      %v2355 = vadd.f32 %v1638, %v2291
      %v2356 = vadd.f32 %v1643, %v2296
      %v2357 = vadd.f32 %v1646, %v2299
      %v2358 = vadd.f32 %v1651, %v2304
      %v2359 = vadd.f32 %v1654, %v2307
      %v2360 = vadd.f32 %v1659, %v2312
      %v2361 = vadd.f32 %v1662, %v2315
      %v2362 = vadd.f32 %v1667, %v2320
      %v2363 = vadd.f32 %v1670, %v2323
      %v2364 = vadd.f32 %v1675, %v2328
      %v2365 = vadd.f32 %v1678, %v2331
      %v2366 = vld [vmem:[%s2] sm:$0x1]
      %v2368 = vlaneseq
      %v2369 = vshrl.u32 %v2368, 7
      %v2370 = vsub.s32 0, %v2369
      %v2371 = vrot.slane %v2366, %v2370
      %v2373 = vadd.f32 %v2334, %v2371
      %v2374 = vadd.f32 %v2335, %v2371
      %v2375 = vadd.f32 %v2336, %v2371
      %v2376 = vadd.f32 %v2337, %v2371
      %v2377 = vadd.f32 %v2338, %v2371
      %v2378 = vadd.f32 %v2339, %v2371
      %v2379 = vadd.f32 %v2340, %v2371
      %v2380 = vadd.f32 %v2341, %v2371
      %v2381 = vadd.f32 %v2342, %v2371
      %v2382 = vadd.f32 %v2343, %v2371
      %v2383 = vadd.f32 %v2344, %v2371
      %v2384 = vadd.f32 %v2345, %v2371
      %v2385 = vadd.f32 %v2346, %v2371
      %v2386 = vadd.f32 %v2347, %v2371
      %v2387 = vadd.f32 %v2348, %v2371
      %v2388 = vadd.f32 %v2349, %v2371
      %v2389 = vadd.f32 %v2350, %v2371
      %v2390 = vadd.f32 %v2351, %v2371
      %v2391 = vadd.f32 %v2352, %v2371
      %v2392 = vadd.f32 %v2353, %v2371
      %v2393 = vadd.f32 %v2354, %v2371
      %v2394 = vadd.f32 %v2355, %v2371
      %v2395 = vadd.f32 %v2356, %v2371
      %v2396 = vadd.f32 %v2357, %v2371
      %v2397 = vadd.f32 %v2358, %v2371
      %v2398 = vadd.f32 %v2359, %v2371
      %v2399 = vadd.f32 %v2360, %v2371
      %v2400 = vadd.f32 %v2361, %v2371
      %v2401 = vadd.f32 %v2362, %v2371
      %v2402 = vadd.f32 %v2363, %v2371
      %v2403 = vadd.f32 %v2364, %v2371
      %v2404 = vadd.f32 %v2365, %v2371
      %v2405 = vmax.f32 %v2373, 0.0
      %v2406 = vmax.f32 %v2374, 0.0
      %v2407 = vmax.f32 %v2375, 0.0
      %v2408 = vmax.f32 %v2376, 0.0
      %v2409 = vmax.f32 %v2377, 0.0
      %v2410 = vmax.f32 %v2378, 0.0
      %v2411 = vmax.f32 %v2379, 0.0
      %v2412 = vmax.f32 %v2380, 0.0
      %v2413 = vmax.f32 %v2381, 0.0
      %v2414 = vmax.f32 %v2382, 0.0
      %v2415 = vmax.f32 %v2383, 0.0
      %v2416 = vmax.f32 %v2384, 0.0
      %v2417 = vmax.f32 %v2385, 0.0
      %v2418 = vmax.f32 %v2386, 0.0
      %v2419 = vmax.f32 %v2387, 0.0
      %v2420 = vmax.f32 %v2388, 0.0
      %v2421 = vmax.f32 %v2389, 0.0
      %v2422 = vmax.f32 %v2390, 0.0
      %v2423 = vmax.f32 %v2391, 0.0
      %v2424 = vmax.f32 %v2392, 0.0
      %v2425 = vmax.f32 %v2393, 0.0
      %v2426 = vmax.f32 %v2394, 0.0
      %v2427 = vmax.f32 %v2395, 0.0
      %v2428 = vmax.f32 %v2396, 0.0
      %v2429 = vmax.f32 %v2397, 0.0
      %v2430 = vmax.f32 %v2398, 0.0
      %v2431 = vmax.f32 %v2399, 0.0
      %v2432 = vmax.f32 %v2400, 0.0
      %v2433 = vmax.f32 %v2401, 0.0
      %v2434 = vmax.f32 %v2402, 0.0
      %v2435 = vmax.f32 %v2403, 0.0
      %v2436 = vmax.f32 %v2404, 0.0
      %s2437 = scalar_lea.vmem [#allocation3], 24
      %2438 = vst.msk [vmem:[%s2437 + $0x1] sm:$0xff] %vm259, %v2405
      %2439 = vst.msk [vmem:[%s2437 + $0x9] sm:$0xff] %vm259, %v2406
      %2440 = vst.msk [vmem:[%s2437 + $0x19] sm:$0xff] %vm259, %v2407
      %2441 = vst.msk [vmem:[%s2437 + $0x21] sm:$0xff] %vm259, %v2408
      %2442 = vst.msk [vmem:[%s2437 + $0x31] sm:$0xff] %vm259, %v2409
      %2443 = vst.msk [vmem:[%s2437 + $0x39] sm:$0xff] %vm259, %v2410
      %2444 = vst.msk [vmem:[%s2437 + $0x49] sm:$0xff] %vm259, %v2411
      %2445 = vst.msk [vmem:[%s2437 + $0x51] sm:$0xff] %vm259, %v2412
      %2446 = vst.msk [vmem:[%s2437 + $0x61] sm:$0xff] %vm259, %v2413
      %2447 = vst.msk [vmem:[%s2437 + $0x69] sm:$0xff] %vm259, %v2414
      %2448 = vst.msk [vmem:[%s2437 + $0x79] sm:$0xff] %vm259, %v2415
      %2449 = vst.msk [vmem:[%s2437 + $0x81] sm:$0xff] %vm259, %v2416
      %2450 = vst.msk [vmem:[%s2437 + $0x91] sm:$0xff] %vm259, %v2417
      %2451 = vst.msk [vmem:[%s2437 + $0x99] sm:$0xff] %vm259, %v2418
      %2452 = vst.msk [vmem:[%s2437 + $0xa9] sm:$0xff] %vm259, %v2419
      %2453 = vst.msk [vmem:[%s2437 + $0xb1] sm:$0xff] %vm259, %v2420
      %2454 = vst.msk [vmem:[%s2437 + $0xc1] sm:$0xff] %vm259, %v2421
      %2455 = vst.msk [vmem:[%s2437 + $0xc9] sm:$0xff] %vm259, %v2422
      %2456 = vst.msk [vmem:[%s2437 + $0xd9] sm:$0xff] %vm259, %v2423
      %2457 = vst.msk [vmem:[%s2437 + $0xe1] sm:$0xff] %vm259, %v2424
      %2458 = vst.msk [vmem:[%s2437 + $0xf1] sm:$0xff] %vm259, %v2425
      %2459 = vst.msk [vmem:[%s2437 + $0xf9] sm:$0xff] %vm259, %v2426
      %2460 = vst.msk [vmem:[%s2437 + $0x109] sm:$0xff] %vm259, %v2427
      %2461 = vst.msk [vmem:[%s2437 + $0x111] sm:$0xff] %vm259, %v2428
      %2462 = vst.msk [vmem:[%s2437 + $0x121] sm:$0xff] %vm259, %v2429
      %2463 = vst.msk [vmem:[%s2437 + $0x129] sm:$0xff] %vm259, %v2430
      %2464 = vst.msk [vmem:[%s2437 + $0x139] sm:$0xff] %vm259, %v2431
      %2465 = vst.msk [vmem:[%s2437 + $0x141] sm:$0xff] %vm259, %v2432
      %2466 = vst.msk [vmem:[%s2437 + $0x151] sm:$0xff] %vm259, %v2433
      %2467 = vst.msk [vmem:[%s2437 + $0x159] sm:$0xff] %vm259, %v2434
      %2468 = vst.msk [vmem:[%s2437 + $0x169] sm:$0xff] %vm259, %v2435
      %2469 = vst.msk [vmem:[%s2437 + $0x171] sm:$0xff] %vm259, %v2436
      %s2470 = scalar_lea.vmem [#allocation3], 384
      %v2471 = vld [vmem:[%s2470 + $0x1] sm:$0xff]
      %v2472 = vld [vmem:[%s2470 + $0x9] sm:$0xff]
      %2473 = vst.msk [vmem:[#allocation3 + $0x1] sm:$0xff] %vm259, %v2471
      %2474 = vst.msk [vmem:[#allocation3 + $0x9] sm:$0xff] %vm259, %v2472
      %v2475 = vld [vmem:[%s2437 + $0x1] sm:$0xff]
      %v2476 = vld [vmem:[%s2437 + $0x9] sm:$0xff]
      %s2477 = scalar_lea.vmem [#allocation3], 408
      %2478 = vst.msk [vmem:[%s2477 + $0x1] sm:$0xff] %vm259, %v2475
      %2479 = vst.msk [vmem:[%s2477 + $0x9] sm:$0xff] %vm259, %v2476
      %v2480 = vld [vmem:[#allocation3 + $0x10] sm:$0x1]
      %v2481 = vld [vmem:[#allocation3 + $0x28] sm:$0x1]
      %v2482 = vld [vmem:[#allocation3 + $0x40] sm:$0x1]
      %v2483 = vld [vmem:[#allocation3 + $0x58] sm:$0x1]
      %v2484 = vld [vmem:[#allocation3 + $0x70] sm:$0x1]
      %v2485 = vld [vmem:[#allocation3 + $0x88] sm:$0x1]
      %v2486 = vld [vmem:[#allocation3 + $0xa0] sm:$0x1]
      %v2487 = vld [vmem:[#allocation3 + $0xb8] sm:$0x1]
      %v2488 = vld [vmem:[#allocation3 + $0xd0] sm:$0x1]
      %v2489 = vld [vmem:[#allocation3 + $0xe8] sm:$0x1]
      %v2490 = vld [vmem:[#allocation3 + $0x100] sm:$0x1]
      %v2491 = vld [vmem:[#allocation3 + $0x118] sm:$0x1]
      %v2492 = vld [vmem:[#allocation3 + $0x130] sm:$0x1]
      %v2493 = vld [vmem:[#allocation3 + $0x148] sm:$0x1]
      %v2494 = vld [vmem:[#allocation3 + $0x160] sm:$0x1]
      %v2495 = vld [vmem:[#allocation3 + $0x178] sm:$0x1]
      %v2496 = vld [vmem:[#allocation3 + $0x190] sm:$0x1]
      %v2497 = vld [vmem:[#allocation3 + $0x1a8] sm:$0x1]
      %2498 = vst.msk [vmem:[#allocation3] sm:$0x1] %vm320, %v2480
      %2499 = vst.msk [vmem:[#allocation3 + $0x18] sm:$0x1] %vm320, %v2481
      %2500 = vst.msk [vmem:[#allocation3 + $0x30] sm:$0x1] %vm320, %v2482
      %2501 = vst.msk [vmem:[#allocation3 + $0x48] sm:$0x1] %vm320, %v2483
      %2502 = vst.msk [vmem:[#allocation3 + $0x60] sm:$0x1] %vm320, %v2484
      %2503 = vst.msk [vmem:[#allocation3 + $0x78] sm:$0x1] %vm320, %v2485
      %2504 = vst.msk [vmem:[#allocation3 + $0x90] sm:$0x1] %vm320, %v2486
      %2505 = vst.msk [vmem:[#allocation3 + $0xa8] sm:$0x1] %vm320, %v2487
      %2506 = vst.msk [vmem:[#allocation3 + $0xc0] sm:$0x1] %vm320, %v2488
      %2507 = vst.msk [vmem:[#allocation3 + $0xd8] sm:$0x1] %vm320, %v2489
      %2508 = vst.msk [vmem:[#allocation3 + $0xf0] sm:$0x1] %vm320, %v2490
      %2509 = vst.msk [vmem:[#allocation3 + $0x108] sm:$0x1] %vm320, %v2491
      %2510 = vst.msk [vmem:[#allocation3 + $0x120] sm:$0x1] %vm320, %v2492
      %2511 = vst.msk [vmem:[#allocation3 + $0x138] sm:$0x1] %vm320, %v2493
      %2512 = vst.msk [vmem:[#allocation3 + $0x150] sm:$0x1] %vm320, %v2494
      %2513 = vst.msk [vmem:[#allocation3 + $0x168] sm:$0x1] %vm320, %v2495
      %2514 = vst.msk [vmem:[#allocation3 + $0x180] sm:$0x1] %vm320, %v2496
      %2515 = vst.msk [vmem:[#allocation3 + $0x198] sm:$0x1] %vm320, %v2497
      %v2516 = vld [vmem:[#allocation3 + $0x1] sm:$0x1]
      %v2517 = vld [vmem:[#allocation3 + $0x19] sm:$0x1]
      %v2518 = vld [vmem:[#allocation3 + $0x31] sm:$0x1]
      %v2519 = vld [vmem:[#allocation3 + $0x49] sm:$0x1]
      %v2520 = vld [vmem:[#allocation3 + $0x61] sm:$0x1]
      %v2521 = vld [vmem:[#allocation3 + $0x79] sm:$0x1]
      %v2522 = vld [vmem:[#allocation3 + $0x91] sm:$0x1]
      %v2523 = vld [vmem:[#allocation3 + $0xa9] sm:$0x1]
      %v2524 = vld [vmem:[#allocation3 + $0xc1] sm:$0x1]
      %v2525 = vld [vmem:[#allocation3 + $0xd9] sm:$0x1]
      %v2526 = vld [vmem:[#allocation3 + $0xf1] sm:$0x1]
      %v2527 = vld [vmem:[#allocation3 + $0x109] sm:$0x1]
      %v2528 = vld [vmem:[#allocation3 + $0x121] sm:$0x1]
      %v2529 = vld [vmem:[#allocation3 + $0x139] sm:$0x1]
      %v2530 = vld [vmem:[#allocation3 + $0x151] sm:$0x1]
      %v2531 = vld [vmem:[#allocation3 + $0x169] sm:$0x1]
      %v2532 = vld [vmem:[#allocation3 + $0x181] sm:$0x1]
      %v2533 = vld [vmem:[#allocation3 + $0x199] sm:$0x1]
      %2534 = vst.msk [vmem:[#allocation3 + $0x11] sm:$0x1] %vm320, %v2516
      %2535 = vst.msk [vmem:[#allocation3 + $0x29] sm:$0x1] %vm320, %v2517
      %2536 = vst.msk [vmem:[#allocation3 + $0x41] sm:$0x1] %vm320, %v2518
      %2537 = vst.msk [vmem:[#allocation3 + $0x59] sm:$0x1] %vm320, %v2519
      %2538 = vst.msk [vmem:[#allocation3 + $0x71] sm:$0x1] %vm320, %v2520
      %2539 = vst.msk [vmem:[#allocation3 + $0x89] sm:$0x1] %vm320, %v2521
      %2540 = vst.msk [vmem:[#allocation3 + $0xa1] sm:$0x1] %vm320, %v2522
      %2541 = vst.msk [vmem:[#allocation3 + $0xb9] sm:$0x1] %vm320, %v2523
      %2542 = vst.msk [vmem:[#allocation3 + $0xd1] sm:$0x1] %vm320, %v2524
      %2543 = vst.msk [vmem:[#allocation3 + $0xe9] sm:$0x1] %vm320, %v2525
      %2544 = vst.msk [vmem:[#allocation3 + $0x101] sm:$0x1] %vm320, %v2526
      %2545 = vst.msk [vmem:[#allocation3 + $0x119] sm:$0x1] %vm320, %v2527
      %2546 = vst.msk [vmem:[#allocation3 + $0x131] sm:$0x1] %vm320, %v2528
      %2547 = vst.msk [vmem:[#allocation3 + $0x149] sm:$0x1] %vm320, %v2529
      %2548 = vst.msk [vmem:[#allocation3 + $0x161] sm:$0x1] %vm320, %v2530
      %2549 = vst.msk [vmem:[#allocation3 + $0x179] sm:$0x1] %vm320, %v2531
      %2550 = vst.msk [vmem:[#allocation3 + $0x191] sm:$0x1] %vm320, %v2532
      %2551 = vst.msk [vmem:[#allocation3 + $0x1a9] sm:$0x1] %vm320, %v2533
      %v2552 = vld [vmem:[#allocation3] sm:$0xff]
      %v2553 = vld [vmem:[#allocation3 + $0x8] sm:$0xff]
      %v2554 = vld [vmem:[#allocation3 + $0x18] sm:$0xff]
      %v2555 = vld [vmem:[#allocation3 + $0x20] sm:$0xff]
      %v2556 = vld [vmem:[#allocation3 + $0x30] sm:$0xff]
      %v2557 = vld [vmem:[#allocation3 + $0x38] sm:$0xff]
      %v2558 = vld [vmem:[#allocation3 + $0x48] sm:$0xff]
      %v2559 = vld [vmem:[#allocation3 + $0x50] sm:$0xff]
      %v2560 = vld [vmem:[#allocation3 + $0x60] sm:$0xff]
      %v2561 = vld [vmem:[#allocation3 + $0x68] sm:$0xff]
      %v2562 = vld [vmem:[#allocation3 + $0x78] sm:$0xff]
      %v2563 = vld [vmem:[#allocation3 + $0x80] sm:$0xff]
      %v2564 = vld [vmem:[#allocation3 + $0x90] sm:$0xff]
      %v2565 = vld [vmem:[#allocation3 + $0x98] sm:$0xff]
      %v2566 = vld [vmem:[#allocation3 + $0xa8] sm:$0xff]
      %v2567 = vld [vmem:[#allocation3 + $0xb0] sm:$0xff]
      %v2568 = vld [vmem:[#allocation3 + $0xc0] sm:$0xff]
      %v2569 = vld [vmem:[#allocation3 + $0xc8] sm:$0xff]
      %v2570 = vld [vmem:[#allocation3 + $0xd8] sm:$0xff]
      %v2571 = vld [vmem:[#allocation3 + $0xe0] sm:$0xff]
      %v2572 = vld [vmem:[#allocation3 + $0xf0] sm:$0xff]
      %v2573 = vld [vmem:[#allocation3 + $0xf8] sm:$0xff]
      %v2574 = vld [vmem:[#allocation3 + $0x108] sm:$0xff]
      %v2575 = vld [vmem:[#allocation3 + $0x110] sm:$0xff]
      %v2576 = vld [vmem:[#allocation3 + $0x120] sm:$0xff]
      %v2577 = vld [vmem:[#allocation3 + $0x128] sm:$0xff]
      %v2578 = vld [vmem:[#allocation3 + $0x138] sm:$0xff]
      %v2579 = vld [vmem:[#allocation3 + $0x140] sm:$0xff]
      %v2580 = vld [vmem:[#allocation3 + $0x150] sm:$0xff]
      %v2581 = vld [vmem:[#allocation3 + $0x158] sm:$0xff]
      %v2582 = vld [vmem:[#allocation3 + $0x168] sm:$0xff]
      %v2583 = vld [vmem:[#allocation3 + $0x170] sm:$0xff]
      %v2584 = vld [vmem:[#allocation3 + $0x1] sm:$0xff]
      %v2585 = vld [vmem:[#allocation3 + $0x9] sm:$0xff]
      %v2586 = vld [vmem:[#allocation3 + $0x19] sm:$0xff]
      %v2587 = vld [vmem:[#allocation3 + $0x21] sm:$0xff]
      %v2588 = vld [vmem:[#allocation3 + $0x31] sm:$0xff]
      %v2589 = vld [vmem:[#allocation3 + $0x39] sm:$0xff]
      %v2590 = vld [vmem:[#allocation3 + $0x49] sm:$0xff]
      %v2591 = vld [vmem:[#allocation3 + $0x51] sm:$0xff]
      %v2592 = vld [vmem:[#allocation3 + $0x61] sm:$0xff]
      %v2593 = vld [vmem:[#allocation3 + $0x69] sm:$0xff]
      %v2594 = vld [vmem:[#allocation3 + $0x79] sm:$0xff]
      %v2595 = vld [vmem:[#allocation3 + $0x81] sm:$0xff]
      %v2596 = vld [vmem:[#allocation3 + $0x91] sm:$0xff]
      %v2597 = vld [vmem:[#allocation3 + $0x99] sm:$0xff]
      %v2598 = vld [vmem:[#allocation3 + $0xa9] sm:$0xff]
      %v2599 = vld [vmem:[#allocation3 + $0xb1] sm:$0xff]
      %v2600 = vld [vmem:[#allocation3 + $0xc1] sm:$0xff]
      %v2601 = vld [vmem:[#allocation3 + $0xc9] sm:$0xff]
      %v2602 = vld [vmem:[#allocation3 + $0xd9] sm:$0xff]
      %v2603 = vld [vmem:[#allocation3 + $0xe1] sm:$0xff]
      %v2604 = vld [vmem:[#allocation3 + $0xf1] sm:$0xff]
      %v2605 = vld [vmem:[#allocation3 + $0xf9] sm:$0xff]
      %v2606 = vld [vmem:[#allocation3 + $0x109] sm:$0xff]
      %v2607 = vld [vmem:[#allocation3 + $0x111] sm:$0xff]
      %v2608 = vld [vmem:[#allocation3 + $0x121] sm:$0xff]
      %v2609 = vld [vmem:[#allocation3 + $0x129] sm:$0xff]
      %v2610 = vld [vmem:[#allocation3 + $0x139] sm:$0xff]
      %v2611 = vld [vmem:[#allocation3 + $0x141] sm:$0xff]
      %v2612 = vld [vmem:[#allocation3 + $0x151] sm:$0xff]
      %v2613 = vld [vmem:[#allocation3 + $0x159] sm:$0xff]
      %v2614 = vld [vmem:[#allocation3 + $0x169] sm:$0xff]
      %v2615 = vld [vmem:[#allocation3 + $0x171] sm:$0xff]
      %v2616 = vld [vmem:[#allocation3 + $0x2] sm:$0xff]
      %v2617 = vld [vmem:[#allocation3 + $0xa] sm:$0xff]
      %v2618 = vld [vmem:[#allocation3 + $0x1a] sm:$0xff]
      %v2619 = vld [vmem:[#allocation3 + $0x22] sm:$0xff]
      %v2620 = vld [vmem:[#allocation3 + $0x32] sm:$0xff]
      %v2621 = vld [vmem:[#allocation3 + $0x3a] sm:$0xff]
      %v2622 = vld [vmem:[#allocation3 + $0x4a] sm:$0xff]
      %v2623 = vld [vmem:[#allocation3 + $0x52] sm:$0xff]
      %v2624 = vld [vmem:[#allocation3 + $0x62] sm:$0xff]
      %v2625 = vld [vmem:[#allocation3 + $0x6a] sm:$0xff]
      %v2626 = vld [vmem:[#allocation3 + $0x7a] sm:$0xff]
      %v2627 = vld [vmem:[#allocation3 + $0x82] sm:$0xff]
      %v2628 = vld [vmem:[#allocation3 + $0x92] sm:$0xff]
      %v2629 = vld [vmem:[#allocation3 + $0x9a] sm:$0xff]
      %v2630 = vld [vmem:[#allocation3 + $0xaa] sm:$0xff]
      %v2631 = vld [vmem:[#allocation3 + $0xb2] sm:$0xff]
      %v2632 = vld [vmem:[#allocation3 + $0xc2] sm:$0xff]
      %v2633 = vld [vmem:[#allocation3 + $0xca] sm:$0xff]
      %v2634 = vld [vmem:[#allocation3 + $0xda] sm:$0xff]
      %v2635 = vld [vmem:[#allocation3 + $0xe2] sm:$0xff]
      %v2636 = vld [vmem:[#allocation3 + $0xf2] sm:$0xff]
      %v2637 = vld [vmem:[#allocation3 + $0xfa] sm:$0xff]
      %v2638 = vld [vmem:[#allocation3 + $0x10a] sm:$0xff]
      %v2639 = vld [vmem:[#allocation3 + $0x112] sm:$0xff]
      %v2640 = vld [vmem:[#allocation3 + $0x122] sm:$0xff]
      %v2641 = vld [vmem:[#allocation3 + $0x12a] sm:$0xff]
      %v2642 = vld [vmem:[#allocation3 + $0x13a] sm:$0xff]
      %v2643 = vld [vmem:[#allocation3 + $0x142] sm:$0xff]
      %v2644 = vld [vmem:[#allocation3 + $0x152] sm:$0xff]
      %v2645 = vld [vmem:[#allocation3 + $0x15a] sm:$0xff]
      %v2646 = vld [vmem:[#allocation3 + $0x16a] sm:$0xff]
      %v2647 = vld [vmem:[#allocation3 + $0x172] sm:$0xff]
      %2680 = vrot.lane.b32.xlu0 %v2584, 4
      %v2681 = vpop.permute.xlu0 %2680
      %2682 = vrot.lane.b32.xlu0 %v2585, 4
      %v2683 = vpop.permute.xlu0 %2682
      %2684 = vrot.lane.b32.xlu0 %v2586, 4
      %v2685 = vpop.permute.xlu0 %2684
      %2686 = vrot.lane.b32.xlu0 %v2587, 4
      %v2687 = vpop.permute.xlu0 %2686
      %2688 = vrot.lane.b32.xlu0 %v2588, 4
      %v2689 = vpop.permute.xlu0 %2688
      %2690 = vrot.lane.b32.xlu0 %v2589, 4
      %v2691 = vpop.permute.xlu0 %2690
      %2692 = vrot.lane.b32.xlu0 %v2590, 4
      %v2693 = vpop.permute.xlu0 %2692
      %2694 = vrot.lane.b32.xlu0 %v2591, 4
      %v2695 = vpop.permute.xlu0 %2694
      %2696 = vrot.lane.b32.xlu0 %v2592, 4
      %v2697 = vpop.permute.xlu0 %2696
      %2698 = vrot.lane.b32.xlu0 %v2593, 4
      %v2699 = vpop.permute.xlu0 %2698
      %2700 = vrot.lane.b32.xlu0 %v2594, 4
      %v2701 = vpop.permute.xlu0 %2700
      %2702 = vrot.lane.b32.xlu0 %v2595, 4
      %v2703 = vpop.permute.xlu0 %2702
      %2704 = vrot.lane.b32.xlu0 %v2596, 4
      %v2705 = vpop.permute.xlu0 %2704
      %2706 = vrot.lane.b32.xlu0 %v2597, 4
      %v2707 = vpop.permute.xlu0 %2706
      %2708 = vrot.lane.b32.xlu0 %v2598, 4
      %v2709 = vpop.permute.xlu0 %2708
      %2710 = vrot.lane.b32.xlu0 %v2599, 4
      %v2711 = vpop.permute.xlu0 %2710
      %2712 = vrot.lane.b32.xlu0 %v2600, 4
      %v2713 = vpop.permute.xlu0 %2712
      %2714 = vrot.lane.b32.xlu0 %v2601, 4
      %v2715 = vpop.permute.xlu0 %2714
      %2716 = vrot.lane.b32.xlu0 %v2602, 4
      %v2717 = vpop.permute.xlu0 %2716
      %2718 = vrot.lane.b32.xlu0 %v2603, 4
      %v2719 = vpop.permute.xlu0 %2718
      %2720 = vrot.lane.b32.xlu0 %v2604, 4
      %v2721 = vpop.permute.xlu0 %2720
      %2722 = vrot.lane.b32.xlu0 %v2605, 4
      %v2723 = vpop.permute.xlu0 %2722
      %2724 = vrot.lane.b32.xlu0 %v2606, 4
      %v2725 = vpop.permute.xlu0 %2724
      %2726 = vrot.lane.b32.xlu0 %v2607, 4
      %v2727 = vpop.permute.xlu0 %2726
      %2728 = vrot.lane.b32.xlu0 %v2608, 4
      %v2729 = vpop.permute.xlu0 %2728
      %2730 = vrot.lane.b32.xlu0 %v2609, 4
      %v2731 = vpop.permute.xlu0 %2730
      %2732 = vrot.lane.b32.xlu0 %v2610, 4
      %v2733 = vpop.permute.xlu0 %2732
      %2734 = vrot.lane.b32.xlu0 %v2611, 4
      %v2735 = vpop.permute.xlu0 %2734
      %2736 = vrot.lane.b32.xlu0 %v2612, 4
      %v2737 = vpop.permute.xlu0 %2736
      %2738 = vrot.lane.b32.xlu0 %v2613, 4
      %v2739 = vpop.permute.xlu0 %2738
      %2740 = vrot.lane.b32.xlu0 %v2614, 4
      %v2741 = vpop.permute.xlu0 %2740
      %2742 = vrot.lane.b32.xlu0 %v2615, 4
      %v2743 = vpop.permute.xlu0 %2742
      %2808 = vrot.lane.b32.xlu0 %v2616, 8
      %v2809 = vpop.permute.xlu0 %2808
      %2810 = vrot.lane.b32.xlu0 %v2617, 8
      %v2811 = vpop.permute.xlu0 %2810
      %2812 = vrot.lane.b32.xlu0 %v2618, 8
      %v2813 = vpop.permute.xlu0 %2812
      %2814 = vrot.lane.b32.xlu0 %v2619, 8
      %v2815 = vpop.permute.xlu0 %2814
      %2816 = vrot.lane.b32.xlu0 %v2620, 8
      %v2817 = vpop.permute.xlu0 %2816
      %2818 = vrot.lane.b32.xlu0 %v2621, 8
      %v2819 = vpop.permute.xlu0 %2818
      %2820 = vrot.lane.b32.xlu0 %v2622, 8
      %v2821 = vpop.permute.xlu0 %2820
      %2822 = vrot.lane.b32.xlu0 %v2623, 8
      %v2823 = vpop.permute.xlu0 %2822
      %2824 = vrot.lane.b32.xlu0 %v2624, 8
      %v2825 = vpop.permute.xlu0 %2824
      %2826 = vrot.lane.b32.xlu0 %v2625, 8
      %v2827 = vpop.permute.xlu0 %2826
      %2828 = vrot.lane.b32.xlu0 %v2626, 8
      %v2829 = vpop.permute.xlu0 %2828
      %2830 = vrot.lane.b32.xlu0 %v2627, 8
      %v2831 = vpop.permute.xlu0 %2830
      %2832 = vrot.lane.b32.xlu0 %v2628, 8
      %v2833 = vpop.permute.xlu0 %2832
      %2834 = vrot.lane.b32.xlu0 %v2629, 8
      %v2835 = vpop.permute.xlu0 %2834
      %2836 = vrot.lane.b32.xlu0 %v2630, 8
      %v2837 = vpop.permute.xlu0 %2836
      %2838 = vrot.lane.b32.xlu0 %v2631, 8
      %v2839 = vpop.permute.xlu0 %2838
      %2840 = vrot.lane.b32.xlu0 %v2632, 8
      %v2841 = vpop.permute.xlu0 %2840
      %2842 = vrot.lane.b32.xlu0 %v2633, 8
      %v2843 = vpop.permute.xlu0 %2842
      %2844 = vrot.lane.b32.xlu0 %v2634, 8
      %v2845 = vpop.permute.xlu0 %2844
      %2846 = vrot.lane.b32.xlu0 %v2635, 8
      %v2847 = vpop.permute.xlu0 %2846
      %2848 = vrot.lane.b32.xlu0 %v2636, 8
      %v2849 = vpop.permute.xlu0 %2848
      %2850 = vrot.lane.b32.xlu0 %v2637, 8
      %v2851 = vpop.permute.xlu0 %2850
      %2852 = vrot.lane.b32.xlu0 %v2638, 8
      %v2853 = vpop.permute.xlu0 %2852
      %2854 = vrot.lane.b32.xlu0 %v2639, 8
      %v2855 = vpop.permute.xlu0 %2854
      %2856 = vrot.lane.b32.xlu0 %v2640, 8
      %v2857 = vpop.permute.xlu0 %2856
      %2858 = vrot.lane.b32.xlu0 %v2641, 8
      %v2859 = vpop.permute.xlu0 %2858
      %2860 = vrot.lane.b32.xlu0 %v2642, 8
      %v2861 = vpop.permute.xlu0 %2860
      %2862 = vrot.lane.b32.xlu0 %v2643, 8
      %v2863 = vpop.permute.xlu0 %2862
      %2864 = vrot.lane.b32.xlu0 %v2644, 8
      %v2865 = vpop.permute.xlu0 %2864
      %2866 = vrot.lane.b32.xlu0 %v2645, 8
      %v2867 = vpop.permute.xlu0 %2866
      %2868 = vrot.lane.b32.xlu0 %v2646, 8
      %v2869 = vpop.permute.xlu0 %2868
      %2870 = vrot.lane.b32.xlu0 %v2647, 8
      %v2871 = vpop.permute.xlu0 %2870
      %v2904 = vsel %vm259, %v2552, %v2681
      %v2905 = vsel %vm259, %v2553, %v2683
      %v2906 = vsel %vm259, %v2554, %v2685
      %v2907 = vsel %vm259, %v2555, %v2687
      %v2908 = vsel %vm259, %v2556, %v2689
      %v2909 = vsel %vm259, %v2557, %v2691
      %v2910 = vsel %vm259, %v2558, %v2693
      %v2911 = vsel %vm259, %v2559, %v2695
      %v2912 = vsel %vm259, %v2560, %v2697
      %v2913 = vsel %vm259, %v2561, %v2699
      %v2914 = vsel %vm259, %v2562, %v2701
      %v2915 = vsel %vm259, %v2563, %v2703
      %v2916 = vsel %vm259, %v2564, %v2705
      %v2917 = vsel %vm259, %v2565, %v2707
      %v2918 = vsel %vm259, %v2566, %v2709
      %v2919 = vsel %vm259, %v2567, %v2711
      %v2920 = vsel %vm259, %v2568, %v2713
      %v2921 = vsel %vm259, %v2569, %v2715
      %v2922 = vsel %vm259, %v2570, %v2717
      %v2923 = vsel %vm259, %v2571, %v2719
      %v2924 = vsel %vm259, %v2572, %v2721
      %v2925 = vsel %vm259, %v2573, %v2723
      %v2926 = vsel %vm259, %v2574, %v2725
      %v2927 = vsel %vm259, %v2575, %v2727
      %v2928 = vsel %vm259, %v2576, %v2729
      %v2929 = vsel %vm259, %v2577, %v2731
      %v2930 = vsel %vm259, %v2578, %v2733
      %v2931 = vsel %vm259, %v2579, %v2735
      %v2932 = vsel %vm259, %v2580, %v2737
      %v2933 = vsel %vm259, %v2581, %v2739
      %v2934 = vsel %vm259, %v2582, %v2741
      %v2935 = vsel %vm259, %v2583, %v2743
      %v2936 = vsel %vm759, %v2904, %v2809
      %v2937 = vsel %vm759, %v2905, %v2811
      %v2938 = vsel %vm759, %v2906, %v2813
      %v2939 = vsel %vm759, %v2907, %v2815
      %v2940 = vsel %vm759, %v2908, %v2817
      %v2941 = vsel %vm759, %v2909, %v2819
      %v2942 = vsel %vm759, %v2910, %v2821
      %v2943 = vsel %vm759, %v2911, %v2823
      %v2944 = vsel %vm759, %v2912, %v2825
      %v2945 = vsel %vm759, %v2913, %v2827
      %v2946 = vsel %vm759, %v2914, %v2829
      %v2947 = vsel %vm759, %v2915, %v2831
      %v2948 = vsel %vm759, %v2916, %v2833
      %v2949 = vsel %vm759, %v2917, %v2835
      %v2950 = vsel %vm759, %v2918, %v2837
      %v2951 = vsel %vm759, %v2919, %v2839
      %v2952 = vsel %vm759, %v2920, %v2841
      %v2953 = vsel %vm759, %v2921, %v2843
      %v2954 = vsel %vm759, %v2922, %v2845
      %v2955 = vsel %vm759, %v2923, %v2847
      %v2956 = vsel %vm759, %v2924, %v2849
      %v2957 = vsel %vm759, %v2925, %v2851
      %v2958 = vsel %vm759, %v2926, %v2853
      %v2959 = vsel %vm759, %v2927, %v2855
      %v2960 = vsel %vm759, %v2928, %v2857
      %v2961 = vsel %vm759, %v2929, %v2859
      %v2962 = vsel %vm759, %v2930, %v2861
      %v2963 = vsel %vm759, %v2931, %v2863
      %v2964 = vsel %vm759, %v2932, %v2865
      %v2965 = vsel %vm759, %v2933, %v2867
      %v2966 = vsel %vm759, %v2934, %v2869
      %v2967 = vsel %vm759, %v2935, %v2871
      %v2968 = vpack.c.bf16 %v2937, %v2936
      %v2969 = vpack.c.bf16 %v2939, %v2938
      %v2970 = vpack.c.bf16 %v2941, %v2940
      %v2971 = vpack.c.bf16 %v2943, %v2942
      %v2972 = vpack.c.bf16 %v2945, %v2944
      %v2973 = vpack.c.bf16 %v2947, %v2946
      %v2974 = vpack.c.bf16 %v2949, %v2948
      %v2975 = vpack.c.bf16 %v2951, %v2950
      %v2976 = vpack.c.bf16 %v2953, %v2952
      %v2977 = vpack.c.bf16 %v2955, %v2954
      %v2978 = vpack.c.bf16 %v2957, %v2956
      %v2979 = vpack.c.bf16 %v2959, %v2958
      %v2980 = vpack.c.bf16 %v2961, %v2960
      %v2981 = vpack.c.bf16 %v2963, %v2962
      %v2982 = vpack.c.bf16 %v2965, %v2964
      %v2983 = vpack.c.bf16 %v2967, %v2966
      %v2984 = vld [vmem:[%s3] sm:$0xf]
      %v2985 = vld [vmem:[%s3 + $0x4] sm:$0x3]
      %v2986 = vld [vmem:[%s2437] sm:$0xff]
      %v2987 = vld [vmem:[%s2437 + $0x8] sm:$0xff]
      %v2988 = vld [vmem:[%s2437 + $0x18] sm:$0xff]
      %v2989 = vld [vmem:[%s2437 + $0x20] sm:$0xff]
      %v2990 = vld [vmem:[%s2437 + $0x30] sm:$0xff]
      %v2991 = vld [vmem:[%s2437 + $0x38] sm:$0xff]
      %v2992 = vld [vmem:[%s2437 + $0x48] sm:$0xff]
      %v2993 = vld [vmem:[%s2437 + $0x50] sm:$0xff]
      %v2994 = vld [vmem:[%s2437 + $0x60] sm:$0xff]
      %v2995 = vld [vmem:[%s2437 + $0x68] sm:$0xff]
      %v2996 = vld [vmem:[%s2437 + $0x78] sm:$0xff]
      %v2997 = vld [vmem:[%s2437 + $0x80] sm:$0xff]
      %v2998 = vld [vmem:[%s2437 + $0x90] sm:$0xff]
      %v2999 = vld [vmem:[%s2437 + $0x98] sm:$0xff]
      %v3000 = vld [vmem:[%s2437 + $0xa8] sm:$0xff]
      %v3001 = vld [vmem:[%s2437 + $0xb0] sm:$0xff]
      %v3002 = vld [vmem:[%s2437 + $0xc0] sm:$0xff]
      %v3003 = vld [vmem:[%s2437 + $0xc8] sm:$0xff]
      %v3004 = vld [vmem:[%s2437 + $0xd8] sm:$0xff]
      %v3005 = vld [vmem:[%s2437 + $0xe0] sm:$0xff]
      %v3006 = vld [vmem:[%s2437 + $0xf0] sm:$0xff]
      %v3007 = vld [vmem:[%s2437 + $0xf8] sm:$0xff]
      %v3008 = vld [vmem:[%s2437 + $0x108] sm:$0xff]
      %v3009 = vld [vmem:[%s2437 + $0x110] sm:$0xff]
      %v3010 = vld [vmem:[%s2437 + $0x120] sm:$0xff]
      %v3011 = vld [vmem:[%s2437 + $0x128] sm:$0xff]
      %v3012 = vld [vmem:[%s2437 + $0x138] sm:$0xff]
      %v3013 = vld [vmem:[%s2437 + $0x140] sm:$0xff]
      %v3014 = vld [vmem:[%s2437 + $0x150] sm:$0xff]
      %v3015 = vld [vmem:[%s2437 + $0x158] sm:$0xff]
      %v3016 = vld [vmem:[%s2437 + $0x168] sm:$0xff]
      %v3017 = vld [vmem:[%s2437 + $0x170] sm:$0xff]
      %v3018 = vld [vmem:[%s2437 + $0x1] sm:$0xff]
      %v3019 = vld [vmem:[%s2437 + $0x9] sm:$0xff]
      %v3020 = vld [vmem:[%s2437 + $0x19] sm:$0xff]
      %v3021 = vld [vmem:[%s2437 + $0x21] sm:$0xff]
      %v3022 = vld [vmem:[%s2437 + $0x31] sm:$0xff]
      %v3023 = vld [vmem:[%s2437 + $0x39] sm:$0xff]
      %v3024 = vld [vmem:[%s2437 + $0x49] sm:$0xff]
      %v3025 = vld [vmem:[%s2437 + $0x51] sm:$0xff]
      %v3026 = vld [vmem:[%s2437 + $0x61] sm:$0xff]
      %v3027 = vld [vmem:[%s2437 + $0x69] sm:$0xff]
      %v3028 = vld [vmem:[%s2437 + $0x79] sm:$0xff]
      %v3029 = vld [vmem:[%s2437 + $0x81] sm:$0xff]
      %v3030 = vld [vmem:[%s2437 + $0x91] sm:$0xff]
      %v3031 = vld [vmem:[%s2437 + $0x99] sm:$0xff]
      %v3032 = vld [vmem:[%s2437 + $0xa9] sm:$0xff]
      %v3033 = vld [vmem:[%s2437 + $0xb1] sm:$0xff]
      %v3034 = vld [vmem:[%s2437 + $0xc1] sm:$0xff]
      %v3035 = vld [vmem:[%s2437 + $0xc9] sm:$0xff]
      %v3036 = vld [vmem:[%s2437 + $0xd9] sm:$0xff]
      %v3037 = vld [vmem:[%s2437 + $0xe1] sm:$0xff]
      %v3038 = vld [vmem:[%s2437 + $0xf1] sm:$0xff]
      %v3039 = vld [vmem:[%s2437 + $0xf9] sm:$0xff]
      %v3040 = vld [vmem:[%s2437 + $0x109] sm:$0xff]
      %v3041 = vld [vmem:[%s2437 + $0x111] sm:$0xff]
      %v3042 = vld [vmem:[%s2437 + $0x121] sm:$0xff]
      %v3043 = vld [vmem:[%s2437 + $0x129] sm:$0xff]
      %v3044 = vld [vmem:[%s2437 + $0x139] sm:$0xff]
      %v3045 = vld [vmem:[%s2437 + $0x141] sm:$0xff]
      %v3046 = vld [vmem:[%s2437 + $0x151] sm:$0xff]
      %v3047 = vld [vmem:[%s2437 + $0x159] sm:$0xff]
      %v3048 = vld [vmem:[%s2437 + $0x169] sm:$0xff]
      %v3049 = vld [vmem:[%s2437 + $0x171] sm:$0xff]
      %v3050 = vld [vmem:[%s2437 + $0x2] sm:$0xff]
      %v3051 = vld [vmem:[%s2437 + $0xa] sm:$0xff]
      %v3052 = vld [vmem:[%s2437 + $0x1a] sm:$0xff]
      %v3053 = vld [vmem:[%s2437 + $0x22] sm:$0xff]
      %v3054 = vld [vmem:[%s2437 + $0x32] sm:$0xff]
      %v3055 = vld [vmem:[%s2437 + $0x3a] sm:$0xff]
      %v3056 = vld [vmem:[%s2437 + $0x4a] sm:$0xff]
      %v3057 = vld [vmem:[%s2437 + $0x52] sm:$0xff]
      %v3058 = vld [vmem:[%s2437 + $0x62] sm:$0xff]
      %v3059 = vld [vmem:[%s2437 + $0x6a] sm:$0xff]
      %v3060 = vld [vmem:[%s2437 + $0x7a] sm:$0xff]
      %v3061 = vld [vmem:[%s2437 + $0x82] sm:$0xff]
      %v3062 = vld [vmem:[%s2437 + $0x92] sm:$0xff]
      %v3063 = vld [vmem:[%s2437 + $0x9a] sm:$0xff]
      %v3064 = vld [vmem:[%s2437 + $0xaa] sm:$0xff]
      %v3065 = vld [vmem:[%s2437 + $0xb2] sm:$0xff]
      %v3066 = vld [vmem:[%s2437 + $0xc2] sm:$0xff]
      %v3067 = vld [vmem:[%s2437 + $0xca] sm:$0xff]
      %v3068 = vld [vmem:[%s2437 + $0xda] sm:$0xff]
      %v3069 = vld [vmem:[%s2437 + $0xe2] sm:$0xff]
      %v3070 = vld [vmem:[%s2437 + $0xf2] sm:$0xff]
      %v3071 = vld [vmem:[%s2437 + $0xfa] sm:$0xff]
      %v3072 = vld [vmem:[%s2437 + $0x10a] sm:$0xff]
      %v3073 = vld [vmem:[%s2437 + $0x112] sm:$0xff]
      %v3074 = vld [vmem:[%s2437 + $0x122] sm:$0xff]
      %v3075 = vld [vmem:[%s2437 + $0x12a] sm:$0xff]
      %v3076 = vld [vmem:[%s2437 + $0x13a] sm:$0xff]
      %v3077 = vld [vmem:[%s2437 + $0x142] sm:$0xff]
      %v3078 = vld [vmem:[%s2437 + $0x152] sm:$0xff]
      %v3079 = vld [vmem:[%s2437 + $0x15a] sm:$0xff]
      %v3080 = vld [vmem:[%s2437 + $0x16a] sm:$0xff]
      %v3081 = vld [vmem:[%s2437 + $0x172] sm:$0xff]
      %3114 = vrot.lane.b32.xlu0 %v3018, 4
      %v3115 = vpop.permute.xlu0 %3114
      %3116 = vrot.lane.b32.xlu0 %v3019, 4
      %v3117 = vpop.permute.xlu0 %3116
      %3118 = vrot.lane.b32.xlu0 %v3020, 4
      %v3119 = vpop.permute.xlu0 %3118
      %3120 = vrot.lane.b32.xlu0 %v3021, 4
      %v3121 = vpop.permute.xlu0 %3120
      %3122 = vrot.lane.b32.xlu0 %v3022, 4
      %v3123 = vpop.permute.xlu0 %3122
      %3124 = vrot.lane.b32.xlu0 %v3023, 4
      %v3125 = vpop.permute.xlu0 %3124
      %3126 = vrot.lane.b32.xlu0 %v3024, 4
      %v3127 = vpop.permute.xlu0 %3126
      %3128 = vrot.lane.b32.xlu0 %v3025, 4
      %v3129 = vpop.permute.xlu0 %3128
      %3130 = vrot.lane.b32.xlu0 %v3026, 4
      %v3131 = vpop.permute.xlu0 %3130
      %3132 = vrot.lane.b32.xlu0 %v3027, 4
      %v3133 = vpop.permute.xlu0 %3132
      %3134 = vrot.lane.b32.xlu0 %v3028, 4
      %v3135 = vpop.permute.xlu0 %3134
      %3136 = vrot.lane.b32.xlu0 %v3029, 4
      %v3137 = vpop.permute.xlu0 %3136
      %3138 = vrot.lane.b32.xlu0 %v3030, 4
      %v3139 = vpop.permute.xlu0 %3138
      %3140 = vrot.lane.b32.xlu0 %v3031, 4
      %v3141 = vpop.permute.xlu0 %3140
      %3142 = vrot.lane.b32.xlu0 %v3032, 4
      %v3143 = vpop.permute.xlu0 %3142
      %3144 = vrot.lane.b32.xlu0 %v3033, 4
      %v3145 = vpop.permute.xlu0 %3144
      %3146 = vrot.lane.b32.xlu0 %v3034, 4
      %v3147 = vpop.permute.xlu0 %3146
      %3148 = vrot.lane.b32.xlu0 %v3035, 4
      %v3149 = vpop.permute.xlu0 %3148
      %3150 = vrot.lane.b32.xlu0 %v3036, 4
      %v3151 = vpop.permute.xlu0 %3150
      %3152 = vrot.lane.b32.xlu0 %v3037, 4
      %v3153 = vpop.permute.xlu0 %3152
      %3154 = vrot.lane.b32.xlu0 %v3038, 4
      %v3155 = vpop.permute.xlu0 %3154
      %3156 = vrot.lane.b32.xlu0 %v3039, 4
      %v3157 = vpop.permute.xlu0 %3156
      %3158 = vrot.lane.b32.xlu0 %v3040, 4
      %v3159 = vpop.permute.xlu0 %3158
      %3160 = vrot.lane.b32.xlu0 %v3041, 4
      %v3161 = vpop.permute.xlu0 %3160
      %3162 = vrot.lane.b32.xlu0 %v3042, 4
      %v3163 = vpop.permute.xlu0 %3162
      %3164 = vrot.lane.b32.xlu0 %v3043, 4
      %v3165 = vpop.permute.xlu0 %3164
      %3166 = vrot.lane.b32.xlu0 %v3044, 4
      %v3167 = vpop.permute.xlu0 %3166
      %3168 = vrot.lane.b32.xlu0 %v3045, 4
      %v3169 = vpop.permute.xlu0 %3168
      %3170 = vrot.lane.b32.xlu0 %v3046, 4
      %v3171 = vpop.permute.xlu0 %3170
      %3172 = vrot.lane.b32.xlu0 %v3047, 4
      %v3173 = vpop.permute.xlu0 %3172
      %3174 = vrot.lane.b32.xlu0 %v3048, 4
      %v3175 = vpop.permute.xlu0 %3174
      %3176 = vrot.lane.b32.xlu0 %v3049, 4
      %v3177 = vpop.permute.xlu0 %3176
      %3242 = vrot.lane.b32.xlu0 %v3050, 8
      %v3243 = vpop.permute.xlu0 %3242
      %3244 = vrot.lane.b32.xlu0 %v3051, 8
      %v3245 = vpop.permute.xlu0 %3244
      %3246 = vrot.lane.b32.xlu0 %v3052, 8
      %v3247 = vpop.permute.xlu0 %3246
      %3248 = vrot.lane.b32.xlu0 %v3053, 8
      %v3249 = vpop.permute.xlu0 %3248
      %3250 = vrot.lane.b32.xlu0 %v3054, 8
      %v3251 = vpop.permute.xlu0 %3250
      %3252 = vrot.lane.b32.xlu0 %v3055, 8
      %v3253 = vpop.permute.xlu0 %3252
      %3254 = vrot.lane.b32.xlu0 %v3056, 8
      %v3255 = vpop.permute.xlu0 %3254
      %3256 = vrot.lane.b32.xlu0 %v3057, 8
      %v3257 = vpop.permute.xlu0 %3256
      %3258 = vrot.lane.b32.xlu0 %v3058, 8
      %v3259 = vpop.permute.xlu0 %3258
      %3260 = vrot.lane.b32.xlu0 %v3059, 8
      %v3261 = vpop.permute.xlu0 %3260
      %3262 = vrot.lane.b32.xlu0 %v3060, 8
      %v3263 = vpop.permute.xlu0 %3262
      %3264 = vrot.lane.b32.xlu0 %v3061, 8
      %v3265 = vpop.permute.xlu0 %3264
      %3266 = vrot.lane.b32.xlu0 %v3062, 8
      %v3267 = vpop.permute.xlu0 %3266
      %3268 = vrot.lane.b32.xlu0 %v3063, 8
      %v3269 = vpop.permute.xlu0 %3268
      %3270 = vrot.lane.b32.xlu0 %v3064, 8
      %v3271 = vpop.permute.xlu0 %3270
      %3272 = vrot.lane.b32.xlu0 %v3065, 8
      %v3273 = vpop.permute.xlu0 %3272
      %3274 = vrot.lane.b32.xlu0 %v3066, 8
      %v3275 = vpop.permute.xlu0 %3274
      %3276 = vrot.lane.b32.xlu0 %v3067, 8
      %v3277 = vpop.permute.xlu0 %3276
      %3278 = vrot.lane.b32.xlu0 %v3068, 8
      %v3279 = vpop.permute.xlu0 %3278
      %3280 = vrot.lane.b32.xlu0 %v3069, 8
      %v3281 = vpop.permute.xlu0 %3280
      %3282 = vrot.lane.b32.xlu0 %v3070, 8
      %v3283 = vpop.permute.xlu0 %3282
      %3284 = vrot.lane.b32.xlu0 %v3071, 8
      %v3285 = vpop.permute.xlu0 %3284
      %3286 = vrot.lane.b32.xlu0 %v3072, 8
      %v3287 = vpop.permute.xlu0 %3286
      %3288 = vrot.lane.b32.xlu0 %v3073, 8
      %v3289 = vpop.permute.xlu0 %3288
      %3290 = vrot.lane.b32.xlu0 %v3074, 8
      %v3291 = vpop.permute.xlu0 %3290
      %3292 = vrot.lane.b32.xlu0 %v3075, 8
      %v3293 = vpop.permute.xlu0 %3292
      %3294 = vrot.lane.b32.xlu0 %v3076, 8
      %v3295 = vpop.permute.xlu0 %3294
      %3296 = vrot.lane.b32.xlu0 %v3077, 8
      %v3297 = vpop.permute.xlu0 %3296
      %3298 = vrot.lane.b32.xlu0 %v3078, 8
      %v3299 = vpop.permute.xlu0 %3298
      %3300 = vrot.lane.b32.xlu0 %v3079, 8
      %v3301 = vpop.permute.xlu0 %3300
      %3302 = vrot.lane.b32.xlu0 %v3080, 8
      %v3303 = vpop.permute.xlu0 %3302
      %3304 = vrot.lane.b32.xlu0 %v3081, 8
      %v3305 = vpop.permute.xlu0 %3304
      %v3338 = vsel %vm259, %v2986, %v3115
      %v3339 = vsel %vm259, %v2987, %v3117
      %v3340 = vsel %vm259, %v2988, %v3119
      %v3341 = vsel %vm259, %v2989, %v3121
      %v3342 = vsel %vm259, %v2990, %v3123
      %v3343 = vsel %vm259, %v2991, %v3125
      %v3344 = vsel %vm259, %v2992, %v3127
      %v3345 = vsel %vm259, %v2993, %v3129
      %v3346 = vsel %vm259, %v2994, %v3131
      %v3347 = vsel %vm259, %v2995, %v3133
      %v3348 = vsel %vm259, %v2996, %v3135
      %v3349 = vsel %vm259, %v2997, %v3137
      %v3350 = vsel %vm259, %v2998, %v3139
      %v3351 = vsel %vm259, %v2999, %v3141
      %v3352 = vsel %vm259, %v3000, %v3143
      %v3353 = vsel %vm259, %v3001, %v3145
      %v3354 = vsel %vm259, %v3002, %v3147
      %v3355 = vsel %vm259, %v3003, %v3149
      %v3356 = vsel %vm259, %v3004, %v3151
      %v3357 = vsel %vm259, %v3005, %v3153
      %v3358 = vsel %vm259, %v3006, %v3155
      %v3359 = vsel %vm259, %v3007, %v3157
      %v3360 = vsel %vm259, %v3008, %v3159
      %v3361 = vsel %vm259, %v3009, %v3161
      %v3362 = vsel %vm259, %v3010, %v3163
      %v3363 = vsel %vm259, %v3011, %v3165
      %v3364 = vsel %vm259, %v3012, %v3167
      %v3365 = vsel %vm259, %v3013, %v3169
      %v3366 = vsel %vm259, %v3014, %v3171
      %v3367 = vsel %vm259, %v3015, %v3173
      %v3368 = vsel %vm259, %v3016, %v3175
      %v3369 = vsel %vm259, %v3017, %v3177
      %v3370 = vsel %vm759, %v3338, %v3243
      %v3371 = vsel %vm759, %v3339, %v3245
      %v3372 = vsel %vm759, %v3340, %v3247
      %v3373 = vsel %vm759, %v3341, %v3249
      %v3374 = vsel %vm759, %v3342, %v3251
      %v3375 = vsel %vm759, %v3343, %v3253
      %v3376 = vsel %vm759, %v3344, %v3255
      %v3377 = vsel %vm759, %v3345, %v3257
      %v3378 = vsel %vm759, %v3346, %v3259
      %v3379 = vsel %vm759, %v3347, %v3261
      %v3380 = vsel %vm759, %v3348, %v3263
      %v3381 = vsel %vm759, %v3349, %v3265
      %v3382 = vsel %vm759, %v3350, %v3267
      %v3383 = vsel %vm759, %v3351, %v3269
      %v3384 = vsel %vm759, %v3352, %v3271
      %v3385 = vsel %vm759, %v3353, %v3273
      %v3386 = vsel %vm759, %v3354, %v3275
      %v3387 = vsel %vm759, %v3355, %v3277
      %v3388 = vsel %vm759, %v3356, %v3279
      %v3389 = vsel %vm759, %v3357, %v3281
      %v3390 = vsel %vm759, %v3358, %v3283
      %v3391 = vsel %vm759, %v3359, %v3285
      %v3392 = vsel %vm759, %v3360, %v3287
      %v3393 = vsel %vm759, %v3361, %v3289
      %v3394 = vsel %vm759, %v3362, %v3291
      %v3395 = vsel %vm759, %v3363, %v3293
      %v3396 = vsel %vm759, %v3364, %v3295
      %v3397 = vsel %vm759, %v3365, %v3297
      %v3398 = vsel %vm759, %v3366, %v3299
      %v3399 = vsel %vm759, %v3367, %v3301
      %v3400 = vsel %vm759, %v3368, %v3303
      %v3401 = vsel %vm759, %v3369, %v3305
      %v3402 = vpack.c.bf16 %v3371, %v3370
      %v3403 = vpack.c.bf16 %v3373, %v3372
      %v3404 = vpack.c.bf16 %v3375, %v3374
      %v3405 = vpack.c.bf16 %v3377, %v3376
      %v3406 = vpack.c.bf16 %v3379, %v3378
      %v3407 = vpack.c.bf16 %v3381, %v3380
      %v3408 = vpack.c.bf16 %v3383, %v3382
      %v3409 = vpack.c.bf16 %v3385, %v3384
      %v3410 = vpack.c.bf16 %v3387, %v3386
      %v3411 = vpack.c.bf16 %v3389, %v3388
      %v3412 = vpack.c.bf16 %v3391, %v3390
      %v3413 = vpack.c.bf16 %v3393, %v3392
      %v3414 = vpack.c.bf16 %v3395, %v3394
      %v3415 = vpack.c.bf16 %v3397, %v3396
      %v3416 = vpack.c.bf16 %v3399, %v3398
      %v3417 = vpack.c.bf16 %v3401, %v3400
      %s3418 = scalar_lea.vmem %s3, 8
      %v3419 = vld [vmem:[%s3418] sm:$0xf]
      %v3420 = vld [vmem:[%s3418 + $0x4] sm:$0x3]
      %v3423 = vunpack.c.l.b16 %v3419
      %v3424 = vunpack.c.l.b16 %v3420
      %v3425 = vpack.c.b16 %v3424, %v3423
      %v3427 = vsel %vm1250, %v3402, 0
      %v3430 = vsel %vm1250, %v3403, 0
      %v3433 = vsel %vm1250, %v3404, 0
      %v3436 = vsel %vm1250, %v3405, 0
      %v3439 = vsel %vm1250, %v3406, 0
      %v3442 = vsel %vm1250, %v3407, 0
      %v3445 = vsel %vm1250, %v3408, 0
      %v3448 = vsel %vm1250, %v3409, 0
      %v3451 = vsel %vm1250, %v3410, 0
      %v3454 = vsel %vm1250, %v3411, 0
      %v3457 = vsel %vm1250, %v3412, 0
      %v3460 = vsel %vm1250, %v3413, 0
      %v3463 = vsel %vm1250, %v3414, 0
      %v3466 = vsel %vm1250, %v3415, 0
      %v3469 = vsel %vm1250, %v3416, 0
      %v3472 = vsel %vm1250, %v3417, 0
      %v3475 = vsel %vm1299, %v3425, 0
      %3477 = vmatprep.subr.bf16.mxu0 0
      %3478 = vmatpush1.bf16.msra.mxu0 0
      %3479 = vmatprep.subr.bf16.mxu0 0
      %3480 = vmatpush1.bf16.msra.mxu0 0
      %3481 = vmatprep.subr.bf16.mxu0 0
      %3482 = vmatpush1.bf16.msra.mxu0 0
      %3483 = vmatprep.subr.bf16.mxu0 0
      %3484 = vmatpush1.bf16.msra.mxu0 0
      %3485 = vmatprep.subr.bf16.mxu0 0
      %3486 = vmatpush1.bf16.msra.mxu0 0
      %3487 = vmatprep.subr.bf16.mxu0 0
      %3488 = vmatpush1.bf16.msra.mxu0 0
      %3489 = vmatprep.subr.bf16.mxu0 0
      %3490 = vmatpush1.bf16.msra.mxu0 0
      %3491 = vmatprep.subr.bf16.mxu0 0
      %3492 = vmatpush1.bf16.msra.mxu0 %v3475
      %3493 = vmatprep.subr.bf16.mxu0 0
      %3494 = vmatpush2.bf16.msra.mxu0 0
      %3495 = vmatprep.subr.bf16.mxu0 0
      %3496 = vmatpush2.bf16.msra.mxu0 0
      %3497 = vmatprep.subr.bf16.mxu0 0
      %3498 = vmatpush2.bf16.msra.mxu0 0
      %3499 = vmatprep.subr.bf16.mxu0 0
      %3500 = vmatpush2.bf16.msra.mxu0 0
      %3501 = vmatprep.subr.bf16.mxu0 0
      %3502 = vmatpush2.bf16.msra.mxu0 0
      %3503 = vmatprep.subr.bf16.mxu0 0
      %3504 = vmatpush2.bf16.msra.mxu0 0
      %3505 = vmatprep.subr.bf16.mxu0 0
      %3506 = vmatpush2.bf16.msra.mxu0 0
      %3507 = vmatprep.subr.bf16.mxu0 0
      %3508 = vmatpush2.bf16.msra.mxu0 0
      %3509 = vmatprep.mubr.bf16.mxu0 0
      %3510 = vmatmul.mubr.bf16.gmra.mxu0 %v3427
      %v3511 = vpop.f32.mrf.mxu0
      %v3512 = vadd.f32 0.0, %v3511
      %v3513 = vpop.f32.mrf.mxu0
      %v3514 = vpop.f32.mrf.mxu0
      %v3515 = vadd.f32 0.0, %v3514
      %v3516 = vpop.f32.mrf.mxu0
      %3517 = vmatprep.mubr.bf16.mxu0 0
      %3518 = vmatmul.mubr.bf16.gmra.mxu0 %v3430
      %v3519 = vpop.f32.mrf.mxu0
      %v3520 = vadd.f32 0.0, %v3519
      %v3521 = vpop.f32.mrf.mxu0
      %v3522 = vpop.f32.mrf.mxu0
      %v3523 = vadd.f32 0.0, %v3522
      %v3524 = vpop.f32.mrf.mxu0
      %3525 = vmatprep.mubr.bf16.mxu0 0
      %3526 = vmatmul.mubr.bf16.gmra.mxu0 %v3433
      %v3527 = vpop.f32.mrf.mxu0
      %v3528 = vadd.f32 0.0, %v3527
      %v3529 = vpop.f32.mrf.mxu0
      %v3530 = vpop.f32.mrf.mxu0
      %v3531 = vadd.f32 0.0, %v3530
      %v3532 = vpop.f32.mrf.mxu0
      %3533 = vmatprep.mubr.bf16.mxu0 0
      %3534 = vmatmul.mubr.bf16.gmra.mxu0 %v3436
      %v3535 = vpop.f32.mrf.mxu0
      %v3536 = vadd.f32 0.0, %v3535
      %v3537 = vpop.f32.mrf.mxu0
      %v3538 = vpop.f32.mrf.mxu0
      %v3539 = vadd.f32 0.0, %v3538
      %v3540 = vpop.f32.mrf.mxu0
      %3541 = vmatprep.mubr.bf16.mxu0 0
      %3542 = vmatmul.mubr.bf16.gmra.mxu0 %v3439
      %v3543 = vpop.f32.mrf.mxu0
      %v3544 = vadd.f32 0.0, %v3543
      %v3545 = vpop.f32.mrf.mxu0
      %v3546 = vpop.f32.mrf.mxu0
      %v3547 = vadd.f32 0.0, %v3546
      %v3548 = vpop.f32.mrf.mxu0
      %3549 = vmatprep.mubr.bf16.mxu0 0
      %3550 = vmatmul.mubr.bf16.gmra.mxu0 %v3442
      %v3551 = vpop.f32.mrf.mxu0
      %v3552 = vadd.f32 0.0, %v3551
      %v3553 = vpop.f32.mrf.mxu0
      %v3554 = vpop.f32.mrf.mxu0
      %v3555 = vadd.f32 0.0, %v3554
      %v3556 = vpop.f32.mrf.mxu0
      %3557 = vmatprep.mubr.bf16.mxu0 0
      %3558 = vmatmul.mubr.bf16.gmra.mxu0 %v3445
      %v3559 = vpop.f32.mrf.mxu0
      %v3560 = vadd.f32 0.0, %v3559
      %v3561 = vpop.f32.mrf.mxu0
      %v3562 = vpop.f32.mrf.mxu0
      %v3563 = vadd.f32 0.0, %v3562
      %v3564 = vpop.f32.mrf.mxu0
      %3565 = vmatprep.mubr.bf16.mxu0 0
      %3566 = vmatmul.mubr.bf16.gmra.mxu0 %v3448
      %v3567 = vpop.f32.mrf.mxu0
      %v3568 = vadd.f32 0.0, %v3567
      %v3569 = vpop.f32.mrf.mxu0
      %v3570 = vpop.f32.mrf.mxu0
      %v3571 = vadd.f32 0.0, %v3570
      %v3572 = vpop.f32.mrf.mxu0
      %3573 = vmatprep.mubr.bf16.mxu0 0
      %3574 = vmatmul.mubr.bf16.gmra.mxu0 %v3451
      %v3575 = vpop.f32.mrf.mxu0
      %v3576 = vadd.f32 0.0, %v3575
      %v3577 = vpop.f32.mrf.mxu0
      %v3578 = vpop.f32.mrf.mxu0
      %v3579 = vadd.f32 0.0, %v3578
      %v3580 = vpop.f32.mrf.mxu0
      %3581 = vmatprep.mubr.bf16.mxu0 0
      %3582 = vmatmul.mubr.bf16.gmra.mxu0 %v3454
      %v3583 = vpop.f32.mrf.mxu0
      %v3584 = vadd.f32 0.0, %v3583
      %v3585 = vpop.f32.mrf.mxu0
      %v3586 = vpop.f32.mrf.mxu0
      %v3587 = vadd.f32 0.0, %v3586
      %v3588 = vpop.f32.mrf.mxu0
      %3589 = vmatprep.mubr.bf16.mxu0 0
      %3590 = vmatmul.mubr.bf16.gmra.mxu0 %v3457
      %v3591 = vpop.f32.mrf.mxu0
      %v3592 = vadd.f32 0.0, %v3591
      %v3593 = vpop.f32.mrf.mxu0
      %v3594 = vpop.f32.mrf.mxu0
      %v3595 = vadd.f32 0.0, %v3594
      %v3596 = vpop.f32.mrf.mxu0
      %3597 = vmatprep.mubr.bf16.mxu0 0
      %3598 = vmatmul.mubr.bf16.gmra.mxu0 %v3460
      %v3599 = vpop.f32.mrf.mxu0
      %v3600 = vadd.f32 0.0, %v3599
      %v3601 = vpop.f32.mrf.mxu0
      %v3602 = vpop.f32.mrf.mxu0
      %v3603 = vadd.f32 0.0, %v3602
      %v3604 = vpop.f32.mrf.mxu0
      %3605 = vmatprep.mubr.bf16.mxu0 0
      %3606 = vmatmul.mubr.bf16.gmra.mxu0 %v3463
      %v3607 = vpop.f32.mrf.mxu0
      %v3608 = vadd.f32 0.0, %v3607
      %v3609 = vpop.f32.mrf.mxu0
      %v3610 = vpop.f32.mrf.mxu0
      %v3611 = vadd.f32 0.0, %v3610
      %v3612 = vpop.f32.mrf.mxu0
      %3613 = vmatprep.mubr.bf16.mxu0 0
      %3614 = vmatmul.mubr.bf16.gmra.mxu0 %v3466
      %v3615 = vpop.f32.mrf.mxu0
      %v3616 = vadd.f32 0.0, %v3615
      %v3617 = vpop.f32.mrf.mxu0
      %v3618 = vpop.f32.mrf.mxu0
      %v3619 = vadd.f32 0.0, %v3618
      %v3620 = vpop.f32.mrf.mxu0
      %3621 = vmatprep.mubr.bf16.mxu0 0
      %3622 = vmatmul.mubr.bf16.gmra.mxu0 %v3469
      %v3623 = vpop.f32.mrf.mxu0
      %v3624 = vadd.f32 0.0, %v3623
      %v3625 = vpop.f32.mrf.mxu0
      %v3626 = vpop.f32.mrf.mxu0
      %v3627 = vadd.f32 0.0, %v3626
      %v3628 = vpop.f32.mrf.mxu0
      %3629 = vmatprep.mubr.bf16.mxu0 0
      %3630 = vmatmul.mubr.bf16.gmra.mxu0 %v3472
      %v3631 = vpop.f32.mrf.mxu0
      %v3632 = vadd.f32 0.0, %v3631
      %v3633 = vpop.f32.mrf.mxu0
      %v3634 = vpop.f32.mrf.mxu0
      %v3635 = vadd.f32 0.0, %v3634
      %v3636 = vpop.f32.mrf.mxu0
      %3637 = vdwg.mxu0
      %v3640 = vunpack.c.l.b16 %v2984
      %v3641 = vunpack.c.l.b16 %v2985
      %v3642 = vpack.c.b16 %v3641, %v3640
      %v3644 = vsel %vm1250, %v2968, 0
      %v3647 = vsel %vm1250, %v2969, 0
      %v3650 = vsel %vm1250, %v2970, 0
      %v3653 = vsel %vm1250, %v2971, 0
      %v3656 = vsel %vm1250, %v2972, 0
      %v3659 = vsel %vm1250, %v2973, 0
      %v3662 = vsel %vm1250, %v2974, 0
      %v3665 = vsel %vm1250, %v2975, 0
      %v3668 = vsel %vm1250, %v2976, 0
      %v3671 = vsel %vm1250, %v2977, 0
      %v3674 = vsel %vm1250, %v2978, 0
      %v3677 = vsel %vm1250, %v2979, 0
      %v3680 = vsel %vm1250, %v2980, 0
      %v3683 = vsel %vm1250, %v2981, 0
      %v3686 = vsel %vm1250, %v2982, 0
      %v3689 = vsel %vm1250, %v2983, 0
      %v3692 = vsel %vm1299, %v3642, 0
      %3694 = vmatprep.subr.bf16.mxu0 0
      %3695 = vmatpush1.bf16.msra.mxu0 0
      %3696 = vmatprep.subr.bf16.mxu0 0
      %3697 = vmatpush1.bf16.msra.mxu0 0
      %3698 = vmatprep.subr.bf16.mxu0 0
      %3699 = vmatpush1.bf16.msra.mxu0 0
      %3700 = vmatprep.subr.bf16.mxu0 0
      %3701 = vmatpush1.bf16.msra.mxu0 0
      %3702 = vmatprep.subr.bf16.mxu0 0
      %3703 = vmatpush1.bf16.msra.mxu0 0
      %3704 = vmatprep.subr.bf16.mxu0 0
      %3705 = vmatpush1.bf16.msra.mxu0 0
      %3706 = vmatprep.subr.bf16.mxu0 0
      %3707 = vmatpush1.bf16.msra.mxu0 0
      %3708 = vmatprep.subr.bf16.mxu0 0
      %3709 = vmatpush1.bf16.msra.mxu0 %v3692
      %3710 = vmatprep.subr.bf16.mxu0 0
      %3711 = vmatpush2.bf16.msra.mxu0 0
      %3712 = vmatprep.subr.bf16.mxu0 0
      %3713 = vmatpush2.bf16.msra.mxu0 0
      %3714 = vmatprep.subr.bf16.mxu0 0
      %3715 = vmatpush2.bf16.msra.mxu0 0
      %3716 = vmatprep.subr.bf16.mxu0 0
      %3717 = vmatpush2.bf16.msra.mxu0 0
      %3718 = vmatprep.subr.bf16.mxu0 0
      %3719 = vmatpush2.bf16.msra.mxu0 0
      %3720 = vmatprep.subr.bf16.mxu0 0
      %3721 = vmatpush2.bf16.msra.mxu0 0
      %3722 = vmatprep.subr.bf16.mxu0 0
      %3723 = vmatpush2.bf16.msra.mxu0 0
      %3724 = vmatprep.subr.bf16.mxu0 0
      %3725 = vmatpush2.bf16.msra.mxu0 0
      %3726 = vmatprep.mubr.bf16.mxu0 0
      %3727 = vmatmul.mubr.bf16.gmra.mxu0 %v3644
      %v3728 = vpop.f32.mrf.mxu0
      %v3729 = vadd.f32 %v3512, %v3728
      %v3730 = vpop.f32.mrf.mxu0
      %v3731 = vpop.f32.mrf.mxu0
      %v3732 = vadd.f32 %v3515, %v3731
      %v3733 = vpop.f32.mrf.mxu0
      %3734 = vmatprep.mubr.bf16.mxu0 0
      %3735 = vmatmul.mubr.bf16.gmra.mxu0 %v3647
      %v3736 = vpop.f32.mrf.mxu0
      %v3737 = vadd.f32 %v3520, %v3736
      %v3738 = vpop.f32.mrf.mxu0
      %v3739 = vpop.f32.mrf.mxu0
      %v3740 = vadd.f32 %v3523, %v3739
      %v3741 = vpop.f32.mrf.mxu0
      %3742 = vmatprep.mubr.bf16.mxu0 0
      %3743 = vmatmul.mubr.bf16.gmra.mxu0 %v3650
      %v3744 = vpop.f32.mrf.mxu0
      %v3745 = vadd.f32 %v3528, %v3744
      %v3746 = vpop.f32.mrf.mxu0
      %v3747 = vpop.f32.mrf.mxu0
      %v3748 = vadd.f32 %v3531, %v3747
      %v3749 = vpop.f32.mrf.mxu0
      %3750 = vmatprep.mubr.bf16.mxu0 0
      %3751 = vmatmul.mubr.bf16.gmra.mxu0 %v3653
      %v3752 = vpop.f32.mrf.mxu0
      %v3753 = vadd.f32 %v3536, %v3752
      %v3754 = vpop.f32.mrf.mxu0
      %v3755 = vpop.f32.mrf.mxu0
      %v3756 = vadd.f32 %v3539, %v3755
      %v3757 = vpop.f32.mrf.mxu0
      %3758 = vmatprep.mubr.bf16.mxu0 0
      %3759 = vmatmul.mubr.bf16.gmra.mxu0 %v3656
      %v3760 = vpop.f32.mrf.mxu0
      %v3761 = vadd.f32 %v3544, %v3760
      %v3762 = vpop.f32.mrf.mxu0
      %v3763 = vpop.f32.mrf.mxu0
      %v3764 = vadd.f32 %v3547, %v3763
      %v3765 = vpop.f32.mrf.mxu0
      %3766 = vmatprep.mubr.bf16.mxu0 0
      %3767 = vmatmul.mubr.bf16.gmra.mxu0 %v3659
      %v3768 = vpop.f32.mrf.mxu0
      %v3769 = vadd.f32 %v3552, %v3768
      %v3770 = vpop.f32.mrf.mxu0
      %v3771 = vpop.f32.mrf.mxu0
      %v3772 = vadd.f32 %v3555, %v3771
      %v3773 = vpop.f32.mrf.mxu0
      %3774 = vmatprep.mubr.bf16.mxu0 0
      %3775 = vmatmul.mubr.bf16.gmra.mxu0 %v3662
      %v3776 = vpop.f32.mrf.mxu0
      %v3777 = vadd.f32 %v3560, %v3776
      %v3778 = vpop.f32.mrf.mxu0
      %v3779 = vpop.f32.mrf.mxu0
      %v3780 = vadd.f32 %v3563, %v3779
      %v3781 = vpop.f32.mrf.mxu0
      %3782 = vmatprep.mubr.bf16.mxu0 0
      %3783 = vmatmul.mubr.bf16.gmra.mxu0 %v3665
      %v3784 = vpop.f32.mrf.mxu0
      %v3785 = vadd.f32 %v3568, %v3784
      %v3786 = vpop.f32.mrf.mxu0
      %v3787 = vpop.f32.mrf.mxu0
      %v3788 = vadd.f32 %v3571, %v3787
      %v3789 = vpop.f32.mrf.mxu0
      %3790 = vmatprep.mubr.bf16.mxu0 0
      %3791 = vmatmul.mubr.bf16.gmra.mxu0 %v3668
      %v3792 = vpop.f32.mrf.mxu0
      %v3793 = vadd.f32 %v3576, %v3792
      %v3794 = vpop.f32.mrf.mxu0
      %v3795 = vpop.f32.mrf.mxu0
      %v3796 = vadd.f32 %v3579, %v3795
      %v3797 = vpop.f32.mrf.mxu0
      %3798 = vmatprep.mubr.bf16.mxu0 0
      %3799 = vmatmul.mubr.bf16.gmra.mxu0 %v3671
      %v3800 = vpop.f32.mrf.mxu0
      %v3801 = vadd.f32 %v3584, %v3800
      %v3802 = vpop.f32.mrf.mxu0
      %v3803 = vpop.f32.mrf.mxu0
      %v3804 = vadd.f32 %v3587, %v3803
      %v3805 = vpop.f32.mrf.mxu0
      %3806 = vmatprep.mubr.bf16.mxu0 0
      %3807 = vmatmul.mubr.bf16.gmra.mxu0 %v3674
      %v3808 = vpop.f32.mrf.mxu0
      %v3809 = vadd.f32 %v3592, %v3808
      %v3810 = vpop.f32.mrf.mxu0
      %v3811 = vpop.f32.mrf.mxu0
      %v3812 = vadd.f32 %v3595, %v3811
      %v3813 = vpop.f32.mrf.mxu0
      %3814 = vmatprep.mubr.bf16.mxu0 0
      %3815 = vmatmul.mubr.bf16.gmra.mxu0 %v3677
      %v3816 = vpop.f32.mrf.mxu0
      %v3817 = vadd.f32 %v3600, %v3816
      %v3818 = vpop.f32.mrf.mxu0
      %v3819 = vpop.f32.mrf.mxu0
      %v3820 = vadd.f32 %v3603, %v3819
      %v3821 = vpop.f32.mrf.mxu0
      %3822 = vmatprep.mubr.bf16.mxu0 0
      %3823 = vmatmul.mubr.bf16.gmra.mxu0 %v3680
      %v3824 = vpop.f32.mrf.mxu0
      %v3825 = vadd.f32 %v3608, %v3824
      %v3826 = vpop.f32.mrf.mxu0
      %v3827 = vpop.f32.mrf.mxu0
      %v3828 = vadd.f32 %v3611, %v3827
      %v3829 = vpop.f32.mrf.mxu0
      %3830 = vmatprep.mubr.bf16.mxu0 0
      %3831 = vmatmul.mubr.bf16.gmra.mxu0 %v3683
      %v3832 = vpop.f32.mrf.mxu0
      %v3833 = vadd.f32 %v3616, %v3832
      %v3834 = vpop.f32.mrf.mxu0
      %v3835 = vpop.f32.mrf.mxu0
      %v3836 = vadd.f32 %v3619, %v3835
      %v3837 = vpop.f32.mrf.mxu0
      %3838 = vmatprep.mubr.bf16.mxu0 0
      %3839 = vmatmul.mubr.bf16.gmra.mxu0 %v3686
      %v3840 = vpop.f32.mrf.mxu0
      %v3841 = vadd.f32 %v3624, %v3840
      %v3842 = vpop.f32.mrf.mxu0
      %v3843 = vpop.f32.mrf.mxu0
      %v3844 = vadd.f32 %v3627, %v3843
      %v3845 = vpop.f32.mrf.mxu0
      %3846 = vmatprep.mubr.bf16.mxu0 0
      %3847 = vmatmul.mubr.bf16.gmra.mxu0 %v3689
      %v3848 = vpop.f32.mrf.mxu0
      %v3849 = vadd.f32 %v3632, %v3848
      %v3850 = vpop.f32.mrf.mxu0
      %v3851 = vpop.f32.mrf.mxu0
      %v3852 = vadd.f32 %v3635, %v3851
      %v3853 = vpop.f32.mrf.mxu0
      %3854 = vdwg.mxu0
      %s3855 = scalar_lea.vmem [#allocation3], 48
      %v3856 = vld [vmem:[%s3855] sm:$0xff]
      %v3857 = vld [vmem:[%s3855 + $0x8] sm:$0xff]
      %v3858 = vld [vmem:[%s3855 + $0x18] sm:$0xff]
      %v3859 = vld [vmem:[%s3855 + $0x20] sm:$0xff]
      %v3860 = vld [vmem:[%s3855 + $0x30] sm:$0xff]
      %v3861 = vld [vmem:[%s3855 + $0x38] sm:$0xff]
      %v3862 = vld [vmem:[%s3855 + $0x48] sm:$0xff]
      %v3863 = vld [vmem:[%s3855 + $0x50] sm:$0xff]
      %v3864 = vld [vmem:[%s3855 + $0x60] sm:$0xff]
      %v3865 = vld [vmem:[%s3855 + $0x68] sm:$0xff]
      %v3866 = vld [vmem:[%s3855 + $0x78] sm:$0xff]
      %v3867 = vld [vmem:[%s3855 + $0x80] sm:$0xff]
      %v3868 = vld [vmem:[%s3855 + $0x90] sm:$0xff]
      %v3869 = vld [vmem:[%s3855 + $0x98] sm:$0xff]
      %v3870 = vld [vmem:[%s3855 + $0xa8] sm:$0xff]
      %v3871 = vld [vmem:[%s3855 + $0xb0] sm:$0xff]
      %v3872 = vld [vmem:[%s3855 + $0xc0] sm:$0xff]
      %v3873 = vld [vmem:[%s3855 + $0xc8] sm:$0xff]
      %v3874 = vld [vmem:[%s3855 + $0xd8] sm:$0xff]
      %v3875 = vld [vmem:[%s3855 + $0xe0] sm:$0xff]
      %v3876 = vld [vmem:[%s3855 + $0xf0] sm:$0xff]
      %v3877 = vld [vmem:[%s3855 + $0xf8] sm:$0xff]
      %v3878 = vld [vmem:[%s3855 + $0x108] sm:$0xff]
      %v3879 = vld [vmem:[%s3855 + $0x110] sm:$0xff]
      %v3880 = vld [vmem:[%s3855 + $0x120] sm:$0xff]
      %v3881 = vld [vmem:[%s3855 + $0x128] sm:$0xff]
      %v3882 = vld [vmem:[%s3855 + $0x138] sm:$0xff]
      %v3883 = vld [vmem:[%s3855 + $0x140] sm:$0xff]
      %v3884 = vld [vmem:[%s3855 + $0x150] sm:$0xff]
      %v3885 = vld [vmem:[%s3855 + $0x158] sm:$0xff]
      %v3886 = vld [vmem:[%s3855 + $0x168] sm:$0xff]
      %v3887 = vld [vmem:[%s3855 + $0x170] sm:$0xff]
      %v3888 = vld [vmem:[%s3855 + $0x1] sm:$0xff]
      %v3889 = vld [vmem:[%s3855 + $0x9] sm:$0xff]
      %v3890 = vld [vmem:[%s3855 + $0x19] sm:$0xff]
      %v3891 = vld [vmem:[%s3855 + $0x21] sm:$0xff]
      %v3892 = vld [vmem:[%s3855 + $0x31] sm:$0xff]
      %v3893 = vld [vmem:[%s3855 + $0x39] sm:$0xff]
      %v3894 = vld [vmem:[%s3855 + $0x49] sm:$0xff]
      %v3895 = vld [vmem:[%s3855 + $0x51] sm:$0xff]
      %v3896 = vld [vmem:[%s3855 + $0x61] sm:$0xff]
      %v3897 = vld [vmem:[%s3855 + $0x69] sm:$0xff]
      %v3898 = vld [vmem:[%s3855 + $0x79] sm:$0xff]
      %v3899 = vld [vmem:[%s3855 + $0x81] sm:$0xff]
      %v3900 = vld [vmem:[%s3855 + $0x91] sm:$0xff]
      %v3901 = vld [vmem:[%s3855 + $0x99] sm:$0xff]
      %v3902 = vld [vmem:[%s3855 + $0xa9] sm:$0xff]
      %v3903 = vld [vmem:[%s3855 + $0xb1] sm:$0xff]
      %v3904 = vld [vmem:[%s3855 + $0xc1] sm:$0xff]
      %v3905 = vld [vmem:[%s3855 + $0xc9] sm:$0xff]
      %v3906 = vld [vmem:[%s3855 + $0xd9] sm:$0xff]
      %v3907 = vld [vmem:[%s3855 + $0xe1] sm:$0xff]
      %v3908 = vld [vmem:[%s3855 + $0xf1] sm:$0xff]
      %v3909 = vld [vmem:[%s3855 + $0xf9] sm:$0xff]
      %v3910 = vld [vmem:[%s3855 + $0x109] sm:$0xff]
      %v3911 = vld [vmem:[%s3855 + $0x111] sm:$0xff]
      %v3912 = vld [vmem:[%s3855 + $0x121] sm:$0xff]
      %v3913 = vld [vmem:[%s3855 + $0x129] sm:$0xff]
      %v3914 = vld [vmem:[%s3855 + $0x139] sm:$0xff]
      %v3915 = vld [vmem:[%s3855 + $0x141] sm:$0xff]
      %v3916 = vld [vmem:[%s3855 + $0x151] sm:$0xff]
      %v3917 = vld [vmem:[%s3855 + $0x159] sm:$0xff]
      %v3918 = vld [vmem:[%s3855 + $0x169] sm:$0xff]
      %v3919 = vld [vmem:[%s3855 + $0x171] sm:$0xff]
      %v3920 = vld [vmem:[%s3855 + $0x2] sm:$0xff]
      %v3921 = vld [vmem:[%s3855 + $0xa] sm:$0xff]
      %v3922 = vld [vmem:[%s3855 + $0x1a] sm:$0xff]
      %v3923 = vld [vmem:[%s3855 + $0x22] sm:$0xff]
      %v3924 = vld [vmem:[%s3855 + $0x32] sm:$0xff]
      %v3925 = vld [vmem:[%s3855 + $0x3a] sm:$0xff]
      %v3926 = vld [vmem:[%s3855 + $0x4a] sm:$0xff]
      %v3927 = vld [vmem:[%s3855 + $0x52] sm:$0xff]
      %v3928 = vld [vmem:[%s3855 + $0x62] sm:$0xff]
      %v3929 = vld [vmem:[%s3855 + $0x6a] sm:$0xff]
      %v3930 = vld [vmem:[%s3855 + $0x7a] sm:$0xff]
      %v3931 = vld [vmem:[%s3855 + $0x82] sm:$0xff]
      %v3932 = vld [vmem:[%s3855 + $0x92] sm:$0xff]
      %v3933 = vld [vmem:[%s3855 + $0x9a] sm:$0xff]
      %v3934 = vld [vmem:[%s3855 + $0xaa] sm:$0xff]
      %v3935 = vld [vmem:[%s3855 + $0xb2] sm:$0xff]
      %v3936 = vld [vmem:[%s3855 + $0xc2] sm:$0xff]
      %v3937 = vld [vmem:[%s3855 + $0xca] sm:$0xff]
      %v3938 = vld [vmem:[%s3855 + $0xda] sm:$0xff]
      %v3939 = vld [vmem:[%s3855 + $0xe2] sm:$0xff]
      %v3940 = vld [vmem:[%s3855 + $0xf2] sm:$0xff]
      %v3941 = vld [vmem:[%s3855 + $0xfa] sm:$0xff]
      %v3942 = vld [vmem:[%s3855 + $0x10a] sm:$0xff]
      %v3943 = vld [vmem:[%s3855 + $0x112] sm:$0xff]
      %v3944 = vld [vmem:[%s3855 + $0x122] sm:$0xff]
      %v3945 = vld [vmem:[%s3855 + $0x12a] sm:$0xff]
      %v3946 = vld [vmem:[%s3855 + $0x13a] sm:$0xff]
      %v3947 = vld [vmem:[%s3855 + $0x142] sm:$0xff]
      %v3948 = vld [vmem:[%s3855 + $0x152] sm:$0xff]
      %v3949 = vld [vmem:[%s3855 + $0x15a] sm:$0xff]
      %v3950 = vld [vmem:[%s3855 + $0x16a] sm:$0xff]
      %v3951 = vld [vmem:[%s3855 + $0x172] sm:$0xff]
      %3984 = vrot.lane.b32.xlu0 %v3888, 4
      %v3985 = vpop.permute.xlu0 %3984
      %3986 = vrot.lane.b32.xlu0 %v3889, 4
      %v3987 = vpop.permute.xlu0 %3986
      %3988 = vrot.lane.b32.xlu0 %v3890, 4
      %v3989 = vpop.permute.xlu0 %3988
      %3990 = vrot.lane.b32.xlu0 %v3891, 4
      %v3991 = vpop.permute.xlu0 %3990
      %3992 = vrot.lane.b32.xlu0 %v3892, 4
      %v3993 = vpop.permute.xlu0 %3992
      %3994 = vrot.lane.b32.xlu0 %v3893, 4
      %v3995 = vpop.permute.xlu0 %3994
      %3996 = vrot.lane.b32.xlu0 %v3894, 4
      %v3997 = vpop.permute.xlu0 %3996
      %3998 = vrot.lane.b32.xlu0 %v3895, 4
      %v3999 = vpop.permute.xlu0 %3998
      %4000 = vrot.lane.b32.xlu0 %v3896, 4
      %v4001 = vpop.permute.xlu0 %4000
      %4002 = vrot.lane.b32.xlu0 %v3897, 4
      %v4003 = vpop.permute.xlu0 %4002
      %4004 = vrot.lane.b32.xlu0 %v3898, 4
      %v4005 = vpop.permute.xlu0 %4004
      %4006 = vrot.lane.b32.xlu0 %v3899, 4
      %v4007 = vpop.permute.xlu0 %4006
      %4008 = vrot.lane.b32.xlu0 %v3900, 4
      %v4009 = vpop.permute.xlu0 %4008
      %4010 = vrot.lane.b32.xlu0 %v3901, 4
      %v4011 = vpop.permute.xlu0 %4010
      %4012 = vrot.lane.b32.xlu0 %v3902, 4
      %v4013 = vpop.permute.xlu0 %4012
      %4014 = vrot.lane.b32.xlu0 %v3903, 4
      %v4015 = vpop.permute.xlu0 %4014
      %4016 = vrot.lane.b32.xlu0 %v3904, 4
      %v4017 = vpop.permute.xlu0 %4016
      %4018 = vrot.lane.b32.xlu0 %v3905, 4
      %v4019 = vpop.permute.xlu0 %4018
      %4020 = vrot.lane.b32.xlu0 %v3906, 4
      %v4021 = vpop.permute.xlu0 %4020
      %4022 = vrot.lane.b32.xlu0 %v3907, 4
      %v4023 = vpop.permute.xlu0 %4022
      %4024 = vrot.lane.b32.xlu0 %v3908, 4
      %v4025 = vpop.permute.xlu0 %4024
      %4026 = vrot.lane.b32.xlu0 %v3909, 4
      %v4027 = vpop.permute.xlu0 %4026
      %4028 = vrot.lane.b32.xlu0 %v3910, 4
      %v4029 = vpop.permute.xlu0 %4028
      %4030 = vrot.lane.b32.xlu0 %v3911, 4
      %v4031 = vpop.permute.xlu0 %4030
      %4032 = vrot.lane.b32.xlu0 %v3912, 4
      %v4033 = vpop.permute.xlu0 %4032
      %4034 = vrot.lane.b32.xlu0 %v3913, 4
      %v4035 = vpop.permute.xlu0 %4034
      %4036 = vrot.lane.b32.xlu0 %v3914, 4
      %v4037 = vpop.permute.xlu0 %4036
      %4038 = vrot.lane.b32.xlu0 %v3915, 4
      %v4039 = vpop.permute.xlu0 %4038
      %4040 = vrot.lane.b32.xlu0 %v3916, 4
      %v4041 = vpop.permute.xlu0 %4040
      %4042 = vrot.lane.b32.xlu0 %v3917, 4
      %v4043 = vpop.permute.xlu0 %4042
      %4044 = vrot.lane.b32.xlu0 %v3918, 4
      %v4045 = vpop.permute.xlu0 %4044
      %4046 = vrot.lane.b32.xlu0 %v3919, 4
      %v4047 = vpop.permute.xlu0 %4046
      %4112 = vrot.lane.b32.xlu0 %v3920, 8
      %v4113 = vpop.permute.xlu0 %4112
      %4114 = vrot.lane.b32.xlu0 %v3921, 8
      %v4115 = vpop.permute.xlu0 %4114
      %4116 = vrot.lane.b32.xlu0 %v3922, 8
      %v4117 = vpop.permute.xlu0 %4116
      %4118 = vrot.lane.b32.xlu0 %v3923, 8
      %v4119 = vpop.permute.xlu0 %4118
      %4120 = vrot.lane.b32.xlu0 %v3924, 8
      %v4121 = vpop.permute.xlu0 %4120
      %4122 = vrot.lane.b32.xlu0 %v3925, 8
      %v4123 = vpop.permute.xlu0 %4122
      %4124 = vrot.lane.b32.xlu0 %v3926, 8
      %v4125 = vpop.permute.xlu0 %4124
      %4126 = vrot.lane.b32.xlu0 %v3927, 8
      %v4127 = vpop.permute.xlu0 %4126
      %4128 = vrot.lane.b32.xlu0 %v3928, 8
      %v4129 = vpop.permute.xlu0 %4128
      %4130 = vrot.lane.b32.xlu0 %v3929, 8
      %v4131 = vpop.permute.xlu0 %4130
      %4132 = vrot.lane.b32.xlu0 %v3930, 8
      %v4133 = vpop.permute.xlu0 %4132
      %4134 = vrot.lane.b32.xlu0 %v3931, 8
      %v4135 = vpop.permute.xlu0 %4134
      %4136 = vrot.lane.b32.xlu0 %v3932, 8
      %v4137 = vpop.permute.xlu0 %4136
      %4138 = vrot.lane.b32.xlu0 %v3933, 8
      %v4139 = vpop.permute.xlu0 %4138
      %4140 = vrot.lane.b32.xlu0 %v3934, 8
      %v4141 = vpop.permute.xlu0 %4140
      %4142 = vrot.lane.b32.xlu0 %v3935, 8
      %v4143 = vpop.permute.xlu0 %4142
      %4144 = vrot.lane.b32.xlu0 %v3936, 8
      %v4145 = vpop.permute.xlu0 %4144
      %4146 = vrot.lane.b32.xlu0 %v3937, 8
      %v4147 = vpop.permute.xlu0 %4146
      %4148 = vrot.lane.b32.xlu0 %v3938, 8
      %v4149 = vpop.permute.xlu0 %4148
      %4150 = vrot.lane.b32.xlu0 %v3939, 8
      %v4151 = vpop.permute.xlu0 %4150
      %4152 = vrot.lane.b32.xlu0 %v3940, 8
      %v4153 = vpop.permute.xlu0 %4152
      %4154 = vrot.lane.b32.xlu0 %v3941, 8
      %v4155 = vpop.permute.xlu0 %4154
      %4156 = vrot.lane.b32.xlu0 %v3942, 8
      %v4157 = vpop.permute.xlu0 %4156
      %4158 = vrot.lane.b32.xlu0 %v3943, 8
      %v4159 = vpop.permute.xlu0 %4158
      %4160 = vrot.lane.b32.xlu0 %v3944, 8
      %v4161 = vpop.permute.xlu0 %4160
      %4162 = vrot.lane.b32.xlu0 %v3945, 8
      %v4163 = vpop.permute.xlu0 %4162
      %4164 = vrot.lane.b32.xlu0 %v3946, 8
      %v4165 = vpop.permute.xlu0 %4164
      %4166 = vrot.lane.b32.xlu0 %v3947, 8
      %v4167 = vpop.permute.xlu0 %4166
      %4168 = vrot.lane.b32.xlu0 %v3948, 8
      %v4169 = vpop.permute.xlu0 %4168
      %4170 = vrot.lane.b32.xlu0 %v3949, 8
      %v4171 = vpop.permute.xlu0 %4170
      %4172 = vrot.lane.b32.xlu0 %v3950, 8
      %v4173 = vpop.permute.xlu0 %4172
      %4174 = vrot.lane.b32.xlu0 %v3951, 8
      %v4175 = vpop.permute.xlu0 %4174
      %v4208 = vsel %vm259, %v3856, %v3985
      %v4209 = vsel %vm259, %v3857, %v3987
      %v4210 = vsel %vm259, %v3858, %v3989
      %v4211 = vsel %vm259, %v3859, %v3991
      %v4212 = vsel %vm259, %v3860, %v3993
      %v4213 = vsel %vm259, %v3861, %v3995
      %v4214 = vsel %vm259, %v3862, %v3997
      %v4215 = vsel %vm259, %v3863, %v3999
      %v4216 = vsel %vm259, %v3864, %v4001
      %v4217 = vsel %vm259, %v3865, %v4003
      %v4218 = vsel %vm259, %v3866, %v4005
      %v4219 = vsel %vm259, %v3867, %v4007
      %v4220 = vsel %vm259, %v3868, %v4009
      %v4221 = vsel %vm259, %v3869, %v4011
      %v4222 = vsel %vm259, %v3870, %v4013
      %v4223 = vsel %vm259, %v3871, %v4015
      %v4224 = vsel %vm259, %v3872, %v4017
      %v4225 = vsel %vm259, %v3873, %v4019
      %v4226 = vsel %vm259, %v3874, %v4021
      %v4227 = vsel %vm259, %v3875, %v4023
      %v4228 = vsel %vm259, %v3876, %v4025
      %v4229 = vsel %vm259, %v3877, %v4027
      %v4230 = vsel %vm259, %v3878, %v4029
      %v4231 = vsel %vm259, %v3879, %v4031
      %v4232 = vsel %vm259, %v3880, %v4033
      %v4233 = vsel %vm259, %v3881, %v4035
      %v4234 = vsel %vm259, %v3882, %v4037
      %v4235 = vsel %vm259, %v3883, %v4039
      %v4236 = vsel %vm259, %v3884, %v4041
      %v4237 = vsel %vm259, %v3885, %v4043
      %v4238 = vsel %vm259, %v3886, %v4045
      %v4239 = vsel %vm259, %v3887, %v4047
      %v4240 = vsel %vm759, %v4208, %v4113
      %v4241 = vsel %vm759, %v4209, %v4115
      %v4242 = vsel %vm759, %v4210, %v4117
      %v4243 = vsel %vm759, %v4211, %v4119
      %v4244 = vsel %vm759, %v4212, %v4121
      %v4245 = vsel %vm759, %v4213, %v4123
      %v4246 = vsel %vm759, %v4214, %v4125
      %v4247 = vsel %vm759, %v4215, %v4127
      %v4248 = vsel %vm759, %v4216, %v4129
      %v4249 = vsel %vm759, %v4217, %v4131
      %v4250 = vsel %vm759, %v4218, %v4133
      %v4251 = vsel %vm759, %v4219, %v4135
      %v4252 = vsel %vm759, %v4220, %v4137
      %v4253 = vsel %vm759, %v4221, %v4139
      %v4254 = vsel %vm759, %v4222, %v4141
      %v4255 = vsel %vm759, %v4223, %v4143
      %v4256 = vsel %vm759, %v4224, %v4145
      %v4257 = vsel %vm759, %v4225, %v4147
      %v4258 = vsel %vm759, %v4226, %v4149
      %v4259 = vsel %vm759, %v4227, %v4151
      %v4260 = vsel %vm759, %v4228, %v4153
      %v4261 = vsel %vm759, %v4229, %v4155
      %v4262 = vsel %vm759, %v4230, %v4157
      %v4263 = vsel %vm759, %v4231, %v4159
      %v4264 = vsel %vm759, %v4232, %v4161
      %v4265 = vsel %vm759, %v4233, %v4163
      %v4266 = vsel %vm759, %v4234, %v4165
      %v4267 = vsel %vm759, %v4235, %v4167
      %v4268 = vsel %vm759, %v4236, %v4169
      %v4269 = vsel %vm759, %v4237, %v4171
      %v4270 = vsel %vm759, %v4238, %v4173
      %v4271 = vsel %vm759, %v4239, %v4175
      %v4272 = vpack.c.bf16 %v4241, %v4240
      %v4273 = vpack.c.bf16 %v4243, %v4242
      %v4274 = vpack.c.bf16 %v4245, %v4244
      %v4275 = vpack.c.bf16 %v4247, %v4246
      %v4276 = vpack.c.bf16 %v4249, %v4248
      %v4277 = vpack.c.bf16 %v4251, %v4250
      %v4278 = vpack.c.bf16 %v4253, %v4252
      %v4279 = vpack.c.bf16 %v4255, %v4254
      %v4280 = vpack.c.bf16 %v4257, %v4256
      %v4281 = vpack.c.bf16 %v4259, %v4258
      %v4282 = vpack.c.bf16 %v4261, %v4260
      %v4283 = vpack.c.bf16 %v4263, %v4262
      %v4284 = vpack.c.bf16 %v4265, %v4264
      %v4285 = vpack.c.bf16 %v4267, %v4266
      %v4286 = vpack.c.bf16 %v4269, %v4268
      %v4287 = vpack.c.bf16 %v4271, %v4270
      %s4288 = scalar_lea.vmem %s3, 16
      %v4289 = vld [vmem:[%s4288] sm:$0xf]
      %v4290 = vld [vmem:[%s4288 + $0x4] sm:$0x3]
      %v4293 = vunpack.c.l.b16 %v4289
      %v4294 = vunpack.c.l.b16 %v4290
      %v4295 = vpack.c.b16 %v4294, %v4293
      %v4297 = vsel %vm1250, %v4272, 0
      %v4300 = vsel %vm1250, %v4273, 0
      %v4303 = vsel %vm1250, %v4274, 0
      %v4306 = vsel %vm1250, %v4275, 0
      %v4309 = vsel %vm1250, %v4276, 0
      %v4312 = vsel %vm1250, %v4277, 0
      %v4315 = vsel %vm1250, %v4278, 0
      %v4318 = vsel %vm1250, %v4279, 0
      %v4321 = vsel %vm1250, %v4280, 0
      %v4324 = vsel %vm1250, %v4281, 0
      %v4327 = vsel %vm1250, %v4282, 0
      %v4330 = vsel %vm1250, %v4283, 0
      %v4333 = vsel %vm1250, %v4284, 0
      %v4336 = vsel %vm1250, %v4285, 0
      %v4339 = vsel %vm1250, %v4286, 0
      %v4342 = vsel %vm1250, %v4287, 0
      %v4345 = vsel %vm1299, %v4295, 0
      %4347 = vmatprep.subr.bf16.mxu0 0
      %4348 = vmatpush1.bf16.msra.mxu0 0
      %4349 = vmatprep.subr.bf16.mxu0 0
      %4350 = vmatpush1.bf16.msra.mxu0 0
      %4351 = vmatprep.subr.bf16.mxu0 0
      %4352 = vmatpush1.bf16.msra.mxu0 0
      %4353 = vmatprep.subr.bf16.mxu0 0
      %4354 = vmatpush1.bf16.msra.mxu0 0
      %4355 = vmatprep.subr.bf16.mxu0 0
      %4356 = vmatpush1.bf16.msra.mxu0 0
      %4357 = vmatprep.subr.bf16.mxu0 0
      %4358 = vmatpush1.bf16.msra.mxu0 0
      %4359 = vmatprep.subr.bf16.mxu0 0
      %4360 = vmatpush1.bf16.msra.mxu0 0
      %4361 = vmatprep.subr.bf16.mxu0 0
      %4362 = vmatpush1.bf16.msra.mxu0 %v4345
      %4363 = vmatprep.subr.bf16.mxu0 0
      %4364 = vmatpush2.bf16.msra.mxu0 0
      %4365 = vmatprep.subr.bf16.mxu0 0
      %4366 = vmatpush2.bf16.msra.mxu0 0
      %4367 = vmatprep.subr.bf16.mxu0 0
      %4368 = vmatpush2.bf16.msra.mxu0 0
      %4369 = vmatprep.subr.bf16.mxu0 0
      %4370 = vmatpush2.bf16.msra.mxu0 0
      %4371 = vmatprep.subr.bf16.mxu0 0
      %4372 = vmatpush2.bf16.msra.mxu0 0
      %4373 = vmatprep.subr.bf16.mxu0 0
      %4374 = vmatpush2.bf16.msra.mxu0 0
      %4375 = vmatprep.subr.bf16.mxu0 0
      %4376 = vmatpush2.bf16.msra.mxu0 0
      %4377 = vmatprep.subr.bf16.mxu0 0
      %4378 = vmatpush2.bf16.msra.mxu0 0
      %4379 = vmatprep.mubr.bf16.mxu0 0
      %4380 = vmatmul.mubr.bf16.gmra.mxu0 %v4297
      %v4381 = vpop.f32.mrf.mxu0
      %v4382 = vadd.f32 0.0, %v4381
      %v4383 = vpop.f32.mrf.mxu0
      %v4384 = vpop.f32.mrf.mxu0
      %v4385 = vadd.f32 0.0, %v4384
      %v4386 = vpop.f32.mrf.mxu0
      %4387 = vmatprep.mubr.bf16.mxu0 0
      %4388 = vmatmul.mubr.bf16.gmra.mxu0 %v4300
      %v4389 = vpop.f32.mrf.mxu0
      %v4390 = vadd.f32 0.0, %v4389
      %v4391 = vpop.f32.mrf.mxu0
      %v4392 = vpop.f32.mrf.mxu0
      %v4393 = vadd.f32 0.0, %v4392
      %v4394 = vpop.f32.mrf.mxu0
      %4395 = vmatprep.mubr.bf16.mxu0 0
      %4396 = vmatmul.mubr.bf16.gmra.mxu0 %v4303
      %v4397 = vpop.f32.mrf.mxu0
      %v4398 = vadd.f32 0.0, %v4397
      %v4399 = vpop.f32.mrf.mxu0
      %v4400 = vpop.f32.mrf.mxu0
      %v4401 = vadd.f32 0.0, %v4400
      %v4402 = vpop.f32.mrf.mxu0
      %4403 = vmatprep.mubr.bf16.mxu0 0
      %4404 = vmatmul.mubr.bf16.gmra.mxu0 %v4306
      %v4405 = vpop.f32.mrf.mxu0
      %v4406 = vadd.f32 0.0, %v4405
      %v4407 = vpop.f32.mrf.mxu0
      %v4408 = vpop.f32.mrf.mxu0
      %v4409 = vadd.f32 0.0, %v4408
      %v4410 = vpop.f32.mrf.mxu0
      %4411 = vmatprep.mubr.bf16.mxu0 0
      %4412 = vmatmul.mubr.bf16.gmra.mxu0 %v4309
      %v4413 = vpop.f32.mrf.mxu0
      %v4414 = vadd.f32 0.0, %v4413
      %v4415 = vpop.f32.mrf.mxu0
      %v4416 = vpop.f32.mrf.mxu0
      %v4417 = vadd.f32 0.0, %v4416
      %v4418 = vpop.f32.mrf.mxu0
      %4419 = vmatprep.mubr.bf16.mxu0 0
      %4420 = vmatmul.mubr.bf16.gmra.mxu0 %v4312
      %v4421 = vpop.f32.mrf.mxu0
      %v4422 = vadd.f32 0.0, %v4421
      %v4423 = vpop.f32.mrf.mxu0
      %v4424 = vpop.f32.mrf.mxu0
      %v4425 = vadd.f32 0.0, %v4424
      %v4426 = vpop.f32.mrf.mxu0
      %4427 = vmatprep.mubr.bf16.mxu0 0
      %4428 = vmatmul.mubr.bf16.gmra.mxu0 %v4315
      %v4429 = vpop.f32.mrf.mxu0
      %v4430 = vadd.f32 0.0, %v4429
      %v4431 = vpop.f32.mrf.mxu0
      %v4432 = vpop.f32.mrf.mxu0
      %v4433 = vadd.f32 0.0, %v4432
      %v4434 = vpop.f32.mrf.mxu0
      %4435 = vmatprep.mubr.bf16.mxu0 0
      %4436 = vmatmul.mubr.bf16.gmra.mxu0 %v4318
      %v4437 = vpop.f32.mrf.mxu0
      %v4438 = vadd.f32 0.0, %v4437
      %v4439 = vpop.f32.mrf.mxu0
      %v4440 = vpop.f32.mrf.mxu0
      %v4441 = vadd.f32 0.0, %v4440
      %v4442 = vpop.f32.mrf.mxu0
      %4443 = vmatprep.mubr.bf16.mxu0 0
      %4444 = vmatmul.mubr.bf16.gmra.mxu0 %v4321
      %v4445 = vpop.f32.mrf.mxu0
      %v4446 = vadd.f32 0.0, %v4445
      %v4447 = vpop.f32.mrf.mxu0
      %v4448 = vpop.f32.mrf.mxu0
      %v4449 = vadd.f32 0.0, %v4448
      %v4450 = vpop.f32.mrf.mxu0
      %4451 = vmatprep.mubr.bf16.mxu0 0
      %4452 = vmatmul.mubr.bf16.gmra.mxu0 %v4324
      %v4453 = vpop.f32.mrf.mxu0
      %v4454 = vadd.f32 0.0, %v4453
      %v4455 = vpop.f32.mrf.mxu0
      %v4456 = vpop.f32.mrf.mxu0
      %v4457 = vadd.f32 0.0, %v4456
      %v4458 = vpop.f32.mrf.mxu0
      %4459 = vmatprep.mubr.bf16.mxu0 0
      %4460 = vmatmul.mubr.bf16.gmra.mxu0 %v4327
      %v4461 = vpop.f32.mrf.mxu0
      %v4462 = vadd.f32 0.0, %v4461
      %v4463 = vpop.f32.mrf.mxu0
      %v4464 = vpop.f32.mrf.mxu0
      %v4465 = vadd.f32 0.0, %v4464
      %v4466 = vpop.f32.mrf.mxu0
      %4467 = vmatprep.mubr.bf16.mxu0 0
      %4468 = vmatmul.mubr.bf16.gmra.mxu0 %v4330
      %v4469 = vpop.f32.mrf.mxu0
      %v4470 = vadd.f32 0.0, %v4469
      %v4471 = vpop.f32.mrf.mxu0
      %v4472 = vpop.f32.mrf.mxu0
      %v4473 = vadd.f32 0.0, %v4472
      %v4474 = vpop.f32.mrf.mxu0
      %4475 = vmatprep.mubr.bf16.mxu0 0
      %4476 = vmatmul.mubr.bf16.gmra.mxu0 %v4333
      %v4477 = vpop.f32.mrf.mxu0
      %v4478 = vadd.f32 0.0, %v4477
      %v4479 = vpop.f32.mrf.mxu0
      %v4480 = vpop.f32.mrf.mxu0
      %v4481 = vadd.f32 0.0, %v4480
      %v4482 = vpop.f32.mrf.mxu0
      %4483 = vmatprep.mubr.bf16.mxu0 0
      %4484 = vmatmul.mubr.bf16.gmra.mxu0 %v4336
      %v4485 = vpop.f32.mrf.mxu0
      %v4486 = vadd.f32 0.0, %v4485
      %v4487 = vpop.f32.mrf.mxu0
      %v4488 = vpop.f32.mrf.mxu0
      %v4489 = vadd.f32 0.0, %v4488
      %v4490 = vpop.f32.mrf.mxu0
      %4491 = vmatprep.mubr.bf16.mxu0 0
      %4492 = vmatmul.mubr.bf16.gmra.mxu0 %v4339
      %v4493 = vpop.f32.mrf.mxu0
      %v4494 = vadd.f32 0.0, %v4493
      %v4495 = vpop.f32.mrf.mxu0
      %v4496 = vpop.f32.mrf.mxu0
      %v4497 = vadd.f32 0.0, %v4496
      %v4498 = vpop.f32.mrf.mxu0
      %4499 = vmatprep.mubr.bf16.mxu0 0
      %4500 = vmatmul.mubr.bf16.gmra.mxu0 %v4342
      %v4501 = vpop.f32.mrf.mxu0
      %v4502 = vadd.f32 0.0, %v4501
      %v4503 = vpop.f32.mrf.mxu0
      %v4504 = vpop.f32.mrf.mxu0
      %v4505 = vadd.f32 0.0, %v4504
      %v4506 = vpop.f32.mrf.mxu0
      %4507 = vdwg.mxu0
      %v4508 = vadd.f32 %v3729, %v4382
      %v4509 = vadd.f32 %v3732, %v4385
      %v4510 = vadd.f32 %v3737, %v4390
      %v4511 = vadd.f32 %v3740, %v4393
      %v4512 = vadd.f32 %v3745, %v4398
      %v4513 = vadd.f32 %v3748, %v4401
      %v4514 = vadd.f32 %v3753, %v4406
      %v4515 = vadd.f32 %v3756, %v4409
      %v4516 = vadd.f32 %v3761, %v4414
      %v4517 = vadd.f32 %v3764, %v4417
      %v4518 = vadd.f32 %v3769, %v4422
      %v4519 = vadd.f32 %v3772, %v4425
      %v4520 = vadd.f32 %v3777, %v4430
      %v4521 = vadd.f32 %v3780, %v4433
      %v4522 = vadd.f32 %v3785, %v4438
      %v4523 = vadd.f32 %v3788, %v4441
      %v4524 = vadd.f32 %v3793, %v4446
      %v4525 = vadd.f32 %v3796, %v4449
      %v4526 = vadd.f32 %v3801, %v4454
      %v4527 = vadd.f32 %v3804, %v4457
      %v4528 = vadd.f32 %v3809, %v4462
      %v4529 = vadd.f32 %v3812, %v4465
      %v4530 = vadd.f32 %v3817, %v4470
      %v4531 = vadd.f32 %v3820, %v4473
      %v4532 = vadd.f32 %v3825, %v4478
      %v4533 = vadd.f32 %v3828, %v4481
      %v4534 = vadd.f32 %v3833, %v4486
      %v4535 = vadd.f32 %v3836, %v4489
      %v4536 = vadd.f32 %v3841, %v4494
      %v4537 = vadd.f32 %v3844, %v4497
      %v4538 = vadd.f32 %v3849, %v4502
      %v4539 = vadd.f32 %v3852, %v4505
      %v4540 = vld [vmem:[%s4] sm:$0x1]
      %v4542 = vlaneseq
      %v4543 = vshrl.u32 %v4542, 7
      %v4544 = vsub.s32 0, %v4543
      %v4545 = vrot.slane %v4540, %v4544
      %v4547 = vadd.f32 %v4508, %v4545
      %v4548 = vadd.f32 %v4509, %v4545
      %v4549 = vadd.f32 %v4510, %v4545
      %v4550 = vadd.f32 %v4511, %v4545
      %v4551 = vadd.f32 %v4512, %v4545
      %v4552 = vadd.f32 %v4513, %v4545
      %v4553 = vadd.f32 %v4514, %v4545
      %v4554 = vadd.f32 %v4515, %v4545
      %v4555 = vadd.f32 %v4516, %v4545
      %v4556 = vadd.f32 %v4517, %v4545
      %v4557 = vadd.f32 %v4518, %v4545
      %v4558 = vadd.f32 %v4519, %v4545
      %v4559 = vadd.f32 %v4520, %v4545
      %v4560 = vadd.f32 %v4521, %v4545
      %v4561 = vadd.f32 %v4522, %v4545
      %v4562 = vadd.f32 %v4523, %v4545
      %v4563 = vadd.f32 %v4524, %v4545
      %v4564 = vadd.f32 %v4525, %v4545
      %v4565 = vadd.f32 %v4526, %v4545
      %v4566 = vadd.f32 %v4527, %v4545
      %v4567 = vadd.f32 %v4528, %v4545
      %v4568 = vadd.f32 %v4529, %v4545
      %v4569 = vadd.f32 %v4530, %v4545
      %v4570 = vadd.f32 %v4531, %v4545
      %v4571 = vadd.f32 %v4532, %v4545
      %v4572 = vadd.f32 %v4533, %v4545
      %v4573 = vadd.f32 %v4534, %v4545
      %v4574 = vadd.f32 %v4535, %v4545
      %v4575 = vadd.f32 %v4536, %v4545
      %v4576 = vadd.f32 %v4537, %v4545
      %v4577 = vadd.f32 %v4538, %v4545
      %v4578 = vadd.f32 %v4539, %v4545
      %v4579 = vld [vmem:[%s219] sm:$0xff]
      %v4580 = vld [vmem:[%s219 + $0x8] sm:$0xff]
      %v4581 = vld [vmem:[%s219 + $0x10] sm:$0xff]
      %v4582 = vld [vmem:[%s219 + $0x18] sm:$0xff]
      %v4583 = vld [vmem:[%s219 + $0x20] sm:$0xff]
      %v4584 = vld [vmem:[%s219 + $0x28] sm:$0xff]
      %v4585 = vld [vmem:[%s219 + $0x30] sm:$0xff]
      %v4586 = vld [vmem:[%s219 + $0x38] sm:$0xff]
      %v4587 = vld [vmem:[%s219 + $0x40] sm:$0xff]
      %v4588 = vld [vmem:[%s219 + $0x48] sm:$0xff]
      %v4589 = vld [vmem:[%s219 + $0x50] sm:$0xff]
      %v4590 = vld [vmem:[%s219 + $0x58] sm:$0xff]
      %v4591 = vld [vmem:[%s219 + $0x60] sm:$0xff]
      %v4592 = vld [vmem:[%s219 + $0x68] sm:$0xff]
      %v4593 = vld [vmem:[%s219 + $0x70] sm:$0xff]
      %v4594 = vld [vmem:[%s219 + $0x78] sm:$0xff]
      %v4595 = vld [vmem:[%s219 + $0x80] sm:$0xff]
      %v4596 = vld [vmem:[%s219 + $0x88] sm:$0xff]
      %v4597 = vld [vmem:[%s219 + $0x90] sm:$0xff]
      %v4598 = vld [vmem:[%s219 + $0x98] sm:$0xff]
      %v4599 = vld [vmem:[%s219 + $0xa0] sm:$0xff]
      %v4600 = vld [vmem:[%s219 + $0xa8] sm:$0xff]
      %v4601 = vld [vmem:[%s219 + $0xb0] sm:$0xff]
      %v4602 = vld [vmem:[%s219 + $0xb8] sm:$0xff]
      %v4603 = vld [vmem:[%s219 + $0xc0] sm:$0xff]
      %v4604 = vld [vmem:[%s219 + $0xc8] sm:$0xff]
      %v4605 = vld [vmem:[%s219 + $0xd0] sm:$0xff]
      %v4606 = vld [vmem:[%s219 + $0xd8] sm:$0xff]
      %v4607 = vld [vmem:[%s219 + $0xe0] sm:$0xff]
      %v4608 = vld [vmem:[%s219 + $0xe8] sm:$0xff]
      %v4609 = vld [vmem:[%s219 + $0xf0] sm:$0xff]
      %v4610 = vld [vmem:[%s219 + $0xf8] sm:$0xff]
      %v4611 = vadd.f32 %v4547, %v4579
      %v4612 = vadd.f32 %v4548, %v4580
      %v4613 = vadd.f32 %v4549, %v4581
      %v4614 = vadd.f32 %v4550, %v4582
      %v4615 = vadd.f32 %v4551, %v4583
      %v4616 = vadd.f32 %v4552, %v4584
      %v4617 = vadd.f32 %v4553, %v4585
      %v4618 = vadd.f32 %v4554, %v4586
      %v4619 = vadd.f32 %v4555, %v4587
      %v4620 = vadd.f32 %v4556, %v4588
      %v4621 = vadd.f32 %v4557, %v4589
      %v4622 = vadd.f32 %v4558, %v4590
      %v4623 = vadd.f32 %v4559, %v4591
      %v4624 = vadd.f32 %v4560, %v4592
      %v4625 = vadd.f32 %v4561, %v4593
      %v4626 = vadd.f32 %v4562, %v4594
      %v4627 = vadd.f32 %v4563, %v4595
      %v4628 = vadd.f32 %v4564, %v4596
      %v4629 = vadd.f32 %v4565, %v4597
      %v4630 = vadd.f32 %v4566, %v4598
      %v4631 = vadd.f32 %v4567, %v4599
      %v4632 = vadd.f32 %v4568, %v4600
      %v4633 = vadd.f32 %v4569, %v4601
      %v4634 = vadd.f32 %v4570, %v4602
      %v4635 = vadd.f32 %v4571, %v4603
      %v4636 = vadd.f32 %v4572, %v4604
      %v4637 = vadd.f32 %v4573, %v4605
      %v4638 = vadd.f32 %v4574, %v4606
      %v4639 = vadd.f32 %v4575, %v4607
      %v4640 = vadd.f32 %v4576, %v4608
      %v4641 = vadd.f32 %v4577, %v4609
      %v4642 = vadd.f32 %v4578, %v4610
      %v4643 = vmax.f32 %v4611, 0.0
      %v4644 = vmax.f32 %v4612, 0.0
      %v4645 = vmax.f32 %v4613, 0.0
      %v4646 = vmax.f32 %v4614, 0.0
      %v4647 = vmax.f32 %v4615, 0.0
      %v4648 = vmax.f32 %v4616, 0.0
      %v4649 = vmax.f32 %v4617, 0.0
      %v4650 = vmax.f32 %v4618, 0.0
      %v4651 = vmax.f32 %v4619, 0.0
      %v4652 = vmax.f32 %v4620, 0.0
      %v4653 = vmax.f32 %v4621, 0.0
      %v4654 = vmax.f32 %v4622, 0.0
      %v4655 = vmax.f32 %v4623, 0.0
      %v4656 = vmax.f32 %v4624, 0.0
      %v4657 = vmax.f32 %v4625, 0.0
      %v4658 = vmax.f32 %v4626, 0.0
      %v4659 = vmax.f32 %v4627, 0.0
      %v4660 = vmax.f32 %v4628, 0.0
      %v4661 = vmax.f32 %v4629, 0.0
      %v4662 = vmax.f32 %v4630, 0.0
      %v4663 = vmax.f32 %v4631, 0.0
      %v4664 = vmax.f32 %v4632, 0.0
      %v4665 = vmax.f32 %v4633, 0.0
      %v4666 = vmax.f32 %v4634, 0.0
      %v4667 = vmax.f32 %v4635, 0.0
      %v4668 = vmax.f32 %v4636, 0.0
      %v4669 = vmax.f32 %v4637, 0.0
      %v4670 = vmax.f32 %v4638, 0.0
      %v4671 = vmax.f32 %v4639, 0.0
      %v4672 = vmax.f32 %v4640, 0.0
      %v4673 = vmax.f32 %v4641, 0.0
      %v4674 = vmax.f32 %v4642, 0.0
      %4675 = vst.msk [vmem:[%s224] sm:$0xff] %vm259, %v4643
      %4676 = vst.msk [vmem:[%s224 + $0x8] sm:$0xff] %vm259, %v4644
      %4677 = vst.msk [vmem:[%s224 + $0x10] sm:$0xff] %vm259, %v4645
      %4678 = vst.msk [vmem:[%s224 + $0x18] sm:$0xff] %vm259, %v4646
      %4679 = vst.msk [vmem:[%s224 + $0x20] sm:$0xff] %vm259, %v4647
      %4680 = vst.msk [vmem:[%s224 + $0x28] sm:$0xff] %vm259, %v4648
      %4681 = vst.msk [vmem:[%s224 + $0x30] sm:$0xff] %vm259, %v4649
      %4682 = vst.msk [vmem:[%s224 + $0x38] sm:$0xff] %vm259, %v4650
      %4683 = vst.msk [vmem:[%s224 + $0x40] sm:$0xff] %vm259, %v4651
      %4684 = vst.msk [vmem:[%s224 + $0x48] sm:$0xff] %vm259, %v4652
      %4685 = vst.msk [vmem:[%s224 + $0x50] sm:$0xff] %vm259, %v4653
      %4686 = vst.msk [vmem:[%s224 + $0x58] sm:$0xff] %vm259, %v4654
      %4687 = vst.msk [vmem:[%s224 + $0x60] sm:$0xff] %vm259, %v4655
      %4688 = vst.msk [vmem:[%s224 + $0x68] sm:$0xff] %vm259, %v4656
      %4689 = vst.msk [vmem:[%s224 + $0x70] sm:$0xff] %vm259, %v4657
      %4690 = vst.msk [vmem:[%s224 + $0x78] sm:$0xff] %vm259, %v4658
      %4691 = vst.msk [vmem:[%s224 + $0x80] sm:$0xff] %vm259, %v4659
      %4692 = vst.msk [vmem:[%s224 + $0x88] sm:$0xff] %vm259, %v4660
      %4693 = vst.msk [vmem:[%s224 + $0x90] sm:$0xff] %vm259, %v4661
      %4694 = vst.msk [vmem:[%s224 + $0x98] sm:$0xff] %vm259, %v4662
      %4695 = vst.msk [vmem:[%s224 + $0xa0] sm:$0xff] %vm259, %v4663
      %4696 = vst.msk [vmem:[%s224 + $0xa8] sm:$0xff] %vm259, %v4664
      %4697 = vst.msk [vmem:[%s224 + $0xb0] sm:$0xff] %vm259, %v4665
      %4698 = vst.msk [vmem:[%s224 + $0xb8] sm:$0xff] %vm259, %v4666
      %4699 = vst.msk [vmem:[%s224 + $0xc0] sm:$0xff] %vm259, %v4667
      %4700 = vst.msk [vmem:[%s224 + $0xc8] sm:$0xff] %vm259, %v4668
      %4701 = vst.msk [vmem:[%s224 + $0xd0] sm:$0xff] %vm259, %v4669
      %4702 = vst.msk [vmem:[%s224 + $0xd8] sm:$0xff] %vm259, %v4670
      %4703 = vst.msk [vmem:[%s224 + $0xe0] sm:$0xff] %vm259, %v4671
      %4704 = vst.msk [vmem:[%s224 + $0xe8] sm:$0xff] %vm259, %v4672
      %4705 = vst.msk [vmem:[%s224 + $0xf0] sm:$0xff] %vm259, %v4673
      %4706 = vst.msk [vmem:[%s224 + $0xf8] sm:$0xff] %vm259, %v4674
      %p4707 = scmp.lt.s32.totalorder %s16, 1
      %s4708 = scalar_select %p4707, %s16, 1
      %s4709 = smul.addr %s4708, 32
      %s4710 = smul.addr %s4709, 8
      %s4711 = scalar_lea.vmem %s5, %s4710
      // Predicated region
      $region41: #{tpu_custom_call.1} parent=39 // pred_check
        %p4712 = pneg %p144
      $region42: #{tpu_custom_call.1} parent=39 // pred_check_branch
        %4714 = sbr.rel (%p4712) target = $region44
      $region43: #{tpu_custom_call.1} parent=39 // pred_region
        _
      $region44: #{tpu_custom_call.1} parent=39 // pred_fallthru
        _
    $region40: #{tpu_custom_call.1} parent=5 // pred_fallthru
      _
    %p4715 = scmp.le.s32.totalorder 2, %s11
    // Predicated region
    $region45: #{tpu_custom_call.1} parent=5 // pred_check
      %p4716 = pneg %p4715
    $region46: #{tpu_custom_call.1} parent=5 // pred_check_branch
      %4718 = sbr.rel (%p4716) target = $region48
    $region47: #{tpu_custom_call.1} parent=5 // pred_region
      %s4719 = ssub.s32 %s11, 2
      // Predicated region
      $region49: #{tpu_custom_call.1} parent=47 // pred_check
        %p4720 = pneg %p150
      $region50: #{tpu_custom_call.1} parent=47 // pred_check_branch
        %4722 = sbr.rel (%p4720) target = $region52
      $region51: #{tpu_custom_call.1} parent=47 // pred_region
        %p4723 = scmp.lt.s32.totalorder %s17, 1
        %s4724 = scalar_select %p4723, %s17, 1
        %s4725 = smul.addr %s4724, 32
        %s4726 = smul.addr %s4725, 8
        %s4727 = scalar_lea.vmem %s5, %s4726
      $region52: #{tpu_custom_call.1} parent=47 // pred_fallthru
        _
    $region48: #{tpu_custom_call.1} parent=5 // pred_fallthru
      _
  $region6: #{tpu_custom_call.1} parent=0 // loop_footer
    %s15 = sadd.s32 1, %s11
  $region7: #{tpu_custom_call.1} parent=0 // loop_footer_branch
    %10 = sbr.rel target = $region3
  $region8: #{tpu_custom_call.1} parent=0 // loop_exit
    _

</llo_original>
